<compile_context>
chip_gen: v7x
topology: tpu7x:2x2x1
jax: 0.10.0
libtpu: 0.0.40
codegen_flags: <defaults>
</compile_context>

<pallas_src>
import functools
import math

import jax
import jax.numpy as jnp
from jax.experimental import pallas as pl
from jax.experimental.pallas import tpu as pltpu


def _make_kernel(channels, H, W, pooling_method, activation):
    L = len(channels) - 1
    M = H * W
    W2 = W // 2
    HALO = ((W + 1 + 7) // 8) * 8       # sublane-aligned halo, >= W+1 rows

    def kernel(x_ref, *args):
        out_ref = args[-2]
        col_ref = args[-1]               # row-haloed im2col / staging scratch
        wb = args[:-2]                   # (w0, b0, w1, b1, ...)

        # Column-validity masks shared by all layers (w' = source column).
        w_coord = jax.lax.broadcasted_iota(jnp.int32, (M, 1), 0) % W
        keep_l = w_coord >= 1            # source column survives a +1 col shift
        keep_r = w_coord <= W - 2        # source column survives a -1 col shift

        cur = x_ref[0].astype(jnp.float32)            # [M, C0]

        for l in range(L):
            cin, cout = channels[l], channels[l + 1]
            w_ref, b_ref = wb[2 * l], wb[2 * l + 1]
            kc = 9 * cin

            # Zero only the two (W+1)-row halo bands that the shifted stores
            # below do not cover (these are the out-of-image zero-padding rows).
            band = jnp.zeros((W + 1, kc), jnp.float32)
            col_ref[HALO:HALO + W + 1, :kc] = band
            col_ref[HALO + M - (W + 1):HALO + M, :kc] = band

            # Two masked copies, each shared by the 3 taps of one column shift.
            cur_l = jnp.where(keep_l, cur, 0.0)       # used by ox = +1 taps
            cur_r = jnp.where(keep_r, cur, 0.0)       # used by ox = -1 taps

            # im2col: tap k=(oy,ox) lands in column group k, shifted by -s rows,
            # so reading rows [HALO, HALO+M) yields the shifted copy.
            for oy in (-1, 0, 1):
                for ox in (-1, 0, 1):
                    k = (oy + 1) * 3 + (ox + 1)
                    s = oy * W + ox
                    src = cur_r if ox == -1 else (cur_l if ox == 1 else cur)
                    col_ref[HALO - s:HALO - s + M, k * cin:(k + 1) * cin] = src

            # One fused MXU matmul per layer: [M, 9*cin] @ [9*cin, cout].
            patch = col_ref[HALO:HALO + M, :kc]
            cur = jnp.dot(patch, w_ref[...],
                          preferred_element_type=jnp.float32) + b_ref[...]

        if pooling_method is not None:
            cn = channels[-1]
            # Stage the conv output once; wrapped / stale reads below only land
            # on non-anchor (odd h / odd w) positions, which are dropped later.
            col_ref[HALO:HALO + M, :cn] = cur
            y01 = col_ref[HALO + 1:HALO + 1 + M, :cn]
            y10 = col_ref[HALO + W:HALO + W + M, :cn]
            y11 = col_ref[HALO + W + 1:HALO + W + 1 + M, :cn]
            if pooling_method == "max":
                pf = jnp.maximum(jnp.maximum(cur, y01), jnp.maximum(y10, y11))
            else:   # 'avg'
                pf = (cur + y01 + y10 + y11) * 0.25
            # Even-column pick: one stride-2 sublane read (no selection matmul).
            col_ref[HALO:HALO + M, :cn] = pf
            hv = col_ref[pl.ds(HALO, M // 2, 2), :cn]          # [M/2, cn]
            if activation == "relu":
                hv = jnp.maximum(hv, 0.0)
            # Even-row pick: H/2 contiguous block copies into the output.
            for i in range(H // 2):
                out_ref[0, i * W2:(i + 1) * W2, :] = (
                    hv[i * W:i * W + W2, :].astype(out_ref.dtype))
        else:
            if activation == "relu":
                cur = jnp.maximum(cur, 0.0)
            out_ref[0] = cur.astype(out_ref.dtype)

    return kernel


@functools.partial(jax.jit,
                   static_argnames=("channels", "pooling_method", "activation"))
def conv_sub_block(x, params, channels, pooling_method="max", activation=None):
    """x: [B, C0, H, W] float32 (NCHW, like torch). Returns NCHW output."""
    if pooling_method not in ("max", "avg", None):
        raise ValueError(f"unknown pooling type {pooling_method}")
    B, C0, H, W = x.shape
    assert C0 == channels[0]
    L = len(channels) - 1
    assert len(params) == 2 * L
    if pooling_method is not None:
        assert H % 2 == 0 and W % 2 == 0

    M = H * W
    cn = channels[-1]
    M_out = M // 4 if pooling_method is not None else M
    HALO = ((W + 1 + 7) // 8) * 8
    ROWS = HALO + M + HALO
    SCR_W = max(max(9 * c for c in channels[:-1]), cn)

    # NCHW -> flat [B, H*W, C] (channels on lanes inside the kernel).
    # TODO(synk): accept/emit NHWC (or the flat layout) at the API boundary to
    #             drop these two XLA transpose passes when the caller allows it.
    x_flat = jnp.transpose(x, (0, 2, 3, 1)).reshape(B, M, C0)

    in_specs = [pl.BlockSpec((1, M, C0), lambda b: (b, 0, 0))]
    for l in range(L):
        w, bia = params[2 * l], params[2 * l + 1]
        # Constant index maps keep weights/biases VMEM-resident across the grid.
        in_specs.append(pl.BlockSpec(w.shape, lambda b: (0, 0)))
        in_specs.append(pl.BlockSpec(bia.shape, lambda b: (0, 0)))

    kernel = _make_kernel(tuple(channels), H, W, pooling_method, activation)

    # VMEM budget: scratch + double-buffered x/out blocks + weights (x2).
    need = 4 * (ROWS * SCR_W + 2 * M * C0 + 2 * M_out * cn
                + 2 * sum(9 * ci * co + co
                          for ci, co in zip(channels[:-1], channels[1:])))
    vmem_limit = int(max(16 << 20, min(48 << 20, 2 * need + (4 << 20))))

    out = pl.pallas_call(
        kernel,
        out_shape=jax.ShapeDtypeStruct((B, M_out, cn), jnp.float32),
        grid=(B,),
        in_specs=in_specs,
        out_specs=pl.BlockSpec((1, M_out, cn), lambda b: (b, 0, 0)),
        scratch_shapes=[pltpu.VMEM((ROWS, SCR_W), jnp.float32)],
        compiler_params=pltpu.CompilerParams(
            dimension_semantics=("parallel",),
            vmem_limit_bytes=vmem_limit),
    )(x_flat, *params)

    Ho, Wo = (H // 2, W // 2) if pooling_method is not None else (H, W)
    return out.reshape(B, Ho, Wo, cn).transpose(0, 3, 1, 2)


def init_params(key, channels):
    """PyTorch-Conv2d-style init. Weight l stored [9*Cin, Cout] with row index
    (ky*3 + kx)*Cin + ci (tap-major, matching the kernel's im2col column
    layout); bias l stored [1, Cout]."""
    L = len(channels) - 1
    keys = jax.random.split(key, 2 * L)
    params = []
    for l, (cin, cout) in enumerate(zip(channels[:-1], channels[1:])):
        bound = 1.0 / math.sqrt(cin * 9.0)
        w = jax.random.uniform(keys[2 * l], (9 * cin, cout), jnp.float32,
                               -bound, bound)
        b = jax.random.uniform(keys[2 * l + 1], (1, cout), jnp.float32,
                               -bound, bound)
        params += [w, b]
    return tuple(params)


def _reference(x, params, channels, pooling_method="max", activation=None):
    L = len(channels) - 1
    y = x
    for l in range(L):
        cin, cout = channels[l], channels[l + 1]
        w = params[2 * l].reshape(3, 3, cin, cout).transpose(3, 2, 0, 1)  # OIHW
        b = params[2 * l + 1].reshape(1, cout, 1, 1)
        y = jax.lax.conv_general_dilated(
            y, w, (1, 1), "SAME",
            dimension_numbers=("NCHW", "OIHW", "NCHW"),
            precision=jax.lax.Precision.HIGHEST) + b
    if pooling_method == "max":
        y = jax.lax.reduce_window(y, -jnp.inf, jax.lax.max,
                                  (1, 1, 2, 2), (1, 1, 2, 2), "VALID")
    elif pooling_method == "avg":
        y = jax.lax.reduce_window(y, 0.0, jax.lax.add,
                                  (1, 1, 2, 2), (1, 1, 2, 2), "VALID") * 0.25
    if activation == "relu":
        y = jnp.maximum(y, 0.0)
    return y


if __name__ == "__main__":
    key = jax.random.PRNGKey(0)
    k_x, k_p = jax.random.split(key)

    B, H, W = 2, 16, 16
    channels = (4, 8, 8)

    x = jax.random.normal(k_x, (B, channels[0], H, W), jnp.float32)
    params = init_params(k_p, channels)

    # Default config: max pooling, no activation.
    y = conv_sub_block(x, params, channels=channels,
                       pooling_method="max", activation=None)
    jax.block_until_ready(y)
    ref = _reference(x, params, channels, "max", None)
    assert y.shape == ref.shape, (y.shape, ref.shape)
    assert jnp.allclose(y, ref, atol=1e-4, rtol=1e-4), float(
        jnp.max(jnp.abs(y - ref)))

    # Second config: avg pooling + ReLU activation.
    y2 = conv_sub_block(x, params, channels=channels,
                        pooling_method="avg", activation="relu")
    jax.block_until_ready(y2)
    ref2 = _reference(x, params, channels, "avg", "relu")
    assert jnp.allclose(y2, ref2, atol=1e-4, rtol=1e-4), float(
        jnp.max(jnp.abs(y2 - ref2)))

    print("KERNEL_OK")
</pallas_src>

<mosaic_0001>
module attributes {stable_mosaic.version = 11 : i64} {
  func.func @kernel(%arg0: i32, %arg1: memref<1x256x4xf32, #tpu.memory_space<vmem>>, %arg2: memref<36x8xf32, #tpu.memory_space<vmem>>, %arg3: memref<1x8xf32, #tpu.memory_space<vmem>>, %arg4: memref<72x8xf32, #tpu.memory_space<vmem>>, %arg5: memref<1x8xf32, #tpu.memory_space<vmem>>, %arg6: memref<1x64x8xf32, #tpu.memory_space<vmem>>, %arg7: memref<304x72xf32, #tpu.memory_space<vmem>>) attributes {dimension_semantics = [#tpu.dimension_semantics<parallel>], iteration_bounds = array<i64: 2>, scalar_prefetch = 0 : i64, scratch_operands = 1 : i64, tpu.core_type = #tpu.core_type<tc>, window_params = [{transform_indices = @transform_0, window_bounds = array<i64: 1, 256, 4>}, {pipeline_mode = #tpu.pipeline_mode<synchronous>, transform_indices = @transform_1, window_bounds = array<i64: 36, 8>}, {pipeline_mode = #tpu.pipeline_mode<synchronous>, transform_indices = @transform_2, window_bounds = array<i64: 1, 8>}, {pipeline_mode = #tpu.pipeline_mode<synchronous>, transform_indices = @transform_3, window_bounds = array<i64: 72, 8>}, {pipeline_mode = #tpu.pipeline_mode<synchronous>, transform_indices = @transform_4, window_bounds = array<i64: 1, 8>}, {transform_indices = @transform_5, window_bounds = array<i64: 1, 64, 8>}]} {
    %0 = tpu.iota {dimensions = array<i32: 0>} : vector<256x1xi32>
    %c16_i32 = arith.constant 16 : i32
    %c0_i32 = arith.constant 0 : i32
    %1 = arith.cmpi eq, %c16_i32, %c0_i32 : i32
    %c1_i32 = arith.constant 1 : i32
    %2 = arith.select %1, %c1_i32, %c16_i32 : i32
    %3 = vector.broadcast %2 : i32 to vector<256x1xi32>
    %4 = arith.remsi %0, %3 : vector<256x1xi32>
    %c0_i32_0 = arith.constant 0 : i32
    %5 = vector.broadcast %c0_i32_0 : i32 to vector<256x1xi32>
    %6 = arith.cmpi ne, %4, %5 : vector<256x1xi32>
    %c0_i32_1 = arith.constant 0 : i32
    %7 = vector.broadcast %c0_i32_1 : i32 to vector<256x1xi32>
    %8 = arith.cmpi slt, %4, %7 : vector<256x1xi32>
    %c0_i32_2 = arith.constant 0 : i32
    %9 = arith.cmpi slt, %2, %c0_i32_2 : i32
    %10 = vector.broadcast %9 : i1 to vector<256x1xi1>
    %11 = vector.broadcast %10 : vector<256x1xi1> to vector<256x1xi1>
    %12 = arith.xori %8, %11 : vector<256x1xi1>
    %13 = arith.andi %12, %6 : vector<256x1xi1>
    %14 = vector.broadcast %2 : i32 to vector<256x1xi32>
    %15 = arith.addi %4, %14 : vector<256x1xi32>
    %16 = arith.select %13, %15, %4 : vector<256x1xi1>, vector<256x1xi32>
    %c1_i32_3 = arith.constant 1 : i32
    %17 = vector.broadcast %c1_i32_3 : i32 to vector<256x1xi32>
    %18 = arith.cmpi sge, %16, %17 : vector<256x1xi32>
    %c14_i32 = arith.constant 14 : i32
    %19 = vector.broadcast %c14_i32 : i32 to vector<256x1xi32>
    %20 = arith.cmpi sle, %16, %19 : vector<256x1xi32>
    %c0 = arith.constant 0 : index
    %c0_4 = arith.constant 0 : index
    %c0_5 = arith.constant 0 : index
    %21 = vector.load %arg1[%c0, %c0_4, %c0_5] : memref<1x256x4xf32, #tpu.memory_space<vmem>>, vector<1x256x4xf32>
    %22 = vector.shape_cast %21 : vector<1x256x4xf32> to vector<256x4xf32>
    %cst = arith.constant 0.000000e+00 : f32
    %23 = vector.broadcast %cst : f32 to vector<17x36xf32>
    %c24 = arith.constant 24 : index
    %c0_6 = arith.constant 0 : index
    %24 = vector.load %arg7[%c24, %c0_6] : memref<304x72xf32, #tpu.memory_space<vmem>>, vector<17x36xf32>
    tpu.vector_store %arg7[%c24, %c0_6], %23 {strides = array<i32>} : memref<304x72xf32, #tpu.memory_space<vmem>>, vector<17x36xf32>,
    %c263 = arith.constant 263 : index
    %c0_7 = arith.constant 0 : index
    %25 = vector.load %arg7[%c263, %c0_7] : memref<304x72xf32, #tpu.memory_space<vmem>>, vector<17x36xf32>
    tpu.vector_store %arg7[%c263, %c0_7], %23 {strides = array<i32>} : memref<304x72xf32, #tpu.memory_space<vmem>>, vector<17x36xf32>,
    %cst_8 = arith.constant 0.000000e+00 : f32
    %26 = vector.shape_cast %18 : vector<256x1xi1> to vector<256x1xi1>
    %27 = vector.broadcast %26 : vector<256x1xi1> to vector<256x4xi1>
    %28 = vector.broadcast %cst_8 : f32 to vector<256x4xf32>
    %29 = arith.select %27, %22, %28 : vector<256x4xi1>, vector<256x4xf32>
    %cst_9 = arith.constant 0.000000e+00 : f32
    %30 = vector.shape_cast %20 : vector<256x1xi1> to vector<256x1xi1>
    %31 = vector.broadcast %30 : vector<256x1xi1> to vector<256x4xi1>
    %32 = vector.broadcast %cst_9 : f32 to vector<256x4xf32>
    %33 = arith.select %31, %22, %32 : vector<256x4xi1>, vector<256x4xf32>
    %c41 = arith.constant 41 : index
    %c0_10 = arith.constant 0 : index
    %34 = vector.load %arg7[%c41, %c0_10] : memref<304x72xf32, #tpu.memory_space<vmem>>, vector<256x4xf32>
    tpu.vector_store %arg7[%c41, %c0_10], %33 {strides = array<i32>} : memref<304x72xf32, #tpu.memory_space<vmem>>, vector<256x4xf32>,
    %c40 = arith.constant 40 : index
    %c4 = arith.constant 4 : index
    %35 = vector.load %arg7[%c40, %c4] : memref<304x72xf32, #tpu.memory_space<vmem>>, vector<256x4xf32>
    tpu.vector_store %arg7[%c40, %c4], %22 {strides = array<i32>} : memref<304x72xf32, #tpu.memory_space<vmem>>, vector<256x4xf32>,
    %c39 = arith.constant 39 : index
    %c8 = arith.constant 8 : index
    %36 = vector.load %arg7[%c39, %c8] : memref<304x72xf32, #tpu.memory_space<vmem>>, vector<256x4xf32>
    tpu.vector_store %arg7[%c39, %c8], %29 {strides = array<i32>} : memref<304x72xf32, #tpu.memory_space<vmem>>, vector<256x4xf32>,
    %c25 = arith.constant 25 : index
    %c12 = arith.constant 12 : index
    %37 = vector.load %arg7[%c25, %c12] : memref<304x72xf32, #tpu.memory_space<vmem>>, vector<256x4xf32>
    tpu.vector_store %arg7[%c25, %c12], %33 {strides = array<i32>} : memref<304x72xf32, #tpu.memory_space<vmem>>, vector<256x4xf32>,
    %c24_11 = arith.constant 24 : index
    %c16 = arith.constant 16 : index
    %38 = vector.load %arg7[%c24_11, %c16] : memref<304x72xf32, #tpu.memory_space<vmem>>, vector<256x4xf32>
    tpu.vector_store %arg7[%c24_11, %c16], %22 {strides = array<i32>} : memref<304x72xf32, #tpu.memory_space<vmem>>, vector<256x4xf32>,
    %c23 = arith.constant 23 : index
    %c20 = arith.constant 20 : index
    %39 = vector.load %arg7[%c23, %c20] : memref<304x72xf32, #tpu.memory_space<vmem>>, vector<256x4xf32>
    tpu.vector_store %arg7[%c23, %c20], %29 {strides = array<i32>} : memref<304x72xf32, #tpu.memory_space<vmem>>, vector<256x4xf32>,
    %c9 = arith.constant 9 : index
    %c24_12 = arith.constant 24 : index
    %40 = vector.load %arg7[%c9, %c24_12] : memref<304x72xf32, #tpu.memory_space<vmem>>, vector<256x4xf32>
    tpu.vector_store %arg7[%c9, %c24_12], %33 {strides = array<i32>} : memref<304x72xf32, #tpu.memory_space<vmem>>, vector<256x4xf32>,
    %c8_13 = arith.constant 8 : index
    %c28 = arith.constant 28 : index
    %41 = vector.load %arg7[%c8_13, %c28] : memref<304x72xf32, #tpu.memory_space<vmem>>, vector<256x4xf32>
    tpu.vector_store %arg7[%c8_13, %c28], %22 {strides = array<i32>} : memref<304x72xf32, #tpu.memory_space<vmem>>, vector<256x4xf32>,
    %c7 = arith.constant 7 : index
    %c32 = arith.constant 32 : index
    %42 = vector.load %arg7[%c7, %c32] : memref<304x72xf32, #tpu.memory_space<vmem>>, vector<256x4xf32>
    tpu.vector_store %arg7[%c7, %c32], %29 {strides = array<i32>} : memref<304x72xf32, #tpu.memory_space<vmem>>, vector<256x4xf32>,
    %c24_14 = arith.constant 24 : index
    %c0_15 = arith.constant 0 : index
    %43 = vector.load %arg7[%c24_14, %c0_15] : memref<304x72xf32, #tpu.memory_space<vmem>>, vector<256x36xf32>
    %c0_16 = arith.constant 0 : index
    %c0_17 = arith.constant 0 : index
    %44 = vector.load %arg2[%c0_16, %c0_17] : memref<36x8xf32, #tpu.memory_space<vmem>>, vector<36x8xf32>
    %cst_18 = arith.constant dense<0.000000e+00> : vector<256x8xf32>
    %45 = tpu.matmul %43, %44, %cst_18 {dimension_numbers = #tpu.dot_dimension_numbers<[1], [0], [0], [1], [0, 0, 1, 1], [], []>} : vector<256x36xf32>, vector<36x8xf32>, vector<256x8xf32> -> vector<256x8xf32>
    %c0_19 = arith.constant 0 : index
    %c0_20 = arith.constant 0 : index
    %46 = vector.load %arg3[%c0_19, %c0_20] : memref<1x8xf32, #tpu.memory_space<vmem>>, vector<1x8xf32>
    %47 = vector.broadcast %46 : vector<1x8xf32> to vector<256x8xf32>
    %48 = arith.addf %45, %47 : vector<256x8xf32>
    %cst_21 = arith.constant 0.000000e+00 : f32
    %49 = vector.broadcast %cst_21 : f32 to vector<17x72xf32>
    %c24_22 = arith.constant 24 : index
    %c0_23 = arith.constant 0 : index
    %50 = vector.load %arg7[%c24_22, %c0_23] : memref<304x72xf32, #tpu.memory_space<vmem>>, vector<17x72xf32>
    tpu.vector_store %arg7[%c24_22, %c0_23], %49 {strides = array<i32>} : memref<304x72xf32, #tpu.memory_space<vmem>>, vector<17x72xf32>,
    %c263_24 = arith.constant 263 : index
    %c0_25 = arith.constant 0 : index
    %51 = vector.load %arg7[%c263_24, %c0_25] : memref<304x72xf32, #tpu.memory_space<vmem>>, vector<17x72xf32>
    tpu.vector_store %arg7[%c263_24, %c0_25], %49 {strides = array<i32>} : memref<304x72xf32, #tpu.memory_space<vmem>>, vector<17x72xf32>,
    %cst_26 = arith.constant 0.000000e+00 : f32
    %52 = vector.shape_cast %18 : vector<256x1xi1> to vector<256x1xi1>
    %53 = vector.broadcast %52 : vector<256x1xi1> to vector<256x8xi1>
    %54 = vector.broadcast %cst_26 : f32 to vector<256x8xf32>
    %55 = arith.select %53, %48, %54 : vector<256x8xi1>, vector<256x8xf32>
    %cst_27 = arith.constant 0.000000e+00 : f32
    %56 = vector.shape_cast %20 : vector<256x1xi1> to vector<256x1xi1>
    %57 = vector.broadcast %56 : vector<256x1xi1> to vector<256x8xi1>
    %58 = vector.broadcast %cst_27 : f32 to vector<256x8xf32>
    %59 = arith.select %57, %48, %58 : vector<256x8xi1>, vector<256x8xf32>
    %c41_28 = arith.constant 41 : index
    %c0_29 = arith.constant 0 : index
    %60 = vector.load %arg7[%c41_28, %c0_29] : memref<304x72xf32, #tpu.memory_space<vmem>>, vector<256x8xf32>
    tpu.vector_store %arg7[%c41_28, %c0_29], %59 {strides = array<i32>} : memref<304x72xf32, #tpu.memory_space<vmem>>, vector<256x8xf32>,
    %c40_30 = arith.constant 40 : index
    %c8_31 = arith.constant 8 : index
    %61 = vector.load %arg7[%c40_30, %c8_31] : memref<304x72xf32, #tpu.memory_space<vmem>>, vector<256x8xf32>
    tpu.vector_store %arg7[%c40_30, %c8_31], %48 {strides = array<i32>} : memref<304x72xf32, #tpu.memory_space<vmem>>, vector<256x8xf32>,
    %c39_32 = arith.constant 39 : index
    %c16_33 = arith.constant 16 : index
    %62 = vector.load %arg7[%c39_32, %c16_33] : memref<304x72xf32, #tpu.memory_space<vmem>>, vector<256x8xf32>
    tpu.vector_store %arg7[%c39_32, %c16_33], %55 {strides = array<i32>} : memref<304x72xf32, #tpu.memory_space<vmem>>, vector<256x8xf32>,
    %c25_34 = arith.constant 25 : index
    %c24_35 = arith.constant 24 : index
    %63 = vector.load %arg7[%c25_34, %c24_35] : memref<304x72xf32, #tpu.memory_space<vmem>>, vector<256x8xf32>
    tpu.vector_store %arg7[%c25_34, %c24_35], %59 {strides = array<i32>} : memref<304x72xf32, #tpu.memory_space<vmem>>, vector<256x8xf32>,
    %c24_36 = arith.constant 24 : index
    %c32_37 = arith.constant 32 : index
    %64 = vector.load %arg7[%c24_36, %c32_37] : memref<304x72xf32, #tpu.memory_space<vmem>>, vector<256x8xf32>
    tpu.vector_store %arg7[%c24_36, %c32_37], %48 {strides = array<i32>} : memref<304x72xf32, #tpu.memory_space<vmem>>, vector<256x8xf32>,
    %c23_38 = arith.constant 23 : index
    %c40_39 = arith.constant 40 : index
    %65 = vector.load %arg7[%c23_38, %c40_39] : memref<304x72xf32, #tpu.memory_space<vmem>>, vector<256x8xf32>
    tpu.vector_store %arg7[%c23_38, %c40_39], %55 {strides = array<i32>} : memref<304x72xf32, #tpu.memory_space<vmem>>, vector<256x8xf32>,
    %c9_40 = arith.constant 9 : index
    %c48 = arith.constant 48 : index
    %66 = vector.load %arg7[%c9_40, %c48] : memref<304x72xf32, #tpu.memory_space<vmem>>, vector<256x8xf32>
    tpu.vector_store %arg7[%c9_40, %c48], %59 {strides = array<i32>} : memref<304x72xf32, #tpu.memory_space<vmem>>, vector<256x8xf32>,
    %c8_41 = arith.constant 8 : index
    %c56 = arith.constant 56 : index
    %67 = vector.load %arg7[%c8_41, %c56] : memref<304x72xf32, #tpu.memory_space<vmem>>, vector<256x8xf32>
    tpu.vector_store %arg7[%c8_41, %c56], %48 {strides = array<i32>} : memref<304x72xf32, #tpu.memory_space<vmem>>, vector<256x8xf32>,
    %c7_42 = arith.constant 7 : index
    %c64 = arith.constant 64 : index
    %68 = vector.load %arg7[%c7_42, %c64] : memref<304x72xf32, #tpu.memory_space<vmem>>, vector<256x8xf32>
    tpu.vector_store %arg7[%c7_42, %c64], %55 {strides = array<i32>} : memref<304x72xf32, #tpu.memory_space<vmem>>, vector<256x8xf32>,
    %c24_43 = arith.constant 24 : index
    %c0_44 = arith.constant 0 : index
    %69 = vector.load %arg7[%c24_43, %c0_44] : memref<304x72xf32, #tpu.memory_space<vmem>>, vector<256x72xf32>
    %c0_45 = arith.constant 0 : index
    %c0_46 = arith.constant 0 : index
    %70 = vector.load %arg4[%c0_45, %c0_46] : memref<72x8xf32, #tpu.memory_space<vmem>>, vector<72x8xf32>
    %cst_47 = arith.constant dense<0.000000e+00> : vector<256x8xf32>
    %71 = tpu.matmul %69, %70, %cst_47 {dimension_numbers = #tpu.dot_dimension_numbers<[1], [0], [0], [1], [0, 0, 1, 1], [], []>} : vector<256x72xf32>, vector<72x8xf32>, vector<256x8xf32> -> vector<256x8xf32>
    %c0_48 = arith.constant 0 : index
    %c0_49 = arith.constant 0 : index
    %72 = vector.load %arg5[%c0_48, %c0_49] : memref<1x8xf32, #tpu.memory_space<vmem>>, vector<1x8xf32>
    %73 = vector.broadcast %72 : vector<1x8xf32> to vector<256x8xf32>
    %74 = arith.addf %71, %73 : vector<256x8xf32>
    %c24_50 = arith.constant 24 : index
    %c0_51 = arith.constant 0 : index
    %75 = vector.load %arg7[%c24_50, %c0_51] : memref<304x72xf32, #tpu.memory_space<vmem>>, vector<256x8xf32>
    tpu.vector_store %arg7[%c24_50, %c0_51], %74 {strides = array<i32>} : memref<304x72xf32, #tpu.memory_space<vmem>>, vector<256x8xf32>,
    %c25_52 = arith.constant 25 : index
    %c0_53 = arith.constant 0 : index
    %76 = vector.load %arg7[%c25_52, %c0_53] : memref<304x72xf32, #tpu.memory_space<vmem>>, vector<256x8xf32>
    %c40_54 = arith.constant 40 : index
    %c0_55 = arith.constant 0 : index
    %77 = vector.load %arg7[%c40_54, %c0_55] : memref<304x72xf32, #tpu.memory_space<vmem>>, vector<256x8xf32>
    %c41_56 = arith.constant 41 : index
    %c0_57 = arith.constant 0 : index
    %78 = vector.load %arg7[%c41_56, %c0_57] : memref<304x72xf32, #tpu.memory_space<vmem>>, vector<256x8xf32>
    %79 = arith.maximumf %74, %76 : vector<256x8xf32>
    %80 = arith.maximumf %77, %78 : vector<256x8xf32>
    %81 = arith.maximumf %79, %80 : vector<256x8xf32>
    %c24_58 = arith.constant 24 : index
    %c0_59 = arith.constant 0 : index
    %82 = vector.load %arg7[%c24_58, %c0_59] : memref<304x72xf32, #tpu.memory_space<vmem>>, vector<256x8xf32>
    tpu.vector_store %arg7[%c24_58, %c0_59], %81 {strides = array<i32>} : memref<304x72xf32, #tpu.memory_space<vmem>>, vector<256x8xf32>,
    %c24_60 = arith.constant 24 : index
    %c0_61 = arith.constant 0 : index
    %83 = tpu.strided_load %arg7[%c24_60, %c0_61] {strides = array<i32: 2, 1>} : memref<304x72xf32, #tpu.memory_space<vmem>>, vector<128x8xf32>
    %84 = vector.extract_strided_slice %83 {offsets = [0, 0], sizes = [8, 8], strides = [1, 1]} : vector<128x8xf32> to vector<8x8xf32>
    %c0_62 = arith.constant 0 : index
    %c0_63 = arith.constant 0 : index
    %c0_64 = arith.constant 0 : index
    %85 = vector.load %arg6[%c0_62, %c0_63, %c0_64] : memref<1x64x8xf32, #tpu.memory_space<vmem>>, vector<1x8x8xf32>
    %86 = vector.shape_cast %85 : vector<1x8x8xf32> to vector<8x8xf32>
    %87 = vector.shape_cast %84 : vector<8x8xf32> to vector<1x8x8xf32>
    tpu.vector_store %arg6[%c0_62, %c0_63, %c0_64], %87 {strides = array<i32>} : memref<1x64x8xf32, #tpu.memory_space<vmem>>, vector<1x8x8xf32>,
    %88 = vector.extract_strided_slice %83 {offsets = [16, 0], sizes = [8, 8], strides = [1, 1]} : vector<128x8xf32> to vector<8x8xf32>
    %c0_65 = arith.constant 0 : index
    %c8_66 = arith.constant 8 : index
    %c0_67 = arith.constant 0 : index
    %89 = vector.load %arg6[%c0_65, %c8_66, %c0_67] : memref<1x64x8xf32, #tpu.memory_space<vmem>>, vector<1x8x8xf32>
    %90 = vector.shape_cast %89 : vector<1x8x8xf32> to vector<8x8xf32>
    %91 = vector.shape_cast %88 : vector<8x8xf32> to vector<1x8x8xf32>
    tpu.vector_store %arg6[%c0_65, %c8_66, %c0_67], %91 {strides = array<i32>} : memref<1x64x8xf32, #tpu.memory_space<vmem>>, vector<1x8x8xf32>,
    %92 = vector.extract_strided_slice %83 {offsets = [32, 0], sizes = [8, 8], strides = [1, 1]} : vector<128x8xf32> to vector<8x8xf32>
    %c0_68 = arith.constant 0 : index
    %c16_69 = arith.constant 16 : index
    %c0_70 = arith.constant 0 : index
    %93 = vector.load %arg6[%c0_68, %c16_69, %c0_70] : memref<1x64x8xf32, #tpu.memory_space<vmem>>, vector<1x8x8xf32>
    %94 = vector.shape_cast %93 : vector<1x8x8xf32> to vector<8x8xf32>
    %95 = vector.shape_cast %92 : vector<8x8xf32> to vector<1x8x8xf32>
    tpu.vector_store %arg6[%c0_68, %c16_69, %c0_70], %95 {strides = array<i32>} : memref<1x64x8xf32, #tpu.memory_space<vmem>>, vector<1x8x8xf32>,
    %96 = vector.extract_strided_slice %83 {offsets = [48, 0], sizes = [8, 8], strides = [1, 1]} : vector<128x8xf32> to vector<8x8xf32>
    %c0_71 = arith.constant 0 : index
    %c24_72 = arith.constant 24 : index
    %c0_73 = arith.constant 0 : index
    %97 = vector.load %arg6[%c0_71, %c24_72, %c0_73] : memref<1x64x8xf32, #tpu.memory_space<vmem>>, vector<1x8x8xf32>
    %98 = vector.shape_cast %97 : vector<1x8x8xf32> to vector<8x8xf32>
    %99 = vector.shape_cast %96 : vector<8x8xf32> to vector<1x8x8xf32>
    tpu.vector_store %arg6[%c0_71, %c24_72, %c0_73], %99 {strides = array<i32>} : memref<1x64x8xf32, #tpu.memory_space<vmem>>, vector<1x8x8xf32>,
    %100 = vector.extract_strided_slice %83 {offsets = [64, 0], sizes = [8, 8], strides = [1, 1]} : vector<128x8xf32> to vector<8x8xf32>
    %c0_74 = arith.constant 0 : index
    %c32_75 = arith.constant 32 : index
    %c0_76 = arith.constant 0 : index
    %101 = vector.load %arg6[%c0_74, %c32_75, %c0_76] : memref<1x64x8xf32, #tpu.memory_space<vmem>>, vector<1x8x8xf32>
    %102 = vector.shape_cast %101 : vector<1x8x8xf32> to vector<8x8xf32>
    %103 = vector.shape_cast %100 : vector<8x8xf32> to vector<1x8x8xf32>
    tpu.vector_store %arg6[%c0_74, %c32_75, %c0_76], %103 {strides = array<i32>} : memref<1x64x8xf32, #tpu.memory_space<vmem>>, vector<1x8x8xf32>,
    %104 = vector.extract_strided_slice %83 {offsets = [80, 0], sizes = [8, 8], strides = [1, 1]} : vector<128x8xf32> to vector<8x8xf32>
    %c0_77 = arith.constant 0 : index
    %c40_78 = arith.constant 40 : index
    %c0_79 = arith.constant 0 : index
    %105 = vector.load %arg6[%c0_77, %c40_78, %c0_79] : memref<1x64x8xf32, #tpu.memory_space<vmem>>, vector<1x8x8xf32>
    %106 = vector.shape_cast %105 : vector<1x8x8xf32> to vector<8x8xf32>
    %107 = vector.shape_cast %104 : vector<8x8xf32> to vector<1x8x8xf32>
    tpu.vector_store %arg6[%c0_77, %c40_78, %c0_79], %107 {strides = array<i32>} : memref<1x64x8xf32, #tpu.memory_space<vmem>>, vector<1x8x8xf32>,
    %108 = vector.extract_strided_slice %83 {offsets = [96, 0], sizes = [8, 8], strides = [1, 1]} : vector<128x8xf32> to vector<8x8xf32>
    %c0_80 = arith.constant 0 : index
    %c48_81 = arith.constant 48 : index
    %c0_82 = arith.constant 0 : index
    %109 = vector.load %arg6[%c0_80, %c48_81, %c0_82] : memref<1x64x8xf32, #tpu.memory_space<vmem>>, vector<1x8x8xf32>
    %110 = vector.shape_cast %109 : vector<1x8x8xf32> to vector<8x8xf32>
    %111 = vector.shape_cast %108 : vector<8x8xf32> to vector<1x8x8xf32>
    tpu.vector_store %arg6[%c0_80, %c48_81, %c0_82], %111 {strides = array<i32>} : memref<1x64x8xf32, #tpu.memory_space<vmem>>, vector<1x8x8xf32>,
    %112 = vector.extract_strided_slice %83 {offsets = [112, 0], sizes = [8, 8], strides = [1, 1]} : vector<128x8xf32> to vector<8x8xf32>
    %c0_83 = arith.constant 0 : index
    %c56_84 = arith.constant 56 : index
    %c0_85 = arith.constant 0 : index
    %113 = vector.load %arg6[%c0_83, %c56_84, %c0_85] : memref<1x64x8xf32, #tpu.memory_space<vmem>>, vector<1x8x8xf32>
    %114 = vector.shape_cast %113 : vector<1x8x8xf32> to vector<8x8xf32>
    %115 = vector.shape_cast %112 : vector<8x8xf32> to vector<1x8x8xf32>
    tpu.vector_store %arg6[%c0_83, %c56_84, %c0_85], %115 {strides = array<i32>} : memref<1x64x8xf32, #tpu.memory_space<vmem>>, vector<1x8x8xf32>,
    return
  }
  func.func @transform_0(%arg0: i32) -> (i32, i32, i32) {
    %c0_i32 = arith.constant 0 : i32
    %c0_i32_0 = arith.constant 0 : i32
    %c0_i32_1 = arith.constant 0 : i32
    return %arg0, %c0_i32, %c0_i32_0 : i32, i32, i32
  }
  func.func @transform_1(%arg0: i32) -> (i32, i32) {
    %c0_i32 = arith.constant 0 : i32
    %c0_i32_0 = arith.constant 0 : i32
    %c0_i32_1 = arith.constant 0 : i32
    return %c0_i32, %c0_i32_0 : i32, i32
  }
  func.func @transform_2(%arg0: i32) -> (i32, i32) {
    %c0_i32 = arith.constant 0 : i32
    %c0_i32_0 = arith.constant 0 : i32
    %c0_i32_1 = arith.constant 0 : i32
    return %c0_i32, %c0_i32_0 : i32, i32
  }
  func.func @transform_3(%arg0: i32) -> (i32, i32) {
    %c0_i32 = arith.constant 0 : i32
    %c0_i32_0 = arith.constant 0 : i32
    %c0_i32_1 = arith.constant 0 : i32
    return %c0_i32, %c0_i32_0 : i32, i32
  }
  func.func @transform_4(%arg0: i32) -> (i32, i32) {
    %c0_i32 = arith.constant 0 : i32
    %c0_i32_0 = arith.constant 0 : i32
    %c0_i32_1 = arith.constant 0 : i32
    return %c0_i32, %c0_i32_0 : i32, i32
  }
  func.func @transform_5(%arg0: i32) -> (i32, i32, i32) {
    %c0_i32 = arith.constant 0 : i32
    %c0_i32_0 = arith.constant 0 : i32
    %c0_i32_1 = arith.constant 0 : i32
    return %arg0, %c0_i32, %c0_i32_0 : i32, i32, i32
  }
}

</mosaic_0001>

<llo_original>
// kernel: conv_sub_block.1
$region0: #{conv_sub_block.1}
  #allocation0 [shape = 'u32[]', space=smem, size = 0x4, offset = 0x4, fixed_abs, tag = 'smem constant byte address 0x4 - core index']
  #allocation1 [shape = 'u32[144,128]{1,0:T(1,128)}', space=vmem, size = 0x12000, scoped, tag = 'internal scratch']
  #allocation2 [shape = 'f32[304,72]{1,0:T(8,128)}', space=vmem, size = 0x26000, scoped, tag = 'scratch operand']
  %s0 = inlined_call_operand.vmem [shape: f32[2,256,4], index: 0, kind: input, shape index: {}]
  %s1 = inlined_call_operand.vmem [shape: f32[36,8], index: 1, kind: input, shape index: {}]
  %s2 = inlined_call_operand.vmem [shape: f32[1,8], index: 2, kind: input, shape index: {}]
  %s3 = inlined_call_operand.vmem [shape: f32[72,8], index: 3, kind: input, shape index: {}]
  %s4 = inlined_call_operand.vmem [shape: f32[1,8], index: 4, kind: input, shape index: {}]
  %s5 = inlined_call_operand.vmem [shape: f32[2,64,8], index: 5, kind: output, shape index: {}]
  %s6 = sld [smem:[#allocation0]]
  $region53: #{conv_sub_block.1} parent=0
    _
  %s8 = ssub.s32 1, %s6
  %s9 = scalar_select 0, %s8, %s6
  loop: start=0, step=1, limit=4
  $region2: #{conv_sub_block.1} parent=0 // loop_pre_header
    _
  $region3: #{conv_sub_block.1} parent=0 // loop_header
    %s11 = sphi 0, %s15
    %p12 = scmp.ge.s32.totalorder %s11, 4
    %s21 = sphi 0, %s23
    %s24 = sphi 0, %s21
    %s25 = sphi 0, %s24
    %s41 = sphi 0, %s25
    %s45 = sphi 0, %s45
    %s47 = sphi 0, %s45
    %s48 = sphi 0, %s47
    %s62 = sphi 0, %s48
    %s66 = sphi 0, %s66
    %s68 = sphi 0, %s66
    %s69 = sphi 0, %s68
    %s83 = sphi 0, %s69
    %s87 = sphi 0, %s87
    %s89 = sphi 0, %s87
    %s90 = sphi 0, %s89
    %s104 = sphi 0, %s90
    %s108 = sphi 0, %s108
    %s110 = sphi 0, %s108
    %s111 = sphi 0, %s110
    %s125 = sphi 0, %s111
    %s131 = sphi 0, %s133
    %s134 = sphi 0, %s131
    %s135 = sphi 0, %s134
    %s151 = sphi 0, %s135
  $region4: #{conv_sub_block.1} parent=0 // loop_header_branch
    %14 = sbr.rel (%p12) target = $region8
  $region5: #{conv_sub_block.1} parent=0 // loop_body
    %s16 = ssub.s32 %s11, 1
    %s17 = ssub.s32 %s11, 2
    %s18 = sadd.s32 %s11, 1
    %s19 = ssub.s32 %s11, %s18
    %p20 = scmp.eq.s32.totalorder %s19, 0
    %s22 = sadd.s32 %s21, 1
    %s23 = scalar_select %p20, %s21, %s22
    %p26 = pneg %p20
    %p27 = scmp.eq.s32.totalorder %s11, 1
    %p28 = por %p26, %p27
    %p29 = scmp.ne.s32.totalorder %s21, %s24
    %p30 = scmp.eq.s32.totalorder %s11, 0
    %p31 = por %p29, %p30
    %p32 = scmp.ne.s32.totalorder %s21, %s24
    %p33 = scmp.eq.s32.totalorder %s16, 1
    %p34 = por %p32, %p33
    %p35 = scmp.ne.s32.totalorder %s24, %s25
    %p36 = scmp.eq.s32.totalorder %s16, 0
    %p37 = por %p35, %p36
    %p38 = scmp.ne.s32.totalorder %s24, %s25
    %p39 = scmp.eq.s32.totalorder %s17, 1
    %p40 = por %p38, %p39
    %p42 = scmp.ne.s32.totalorder %s25, %s41
    %p43 = scmp.eq.s32.totalorder %s17, 0
    %p44 = por %p42, %p43
    %s46 = sadd.s32 %s45, 1
    %p49 = scmp.eq.s32.totalorder %s11, 1
    %p50 = scmp.ne.s32.totalorder %s45, %s47
    %p51 = scmp.eq.s32.totalorder %s11, 0
    %p52 = por %p50, %p51
    %p53 = scmp.ne.s32.totalorder %s45, %s47
    %p54 = scmp.eq.s32.totalorder %s16, 1
    %p55 = por %p53, %p54
    %p56 = scmp.ne.s32.totalorder %s47, %s48
    %p57 = scmp.eq.s32.totalorder %s16, 0
    %p58 = por %p56, %p57
    %p59 = scmp.ne.s32.totalorder %s47, %s48
    %p60 = scmp.eq.s32.totalorder %s17, 1
    %p61 = por %p59, %p60
    %p63 = scmp.ne.s32.totalorder %s48, %s62
    %p64 = scmp.eq.s32.totalorder %s17, 0
    %p65 = por %p63, %p64
    %s67 = sadd.s32 %s66, 1
    %p70 = scmp.eq.s32.totalorder %s11, 1
    %p71 = scmp.ne.s32.totalorder %s66, %s68
    %p72 = scmp.eq.s32.totalorder %s11, 0
    %p73 = por %p71, %p72
    %p74 = scmp.ne.s32.totalorder %s66, %s68
    %p75 = scmp.eq.s32.totalorder %s16, 1
    %p76 = por %p74, %p75
    %p77 = scmp.ne.s32.totalorder %s68, %s69
    %p78 = scmp.eq.s32.totalorder %s16, 0
    %p79 = por %p77, %p78
    %p80 = scmp.ne.s32.totalorder %s68, %s69
    %p81 = scmp.eq.s32.totalorder %s17, 1
    %p82 = por %p80, %p81
    %p84 = scmp.ne.s32.totalorder %s69, %s83
    %p85 = scmp.eq.s32.totalorder %s17, 0
    %p86 = por %p84, %p85
    %s88 = sadd.s32 %s87, 1
    %p91 = scmp.eq.s32.totalorder %s11, 1
    %p92 = scmp.ne.s32.totalorder %s87, %s89
    %p93 = scmp.eq.s32.totalorder %s11, 0
    %p94 = por %p92, %p93
    %p95 = scmp.ne.s32.totalorder %s87, %s89
    %p96 = scmp.eq.s32.totalorder %s16, 1
    %p97 = por %p95, %p96
    %p98 = scmp.ne.s32.totalorder %s89, %s90
    %p99 = scmp.eq.s32.totalorder %s16, 0
    %p100 = por %p98, %p99
    %p101 = scmp.ne.s32.totalorder %s89, %s90
    %p102 = scmp.eq.s32.totalorder %s17, 1
    %p103 = por %p101, %p102
    %p105 = scmp.ne.s32.totalorder %s90, %s104
    %p106 = scmp.eq.s32.totalorder %s17, 0
    %p107 = por %p105, %p106
    %s109 = sadd.s32 %s108, 1
    %p112 = scmp.eq.s32.totalorder %s11, 1
    %p113 = scmp.ne.s32.totalorder %s108, %s110
    %p114 = scmp.eq.s32.totalorder %s11, 0
    %p115 = por %p113, %p114
    %p116 = scmp.ne.s32.totalorder %s108, %s110
    %p117 = scmp.eq.s32.totalorder %s16, 1
    %p118 = por %p116, %p117
    %p119 = scmp.ne.s32.totalorder %s110, %s111
    %p120 = scmp.eq.s32.totalorder %s16, 0
    %p121 = por %p119, %p120
    %p122 = scmp.ne.s32.totalorder %s110, %s111
    %p123 = scmp.eq.s32.totalorder %s17, 1
    %p124 = por %p122, %p123
    %p126 = scmp.ne.s32.totalorder %s111, %s125
    %p127 = scmp.eq.s32.totalorder %s17, 0
    %p128 = por %p126, %p127
    %s129 = ssub.s32 %s11, %s18
    %p130 = scmp.eq.s32.totalorder %s129, 0
    %s132 = sadd.s32 %s131, 1
    %s133 = scalar_select %p130, %s131, %s132
    %p136 = pneg %p130
    %p137 = scmp.eq.s32.totalorder %s11, 1
    %p138 = por %p136, %p137
    %p139 = scmp.ne.s32.totalorder %s131, %s134
    %p140 = scmp.eq.s32.totalorder %s11, 0
    %p141 = por %p139, %p140
    %p142 = scmp.ne.s32.totalorder %s131, %s134
    %p143 = scmp.eq.s32.totalorder %s16, 1
    %p144 = por %p142, %p143
    %p145 = scmp.ne.s32.totalorder %s134, %s135
    %p146 = scmp.eq.s32.totalorder %s16, 0
    %p147 = por %p145, %p146
    %p148 = scmp.ne.s32.totalorder %s134, %s135
    %p149 = scmp.eq.s32.totalorder %s17, 1
    %p150 = por %p148, %p149
    %p152 = scmp.ne.s32.totalorder %s135, %s151
    %p153 = scmp.eq.s32.totalorder %s17, 0
    %p154 = por %p152, %p153
    %p155 = scmp.le.s32.totalorder 1, %s11
    %p156 = scmp.lt.s32.totalorder %s11, 3
    %p157 = pnand %p155, %p156
    %p158 = pneg %p157
    // Predicated region
    $region9: #{conv_sub_block.1} parent=5 // pred_check
      _
    $region10: #{conv_sub_block.1} parent=5 // pred_check_branch
      %160 = sbr.rel (%p157) target = $region12
    $region11: #{conv_sub_block.1} parent=5 // pred_region
      %s161 = ssub.s32 %s11, 1
      // Predicated region
      $region13: #{conv_sub_block.1} parent=11 // pred_check
        %p162 = pneg %p58
      $region14: #{conv_sub_block.1} parent=11 // pred_check_branch
        %164 = sbr.rel (%p162) target = $region16
      $region15: #{conv_sub_block.1} parent=11 // pred_region
        _
      $region16: #{conv_sub_block.1} parent=11 // pred_fallthru
        _
      // Predicated region
      $region17: #{conv_sub_block.1} parent=11 // pred_check
        %p165 = pneg %p79
      $region18: #{conv_sub_block.1} parent=11 // pred_check_branch
        %167 = sbr.rel (%p165) target = $region20
      $region19: #{conv_sub_block.1} parent=11 // pred_region
        _
      $region20: #{conv_sub_block.1} parent=11 // pred_fallthru
        _
      // Predicated region
      $region21: #{conv_sub_block.1} parent=11 // pred_check
        %p168 = pneg %p100
      $region22: #{conv_sub_block.1} parent=11 // pred_check_branch
        %170 = sbr.rel (%p168) target = $region24
      $region23: #{conv_sub_block.1} parent=11 // pred_region
        _
      $region24: #{conv_sub_block.1} parent=11 // pred_fallthru
        _
      // Predicated region
      $region25: #{conv_sub_block.1} parent=11 // pred_check
        %p171 = pneg %p121
      $region26: #{conv_sub_block.1} parent=11 // pred_check_branch
        %173 = sbr.rel (%p171) target = $region28
      $region27: #{conv_sub_block.1} parent=11 // pred_region
        _
      $region28: #{conv_sub_block.1} parent=11 // pred_fallthru
        _
    $region12: #{conv_sub_block.1} parent=5 // pred_fallthru
      _
    %p174 = scmp.lt.s32.totalorder %s11, 2
    // Predicated region
    $region29: #{conv_sub_block.1} parent=5 // pred_check
      %p175 = pneg %p174
    $region30: #{conv_sub_block.1} parent=5 // pred_check_branch
      %177 = sbr.rel (%p175) target = $region32
    $region31: #{conv_sub_block.1} parent=5 // pred_region
      // Predicated region
      $region33: #{conv_sub_block.1} parent=31 // pred_check
        %p178 = pneg %p31
      $region34: #{conv_sub_block.1} parent=31 // pred_check_branch
        %180 = sbr.rel (%p178) target = $region36
      $region35: #{conv_sub_block.1} parent=31 // pred_region
        %p181 = scmp.lt.s32.totalorder %s11, 1
        %s182 = scalar_select %p181, %s11, 1
        %s183 = smul.addr %s182, 32
        %s184 = smul.addr %s183, 8
        %s185 = scalar_lea.vmem %s0, %s184
      $region36: #{conv_sub_block.1} parent=31 // pred_fallthru
        _
    $region32: #{conv_sub_block.1} parent=5 // pred_fallthru
      _
    %p186 = scmp.le.s32.totalorder 1, %s11
    %p187 = scmp.lt.s32.totalorder %s11, 3
    %p188 = pnand %p186, %p187
    %p189 = pneg %p188
    // Predicated region
    $region37: #{conv_sub_block.1} parent=5 // pred_check
      _
    $region38: #{conv_sub_block.1} parent=5 // pred_check_branch
      %191 = sbr.rel (%p188) target = $region40
    $region39: #{conv_sub_block.1} parent=5 // pred_region
      %s192 = ssub.s32 %s11, 1
      %p193 = scmp.lt.s32.totalorder %s16, 1
      %s194 = scalar_select %p193, %s16, 1
      %s195 = smul.addr %s194, 32
      %s196 = smul.addr %s195, 8
      %s197 = scalar_lea.vmem %s0, %s196
      %p198 = pneg %p37
      %p199 = pneg %p34
      %p200 = pneg %p58
      %p201 = pneg %p55
      %p202 = pneg %p79
      %p203 = pneg %p76
      %p204 = pneg %p100
      %p205 = pneg %p97
      %p206 = pneg %p121
      %p207 = pneg %p118
      %p208 = pneg %p147
      %p209 = pneg %p144
      %p210 = scmp.lt.s32.totalorder %s16, 1
      %s211 = scalar_select %p210, %s16, 1
      %s212 = smul.addr %s211, 8
      %s213 = smul.addr %s212, 8
      %s214 = scalar_lea.vmem %s5, %s213
      %p215 = scmp.lt.s32.totalorder %s16, 1
      %s216 = scalar_select %p215, %s16, 1
      %s217 = smul.addr %s216, 32
      %s218 = smul.addr %s217, 8
      %s219 = scalar_lea.vmem %s0, %s218
      %p220 = scmp.lt.s32.totalorder %s16, 1
      %s221 = scalar_select %p220, %s16, 1
      %s222 = smul.addr %s221, 8
      %s223 = smul.addr %s222, 8
      %s224 = scalar_lea.vmem %s5, %s223
      %v225 = vlaneseq
      %v226 = vshrl.u32 %v225, 7
      %v227 = vadd.s32 %v226, 8
      %v228 = vadd.s32 %v226, 16
      %v229 = vadd.s32 %v226, 24
      %v230 = vadd.s32 %v226, 32
      %v231 = vadd.s32 %v226, 40
      %v232 = vadd.s32 %v226, 48
      %v233 = vadd.s32 %v226, 56
      %v234 = vadd.s32 %v226, 64
      %v235 = vadd.s32 %v226, 72
      %v236 = vadd.s32 %v226, 80
      %v237 = vadd.s32 %v226, 88
      %v238 = vadd.s32 %v226, 96
      %v239 = vadd.s32 %v226, 104
      %v240 = vadd.s32 %v226, 112
      %v241 = vadd.s32 %v226, 120
      %v242 = vadd.s32 %v226, 128
      %v243 = vadd.s32 %v226, 136
      %v244 = vadd.s32 %v226, 144
      %v245 = vadd.s32 %v226, 152
      %v246 = vadd.s32 %v226, 160
      %v247 = vadd.s32 %v226, 168
      %v248 = vadd.s32 %v226, 176
      %v249 = vadd.s32 %v226, 184
      %v250 = vadd.s32 %v226, 192
      %v251 = vadd.s32 %v226, 200
      %v252 = vadd.s32 %v226, 208
      %v253 = vadd.s32 %v226, 216
      %v254 = vadd.s32 %v226, 224
      %v255 = vadd.s32 %v226, 232
      %v256 = vadd.s32 %v226, 240
      %v257 = vadd.s32 %v226, 248
      %vm258 = vcmp.lt.s32.totalorder %v226, 0
      %v259 = vsub.s32 0, %v226
      %v260 = vsel %vm258, %v259, %v226
      %v261 = vshrl.u32 %v260, 4
      %v262 = vand.u32 %v260, 15
      %v263 = vsub.s32 0, %v262
      %v264 = vsel %vm258, %v263, %v262
      %vm265 = vcmp.lt.s32.totalorder %v227, 0
      %v266 = vsub.s32 0, %v227
      %v267 = vsel %vm265, %v266, %v227
      %v268 = vshrl.u32 %v267, 4
      %v269 = vand.u32 %v267, 15
      %v270 = vsub.s32 0, %v269
      %v271 = vsel %vm265, %v270, %v269
      %vm272 = vcmp.lt.s32.totalorder %v228, 0
      %v273 = vsub.s32 0, %v228
      %v274 = vsel %vm272, %v273, %v228
      %v275 = vshrl.u32 %v274, 4
      %v276 = vand.u32 %v274, 15
      %v277 = vsub.s32 0, %v276
      %v278 = vsel %vm272, %v277, %v276
      %vm279 = vcmp.lt.s32.totalorder %v229, 0
      %v280 = vsub.s32 0, %v229
      %v281 = vsel %vm279, %v280, %v229
      %v282 = vshrl.u32 %v281, 4
      %v283 = vand.u32 %v281, 15
      %v284 = vsub.s32 0, %v283
      %v285 = vsel %vm279, %v284, %v283
      %vm286 = vcmp.lt.s32.totalorder %v230, 0
      %v287 = vsub.s32 0, %v230
      %v288 = vsel %vm286, %v287, %v230
      %v289 = vshrl.u32 %v288, 4
      %v290 = vand.u32 %v288, 15
      %v291 = vsub.s32 0, %v290
      %v292 = vsel %vm286, %v291, %v290
      %vm293 = vcmp.lt.s32.totalorder %v231, 0
      %v294 = vsub.s32 0, %v231
      %v295 = vsel %vm293, %v294, %v231
      %v296 = vshrl.u32 %v295, 4
      %v297 = vand.u32 %v295, 15
      %v298 = vsub.s32 0, %v297
      %v299 = vsel %vm293, %v298, %v297
      %vm300 = vcmp.lt.s32.totalorder %v232, 0
      %v301 = vsub.s32 0, %v232
      %v302 = vsel %vm300, %v301, %v232
      %v303 = vshrl.u32 %v302, 4
      %v304 = vand.u32 %v302, 15
      %v305 = vsub.s32 0, %v304
      %v306 = vsel %vm300, %v305, %v304
      %vm307 = vcmp.lt.s32.totalorder %v233, 0
      %v308 = vsub.s32 0, %v233
      %v309 = vsel %vm307, %v308, %v233
      %v310 = vshrl.u32 %v309, 4
      %v311 = vand.u32 %v309, 15
      %v312 = vsub.s32 0, %v311
      %v313 = vsel %vm307, %v312, %v311
      %vm314 = vcmp.lt.s32.totalorder %v234, 0
      %v315 = vsub.s32 0, %v234
      %v316 = vsel %vm314, %v315, %v234
      %v317 = vshrl.u32 %v316, 4
      %v318 = vand.u32 %v316, 15
      %v319 = vsub.s32 0, %v318
      %v320 = vsel %vm314, %v319, %v318
      %vm321 = vcmp.lt.s32.totalorder %v235, 0
      %v322 = vsub.s32 0, %v235
      %v323 = vsel %vm321, %v322, %v235
      %v324 = vshrl.u32 %v323, 4
      %v325 = vand.u32 %v323, 15
      %v326 = vsub.s32 0, %v325
      %v327 = vsel %vm321, %v326, %v325
      %vm328 = vcmp.lt.s32.totalorder %v236, 0
      %v329 = vsub.s32 0, %v236
      %v330 = vsel %vm328, %v329, %v236
      %v331 = vshrl.u32 %v330, 4
      %v332 = vand.u32 %v330, 15
      %v333 = vsub.s32 0, %v332
      %v334 = vsel %vm328, %v333, %v332
      %vm335 = vcmp.lt.s32.totalorder %v237, 0
      %v336 = vsub.s32 0, %v237
      %v337 = vsel %vm335, %v336, %v237
      %v338 = vshrl.u32 %v337, 4
      %v339 = vand.u32 %v337, 15
      %v340 = vsub.s32 0, %v339
      %v341 = vsel %vm335, %v340, %v339
      %vm342 = vcmp.lt.s32.totalorder %v238, 0
      %v343 = vsub.s32 0, %v238
      %v344 = vsel %vm342, %v343, %v238
      %v345 = vshrl.u32 %v344, 4
      %v346 = vand.u32 %v344, 15
      %v347 = vsub.s32 0, %v346
      %v348 = vsel %vm342, %v347, %v346
      %vm349 = vcmp.lt.s32.totalorder %v239, 0
      %v350 = vsub.s32 0, %v239
      %v351 = vsel %vm349, %v350, %v239
      %v352 = vshrl.u32 %v351, 4
      %v353 = vand.u32 %v351, 15
      %v354 = vsub.s32 0, %v353
      %v355 = vsel %vm349, %v354, %v353
      %vm356 = vcmp.lt.s32.totalorder %v240, 0
      %v357 = vsub.s32 0, %v240
      %v358 = vsel %vm356, %v357, %v240
      %v359 = vshrl.u32 %v358, 4
      %v360 = vand.u32 %v358, 15
      %v361 = vsub.s32 0, %v360
      %v362 = vsel %vm356, %v361, %v360
      %vm363 = vcmp.lt.s32.totalorder %v241, 0
      %v364 = vsub.s32 0, %v241
      %v365 = vsel %vm363, %v364, %v241
      %v366 = vshrl.u32 %v365, 4
      %v367 = vand.u32 %v365, 15
      %v368 = vsub.s32 0, %v367
      %v369 = vsel %vm363, %v368, %v367
      %vm370 = vcmp.lt.s32.totalorder %v242, 0
      %v371 = vsub.s32 0, %v242
      %v372 = vsel %vm370, %v371, %v242
      %v373 = vshrl.u32 %v372, 4
      %v374 = vand.u32 %v372, 15
      %v375 = vsub.s32 0, %v374
      %v376 = vsel %vm370, %v375, %v374
      %vm377 = vcmp.lt.s32.totalorder %v243, 0
      %v378 = vsub.s32 0, %v243
      %v379 = vsel %vm377, %v378, %v243
      %v380 = vshrl.u32 %v379, 4
      %v381 = vand.u32 %v379, 15
      %v382 = vsub.s32 0, %v381
      %v383 = vsel %vm377, %v382, %v381
      %vm384 = vcmp.lt.s32.totalorder %v244, 0
      %v385 = vsub.s32 0, %v244
      %v386 = vsel %vm384, %v385, %v244
      %v387 = vshrl.u32 %v386, 4
      %v388 = vand.u32 %v386, 15
      %v389 = vsub.s32 0, %v388
      %v390 = vsel %vm384, %v389, %v388
      %vm391 = vcmp.lt.s32.totalorder %v245, 0
      %v392 = vsub.s32 0, %v245
      %v393 = vsel %vm391, %v392, %v245
      %v394 = vshrl.u32 %v393, 4
      %v395 = vand.u32 %v393, 15
      %v396 = vsub.s32 0, %v395
      %v397 = vsel %vm391, %v396, %v395
      %vm398 = vcmp.lt.s32.totalorder %v246, 0
      %v399 = vsub.s32 0, %v246
      %v400 = vsel %vm398, %v399, %v246
      %v401 = vshrl.u32 %v400, 4
      %v402 = vand.u32 %v400, 15
      %v403 = vsub.s32 0, %v402
      %v404 = vsel %vm398, %v403, %v402
      %vm405 = vcmp.lt.s32.totalorder %v247, 0
      %v406 = vsub.s32 0, %v247
      %v407 = vsel %vm405, %v406, %v247
      %v408 = vshrl.u32 %v407, 4
      %v409 = vand.u32 %v407, 15
      %v410 = vsub.s32 0, %v409
      %v411 = vsel %vm405, %v410, %v409
      %vm412 = vcmp.lt.s32.totalorder %v248, 0
      %v413 = vsub.s32 0, %v248
      %v414 = vsel %vm412, %v413, %v248
      %v415 = vshrl.u32 %v414, 4
      %v416 = vand.u32 %v414, 15
      %v417 = vsub.s32 0, %v416
      %v418 = vsel %vm412, %v417, %v416
      %vm419 = vcmp.lt.s32.totalorder %v249, 0
      %v420 = vsub.s32 0, %v249
      %v421 = vsel %vm419, %v420, %v249
      %v422 = vshrl.u32 %v421, 4
      %v423 = vand.u32 %v421, 15
      %v424 = vsub.s32 0, %v423
      %v425 = vsel %vm419, %v424, %v423
      %vm426 = vcmp.lt.s32.totalorder %v250, 0
      %v427 = vsub.s32 0, %v250
      %v428 = vsel %vm426, %v427, %v250
      %v429 = vshrl.u32 %v428, 4
      %v430 = vand.u32 %v428, 15
      %v431 = vsub.s32 0, %v430
      %v432 = vsel %vm426, %v431, %v430
      %vm433 = vcmp.lt.s32.totalorder %v251, 0
      %v434 = vsub.s32 0, %v251
      %v435 = vsel %vm433, %v434, %v251
      %v436 = vshrl.u32 %v435, 4
      %v437 = vand.u32 %v435, 15
      %v438 = vsub.s32 0, %v437
      %v439 = vsel %vm433, %v438, %v437
      %vm440 = vcmp.lt.s32.totalorder %v252, 0
      %v441 = vsub.s32 0, %v252
      %v442 = vsel %vm440, %v441, %v252
      %v443 = vshrl.u32 %v442, 4
      %v444 = vand.u32 %v442, 15
      %v445 = vsub.s32 0, %v444
      %v446 = vsel %vm440, %v445, %v444
      %vm447 = vcmp.lt.s32.totalorder %v253, 0
      %v448 = vsub.s32 0, %v253
      %v449 = vsel %vm447, %v448, %v253
      %v450 = vshrl.u32 %v449, 4
      %v451 = vand.u32 %v449, 15
      %v452 = vsub.s32 0, %v451
      %v453 = vsel %vm447, %v452, %v451
      %vm454 = vcmp.lt.s32.totalorder %v254, 0
      %v455 = vsub.s32 0, %v254
      %v456 = vsel %vm454, %v455, %v254
      %v457 = vshrl.u32 %v456, 4
      %v458 = vand.u32 %v456, 15
      %v459 = vsub.s32 0, %v458
      %v460 = vsel %vm454, %v459, %v458
      %vm461 = vcmp.lt.s32.totalorder %v255, 0
      %v462 = vsub.s32 0, %v255
      %v463 = vsel %vm461, %v462, %v255
      %v464 = vshrl.u32 %v463, 4
      %v465 = vand.u32 %v463, 15
      %v466 = vsub.s32 0, %v465
      %v467 = vsel %vm461, %v466, %v465
      %vm468 = vcmp.lt.s32.totalorder %v256, 0
      %v469 = vsub.s32 0, %v256
      %v470 = vsel %vm468, %v469, %v256
      %v471 = vshrl.u32 %v470, 4
      %v472 = vand.u32 %v470, 15
      %v473 = vsub.s32 0, %v472
      %v474 = vsel %vm468, %v473, %v472
      %vm475 = vcmp.lt.s32.totalorder %v257, 0
      %v476 = vsub.s32 0, %v257
      %v477 = vsel %vm475, %v476, %v257
      %v478 = vshrl.u32 %v477, 4
      %v479 = vand.u32 %v477, 15
      %v480 = vsub.s32 0, %v479
      %v481 = vsel %vm475, %v480, %v479
      %vm482 = vcmp.ne.s32.totalorder %v264, 0
      %vm483 = vcmp.ne.s32.totalorder %v271, 0
      %vm484 = vcmp.ne.s32.totalorder %v278, 0
      %vm485 = vcmp.ne.s32.totalorder %v285, 0
      %vm486 = vcmp.ne.s32.totalorder %v292, 0
      %vm487 = vcmp.ne.s32.totalorder %v299, 0
      %vm488 = vcmp.ne.s32.totalorder %v306, 0
      %vm489 = vcmp.ne.s32.totalorder %v313, 0
      %vm490 = vcmp.ne.s32.totalorder %v320, 0
      %vm491 = vcmp.ne.s32.totalorder %v327, 0
      %vm492 = vcmp.ne.s32.totalorder %v334, 0
      %vm493 = vcmp.ne.s32.totalorder %v341, 0
      %vm494 = vcmp.ne.s32.totalorder %v348, 0
      %vm495 = vcmp.ne.s32.totalorder %v355, 0
      %vm496 = vcmp.ne.s32.totalorder %v362, 0
      %vm497 = vcmp.ne.s32.totalorder %v369, 0
      %vm498 = vcmp.ne.s32.totalorder %v376, 0
      %vm499 = vcmp.ne.s32.totalorder %v383, 0
      %vm500 = vcmp.ne.s32.totalorder %v390, 0
      %vm501 = vcmp.ne.s32.totalorder %v397, 0
      %vm502 = vcmp.ne.s32.totalorder %v404, 0
      %vm503 = vcmp.ne.s32.totalorder %v411, 0
      %vm504 = vcmp.ne.s32.totalorder %v418, 0
      %vm505 = vcmp.ne.s32.totalorder %v425, 0
      %vm506 = vcmp.ne.s32.totalorder %v432, 0
      %vm507 = vcmp.ne.s32.totalorder %v439, 0
      %vm508 = vcmp.ne.s32.totalorder %v446, 0
      %vm509 = vcmp.ne.s32.totalorder %v453, 0
      %vm510 = vcmp.ne.s32.totalorder %v460, 0
      %vm511 = vcmp.ne.s32.totalorder %v467, 0
      %vm512 = vcmp.ne.s32.totalorder %v474, 0
      %vm513 = vcmp.ne.s32.totalorder %v481, 0
      %vm514 = vcmp.lt.s32.totalorder %v264, 0
      %vm515 = vcmp.lt.s32.totalorder %v271, 0
      %vm516 = vcmp.lt.s32.totalorder %v278, 0
      %vm517 = vcmp.lt.s32.totalorder %v285, 0
      %vm518 = vcmp.lt.s32.totalorder %v292, 0
      %vm519 = vcmp.lt.s32.totalorder %v299, 0
      %vm520 = vcmp.lt.s32.totalorder %v306, 0
      %vm521 = vcmp.lt.s32.totalorder %v313, 0
      %vm522 = vcmp.lt.s32.totalorder %v320, 0
      %vm523 = vcmp.lt.s32.totalorder %v327, 0
      %vm524 = vcmp.lt.s32.totalorder %v334, 0
      %vm525 = vcmp.lt.s32.totalorder %v341, 0
      %vm526 = vcmp.lt.s32.totalorder %v348, 0
      %vm527 = vcmp.lt.s32.totalorder %v355, 0
      %vm528 = vcmp.lt.s32.totalorder %v362, 0
      %vm529 = vcmp.lt.s32.totalorder %v369, 0
      %vm530 = vcmp.lt.s32.totalorder %v376, 0
      %vm531 = vcmp.lt.s32.totalorder %v383, 0
      %vm532 = vcmp.lt.s32.totalorder %v390, 0
      %vm533 = vcmp.lt.s32.totalorder %v397, 0
      %vm534 = vcmp.lt.s32.totalorder %v404, 0
      %vm535 = vcmp.lt.s32.totalorder %v411, 0
      %vm536 = vcmp.lt.s32.totalorder %v418, 0
      %vm537 = vcmp.lt.s32.totalorder %v425, 0
      %vm538 = vcmp.lt.s32.totalorder %v432, 0
      %vm539 = vcmp.lt.s32.totalorder %v439, 0
      %vm540 = vcmp.lt.s32.totalorder %v446, 0
      %vm541 = vcmp.lt.s32.totalorder %v453, 0
      %vm542 = vcmp.lt.s32.totalorder %v460, 0
      %vm543 = vcmp.lt.s32.totalorder %v467, 0
      %vm544 = vcmp.lt.s32.totalorder %v474, 0
      %vm545 = vcmp.lt.s32.totalorder %v481, 0
      %vm546 = vmand %vm514, %vm482
      %vm547 = vmand %vm515, %vm483
      %vm548 = vmand %vm516, %vm484
      %vm549 = vmand %vm517, %vm485
      %vm550 = vmand %vm518, %vm486
      %vm551 = vmand %vm519, %vm487
      %vm552 = vmand %vm520, %vm488
      %vm553 = vmand %vm521, %vm489
      %vm554 = vmand %vm522, %vm490
      %vm555 = vmand %vm523, %vm491
      %vm556 = vmand %vm524, %vm492
      %vm557 = vmand %vm525, %vm493
      %vm558 = vmand %vm526, %vm494
      %vm559 = vmand %vm527, %vm495
      %vm560 = vmand %vm528, %vm496
      %vm561 = vmand %vm529, %vm497
      %vm562 = vmand %vm530, %vm498
      %vm563 = vmand %vm531, %vm499
      %vm564 = vmand %vm532, %vm500
      %vm565 = vmand %vm533, %vm501
      %vm566 = vmand %vm534, %vm502
      %vm567 = vmand %vm535, %vm503
      %vm568 = vmand %vm536, %vm504
      %vm569 = vmand %vm537, %vm505
      %vm570 = vmand %vm538, %vm506
      %vm571 = vmand %vm539, %vm507
      %vm572 = vmand %vm540, %vm508
      %vm573 = vmand %vm541, %vm509
      %vm574 = vmand %vm542, %vm510
      %vm575 = vmand %vm543, %vm511
      %vm576 = vmand %vm544, %vm512
      %vm577 = vmand %vm545, %vm513
      %v578 = vadd.s32 %v264, 16
      %v579 = vadd.s32 %v271, 16
      %v580 = vadd.s32 %v278, 16
      %v581 = vadd.s32 %v285, 16
      %v582 = vadd.s32 %v292, 16
      %v583 = vadd.s32 %v299, 16
      %v584 = vadd.s32 %v306, 16
      %v585 = vadd.s32 %v313, 16
      %v586 = vadd.s32 %v320, 16
      %v587 = vadd.s32 %v327, 16
      %v588 = vadd.s32 %v334, 16
      %v589 = vadd.s32 %v341, 16
      %v590 = vadd.s32 %v348, 16
      %v591 = vadd.s32 %v355, 16
      %v592 = vadd.s32 %v362, 16
      %v593 = vadd.s32 %v369, 16
      %v594 = vadd.s32 %v376, 16
      %v595 = vadd.s32 %v383, 16
      %v596 = vadd.s32 %v390, 16
      %v597 = vadd.s32 %v397, 16
      %v598 = vadd.s32 %v404, 16
      %v599 = vadd.s32 %v411, 16
      %v600 = vadd.s32 %v418, 16
      %v601 = vadd.s32 %v425, 16
      %v602 = vadd.s32 %v432, 16
      %v603 = vadd.s32 %v439, 16
      %v604 = vadd.s32 %v446, 16
      %v605 = vadd.s32 %v453, 16
      %v606 = vadd.s32 %v460, 16
      %v607 = vadd.s32 %v467, 16
      %v608 = vadd.s32 %v474, 16
      %v609 = vadd.s32 %v481, 16
      %v610 = vsel %vm546, %v578, %v264
      %v611 = vsel %vm547, %v579, %v271
      %v612 = vsel %vm548, %v580, %v278
      %v613 = vsel %vm549, %v581, %v285
      %v614 = vsel %vm550, %v582, %v292
      %v615 = vsel %vm551, %v583, %v299
      %v616 = vsel %vm552, %v584, %v306
      %v617 = vsel %vm553, %v585, %v313
      %v618 = vsel %vm554, %v586, %v320
      %v619 = vsel %vm555, %v587, %v327
      %v620 = vsel %vm556, %v588, %v334
      %v621 = vsel %vm557, %v589, %v341
      %v622 = vsel %vm558, %v590, %v348
      %v623 = vsel %vm559, %v591, %v355
      %v624 = vsel %vm560, %v592, %v362
      %v625 = vsel %vm561, %v593, %v369
      %v626 = vsel %vm562, %v594, %v376
      %v627 = vsel %vm563, %v595, %v383
      %v628 = vsel %vm564, %v596, %v390
      %v629 = vsel %vm565, %v597, %v397
      %v630 = vsel %vm566, %v598, %v404
      %v631 = vsel %vm567, %v599, %v411
      %v632 = vsel %vm568, %v600, %v418
      %v633 = vsel %vm569, %v601, %v425
      %v634 = vsel %vm570, %v602, %v432
      %v635 = vsel %vm571, %v603, %v439
      %v636 = vsel %vm572, %v604, %v446
      %v637 = vsel %vm573, %v605, %v453
      %v638 = vsel %vm574, %v606, %v460
      %v639 = vsel %vm575, %v607, %v467
      %v640 = vsel %vm576, %v608, %v474
      %v641 = vsel %vm577, %v609, %v481
      %vm642 = vcmp.ge.s32.totalorder %v610, 1
      %vm643 = vcmp.ge.s32.totalorder %v611, 1
      %vm644 = vcmp.ge.s32.totalorder %v612, 1
      %vm645 = vcmp.ge.s32.totalorder %v613, 1
      %vm646 = vcmp.ge.s32.totalorder %v614, 1
      %vm647 = vcmp.ge.s32.totalorder %v615, 1
      %vm648 = vcmp.ge.s32.totalorder %v616, 1
      %vm649 = vcmp.ge.s32.totalorder %v617, 1
      %vm650 = vcmp.ge.s32.totalorder %v618, 1
      %vm651 = vcmp.ge.s32.totalorder %v619, 1
      %vm652 = vcmp.ge.s32.totalorder %v620, 1
      %vm653 = vcmp.ge.s32.totalorder %v621, 1
      %vm654 = vcmp.ge.s32.totalorder %v622, 1
      %vm655 = vcmp.ge.s32.totalorder %v623, 1
      %vm656 = vcmp.ge.s32.totalorder %v624, 1
      %vm657 = vcmp.ge.s32.totalorder %v625, 1
      %vm658 = vcmp.ge.s32.totalorder %v626, 1
      %vm659 = vcmp.ge.s32.totalorder %v627, 1
      %vm660 = vcmp.ge.s32.totalorder %v628, 1
      %vm661 = vcmp.ge.s32.totalorder %v629, 1
      %vm662 = vcmp.ge.s32.totalorder %v630, 1
      %vm663 = vcmp.ge.s32.totalorder %v631, 1
      %vm664 = vcmp.ge.s32.totalorder %v632, 1
      %vm665 = vcmp.ge.s32.totalorder %v633, 1
      %vm666 = vcmp.ge.s32.totalorder %v634, 1
      %vm667 = vcmp.ge.s32.totalorder %v635, 1
      %vm668 = vcmp.ge.s32.totalorder %v636, 1
      %vm669 = vcmp.ge.s32.totalorder %v637, 1
      %vm670 = vcmp.ge.s32.totalorder %v638, 1
      %vm671 = vcmp.ge.s32.totalorder %v639, 1
      %vm672 = vcmp.ge.s32.totalorder %v640, 1
      %vm673 = vcmp.ge.s32.totalorder %v641, 1
      %vm674 = vcmp.le.s32.totalorder %v610, 14
      %vm675 = vcmp.le.s32.totalorder %v611, 14
      %vm676 = vcmp.le.s32.totalorder %v612, 14
      %vm677 = vcmp.le.s32.totalorder %v613, 14
      %vm678 = vcmp.le.s32.totalorder %v614, 14
      %vm679 = vcmp.le.s32.totalorder %v615, 14
      %vm680 = vcmp.le.s32.totalorder %v616, 14
      %vm681 = vcmp.le.s32.totalorder %v617, 14
      %vm682 = vcmp.le.s32.totalorder %v618, 14
      %vm683 = vcmp.le.s32.totalorder %v619, 14
      %vm684 = vcmp.le.s32.totalorder %v620, 14
      %vm685 = vcmp.le.s32.totalorder %v621, 14
      %vm686 = vcmp.le.s32.totalorder %v622, 14
      %vm687 = vcmp.le.s32.totalorder %v623, 14
      %vm688 = vcmp.le.s32.totalorder %v624, 14
      %vm689 = vcmp.le.s32.totalorder %v625, 14
      %vm690 = vcmp.le.s32.totalorder %v626, 14
      %vm691 = vcmp.le.s32.totalorder %v627, 14
      %vm692 = vcmp.le.s32.totalorder %v628, 14
      %vm693 = vcmp.le.s32.totalorder %v629, 14
      %vm694 = vcmp.le.s32.totalorder %v630, 14
      %vm695 = vcmp.le.s32.totalorder %v631, 14
      %vm696 = vcmp.le.s32.totalorder %v632, 14
      %vm697 = vcmp.le.s32.totalorder %v633, 14
      %vm698 = vcmp.le.s32.totalorder %v634, 14
      %vm699 = vcmp.le.s32.totalorder %v635, 14
      %vm700 = vcmp.le.s32.totalorder %v636, 14
      %vm701 = vcmp.le.s32.totalorder %v637, 14
      %vm702 = vcmp.le.s32.totalorder %v638, 14
      %vm703 = vcmp.le.s32.totalorder %v639, 14
      %vm704 = vcmp.le.s32.totalorder %v640, 14
      %vm705 = vcmp.le.s32.totalorder %v641, 14
      %v706 = vld [vmem:[%s219] sm:$0xff]
      %v707 = vld [vmem:[%s219 + $0x8] sm:$0xff]
      %v708 = vld [vmem:[%s219 + $0x10] sm:$0xff]
      %v709 = vld [vmem:[%s219 + $0x18] sm:$0xff]
      %v710 = vld [vmem:[%s219 + $0x20] sm:$0xff]
      %v711 = vld [vmem:[%s219 + $0x28] sm:$0xff]
      %v712 = vld [vmem:[%s219 + $0x30] sm:$0xff]
      %v713 = vld [vmem:[%s219 + $0x38] sm:$0xff]
      %v714 = vld [vmem:[%s219 + $0x40] sm:$0xff]
      %v715 = vld [vmem:[%s219 + $0x48] sm:$0xff]
      %v716 = vld [vmem:[%s219 + $0x50] sm:$0xff]
      %v717 = vld [vmem:[%s219 + $0x58] sm:$0xff]
      %v718 = vld [vmem:[%s219 + $0x60] sm:$0xff]
      %v719 = vld [vmem:[%s219 + $0x68] sm:$0xff]
      %v720 = vld [vmem:[%s219 + $0x70] sm:$0xff]
      %v721 = vld [vmem:[%s219 + $0x78] sm:$0xff]
      %v722 = vld [vmem:[%s219 + $0x80] sm:$0xff]
      %v723 = vld [vmem:[%s219 + $0x88] sm:$0xff]
      %v724 = vld [vmem:[%s219 + $0x90] sm:$0xff]
      %v725 = vld [vmem:[%s219 + $0x98] sm:$0xff]
      %v726 = vld [vmem:[%s219 + $0xa0] sm:$0xff]
      %v727 = vld [vmem:[%s219 + $0xa8] sm:$0xff]
      %v728 = vld [vmem:[%s219 + $0xb0] sm:$0xff]
      %v729 = vld [vmem:[%s219 + $0xb8] sm:$0xff]
      %v730 = vld [vmem:[%s219 + $0xc0] sm:$0xff]
      %v731 = vld [vmem:[%s219 + $0xc8] sm:$0xff]
      %v732 = vld [vmem:[%s219 + $0xd0] sm:$0xff]
      %v733 = vld [vmem:[%s219 + $0xd8] sm:$0xff]
      %v734 = vld [vmem:[%s219 + $0xe0] sm:$0xff]
      %v735 = vld [vmem:[%s219 + $0xe8] sm:$0xff]
      %v736 = vld [vmem:[%s219 + $0xf0] sm:$0xff]
      %v737 = vld [vmem:[%s219 + $0xf8] sm:$0xff]
      %vm738 = vcmask 293888
      %739 = vst.msk [vmem:[#allocation2 + $0x18] sm:$0xff] %vm738, 0.0
      %740 = vst.msk [vmem:[#allocation2 + $0x20] sm:$0xff] %vm738, 0.0
      %vm741 = vcmask 286720
      %742 = vst.msk [vmem:[#allocation2 + $0x28] sm:$0x1] %vm741, 0.0
      %743 = vst.msk [vmem:[#allocation2 + $0x107] sm:$0xff] %vm738, 0.0
      %744 = vst.msk [vmem:[#allocation2 + $0x10f] sm:$0xff] %vm738, 0.0
      %745 = vst.msk [vmem:[#allocation2 + $0x117] sm:$0x1] %vm741, 0.0
      %v746 = vsel %vm642, 1, 0
      %v747 = vsel %vm643, 1, 0
      %v748 = vsel %vm644, 1, 0
      %v749 = vsel %vm645, 1, 0
      %v750 = vsel %vm646, 1, 0
      %v751 = vsel %vm647, 1, 0
      %v752 = vsel %vm648, 1, 0
      %v753 = vsel %vm649, 1, 0
      %v754 = vsel %vm650, 1, 0
      %v755 = vsel %vm651, 1, 0
      %v756 = vsel %vm652, 1, 0
      %v757 = vsel %vm653, 1, 0
      %v758 = vsel %vm654, 1, 0
      %v759 = vsel %vm655, 1, 0
      %v760 = vsel %vm656, 1, 0
      %v761 = vsel %vm657, 1, 0
      %v762 = vsel %vm658, 1, 0
      %v763 = vsel %vm659, 1, 0
      %v764 = vsel %vm660, 1, 0
      %v765 = vsel %vm661, 1, 0
      %v766 = vsel %vm662, 1, 0
      %v767 = vsel %vm663, 1, 0
      %v768 = vsel %vm664, 1, 0
      %v769 = vsel %vm665, 1, 0
      %v770 = vsel %vm666, 1, 0
      %v771 = vsel %vm667, 1, 0
      %v772 = vsel %vm668, 1, 0
      %v773 = vsel %vm669, 1, 0
      %v774 = vsel %vm670, 1, 0
      %v775 = vsel %vm671, 1, 0
      %v776 = vsel %vm672, 1, 0
      %v777 = vsel %vm673, 1, 0
      %vm778 = vcmp.eq.s32.totalorder %v746, 1
      %vm779 = vcmp.eq.s32.totalorder %v747, 1
      %vm780 = vcmp.eq.s32.totalorder %v748, 1
      %vm781 = vcmp.eq.s32.totalorder %v749, 1
      %vm782 = vcmp.eq.s32.totalorder %v750, 1
      %vm783 = vcmp.eq.s32.totalorder %v751, 1
      %vm784 = vcmp.eq.s32.totalorder %v752, 1
      %vm785 = vcmp.eq.s32.totalorder %v753, 1
      %vm786 = vcmp.eq.s32.totalorder %v754, 1
      %vm787 = vcmp.eq.s32.totalorder %v755, 1
      %vm788 = vcmp.eq.s32.totalorder %v756, 1
      %vm789 = vcmp.eq.s32.totalorder %v757, 1
      %vm790 = vcmp.eq.s32.totalorder %v758, 1
      %vm791 = vcmp.eq.s32.totalorder %v759, 1
      %vm792 = vcmp.eq.s32.totalorder %v760, 1
      %vm793 = vcmp.eq.s32.totalorder %v761, 1
      %vm794 = vcmp.eq.s32.totalorder %v762, 1
      %vm795 = vcmp.eq.s32.totalorder %v763, 1
      %vm796 = vcmp.eq.s32.totalorder %v764, 1
      %vm797 = vcmp.eq.s32.totalorder %v765, 1
      %vm798 = vcmp.eq.s32.totalorder %v766, 1
      %vm799 = vcmp.eq.s32.totalorder %v767, 1
      %vm800 = vcmp.eq.s32.totalorder %v768, 1
      %vm801 = vcmp.eq.s32.totalorder %v769, 1
      %vm802 = vcmp.eq.s32.totalorder %v770, 1
      %vm803 = vcmp.eq.s32.totalorder %v771, 1
      %vm804 = vcmp.eq.s32.totalorder %v772, 1
      %vm805 = vcmp.eq.s32.totalorder %v773, 1
      %vm806 = vcmp.eq.s32.totalorder %v774, 1
      %vm807 = vcmp.eq.s32.totalorder %v775, 1
      %vm808 = vcmp.eq.s32.totalorder %v776, 1
      %vm809 = vcmp.eq.s32.totalorder %v777, 1
      %v810 = vsel %vm778, %v706, 0.0
      %v811 = vsel %vm779, %v707, 0.0
      %v812 = vsel %vm780, %v708, 0.0
      %v813 = vsel %vm781, %v709, 0.0
      %v814 = vsel %vm782, %v710, 0.0
      %v815 = vsel %vm783, %v711, 0.0
      %v816 = vsel %vm784, %v712, 0.0
      %v817 = vsel %vm785, %v713, 0.0
      %v818 = vsel %vm786, %v714, 0.0
      %v819 = vsel %vm787, %v715, 0.0
      %v820 = vsel %vm788, %v716, 0.0
      %v821 = vsel %vm789, %v717, 0.0
      %v822 = vsel %vm790, %v718, 0.0
      %v823 = vsel %vm791, %v719, 0.0
      %v824 = vsel %vm792, %v720, 0.0
      %v825 = vsel %vm793, %v721, 0.0
      %v826 = vsel %vm794, %v722, 0.0
      %v827 = vsel %vm795, %v723, 0.0
      %v828 = vsel %vm796, %v724, 0.0
      %v829 = vsel %vm797, %v725, 0.0
      %v830 = vsel %vm798, %v726, 0.0
      %v831 = vsel %vm799, %v727, 0.0
      %v832 = vsel %vm800, %v728, 0.0
      %v833 = vsel %vm801, %v729, 0.0
      %v834 = vsel %vm802, %v730, 0.0
      %v835 = vsel %vm803, %v731, 0.0
      %v836 = vsel %vm804, %v732, 0.0
      %v837 = vsel %vm805, %v733, 0.0
      %v838 = vsel %vm806, %v734, 0.0
      %v839 = vsel %vm807, %v735, 0.0
      %v840 = vsel %vm808, %v736, 0.0
      %v841 = vsel %vm809, %v737, 0.0
      %v842 = vsel %vm674, 1, 0
      %v843 = vsel %vm675, 1, 0
      %v844 = vsel %vm676, 1, 0
      %v845 = vsel %vm677, 1, 0
      %v846 = vsel %vm678, 1, 0
      %v847 = vsel %vm679, 1, 0
      %v848 = vsel %vm680, 1, 0
      %v849 = vsel %vm681, 1, 0
      %v850 = vsel %vm682, 1, 0
      %v851 = vsel %vm683, 1, 0
      %v852 = vsel %vm684, 1, 0
      %v853 = vsel %vm685, 1, 0
      %v854 = vsel %vm686, 1, 0
      %v855 = vsel %vm687, 1, 0
      %v856 = vsel %vm688, 1, 0
      %v857 = vsel %vm689, 1, 0
      %v858 = vsel %vm690, 1, 0
      %v859 = vsel %vm691, 1, 0
      %v860 = vsel %vm692, 1, 0
      %v861 = vsel %vm693, 1, 0
      %v862 = vsel %vm694, 1, 0
      %v863 = vsel %vm695, 1, 0
      %v864 = vsel %vm696, 1, 0
      %v865 = vsel %vm697, 1, 0
      %v866 = vsel %vm698, 1, 0
      %v867 = vsel %vm699, 1, 0
      %v868 = vsel %vm700, 1, 0
      %v869 = vsel %vm701, 1, 0
      %v870 = vsel %vm702, 1, 0
      %v871 = vsel %vm703, 1, 0
      %v872 = vsel %vm704, 1, 0
      %v873 = vsel %vm705, 1, 0
      %vm874 = vcmp.eq.s32.totalorder %v842, 1
      %vm875 = vcmp.eq.s32.totalorder %v843, 1
      %vm876 = vcmp.eq.s32.totalorder %v844, 1
      %vm877 = vcmp.eq.s32.totalorder %v845, 1
      %vm878 = vcmp.eq.s32.totalorder %v846, 1
      %vm879 = vcmp.eq.s32.totalorder %v847, 1
      %vm880 = vcmp.eq.s32.totalorder %v848, 1
      %vm881 = vcmp.eq.s32.totalorder %v849, 1
      %vm882 = vcmp.eq.s32.totalorder %v850, 1
      %vm883 = vcmp.eq.s32.totalorder %v851, 1
      %vm884 = vcmp.eq.s32.totalorder %v852, 1
      %vm885 = vcmp.eq.s32.totalorder %v853, 1
      %vm886 = vcmp.eq.s32.totalorder %v854, 1
      %vm887 = vcmp.eq.s32.totalorder %v855, 1
      %vm888 = vcmp.eq.s32.totalorder %v856, 1
      %vm889 = vcmp.eq.s32.totalorder %v857, 1
      %vm890 = vcmp.eq.s32.totalorder %v858, 1
      %vm891 = vcmp.eq.s32.totalorder %v859, 1
      %vm892 = vcmp.eq.s32.totalorder %v860, 1
      %vm893 = vcmp.eq.s32.totalorder %v861, 1
      %vm894 = vcmp.eq.s32.totalorder %v862, 1
      %vm895 = vcmp.eq.s32.totalorder %v863, 1
      %vm896 = vcmp.eq.s32.totalorder %v864, 1
      %vm897 = vcmp.eq.s32.totalorder %v865, 1
      %vm898 = vcmp.eq.s32.totalorder %v866, 1
      %vm899 = vcmp.eq.s32.totalorder %v867, 1
      %vm900 = vcmp.eq.s32.totalorder %v868, 1
      %vm901 = vcmp.eq.s32.totalorder %v869, 1
      %vm902 = vcmp.eq.s32.totalorder %v870, 1
      %vm903 = vcmp.eq.s32.totalorder %v871, 1
      %vm904 = vcmp.eq.s32.totalorder %v872, 1
      %vm905 = vcmp.eq.s32.totalorder %v873, 1
      %v906 = vsel %vm874, %v706, 0.0
      %v907 = vsel %vm875, %v707, 0.0
      %v908 = vsel %vm876, %v708, 0.0
      %v909 = vsel %vm877, %v709, 0.0
      %v910 = vsel %vm878, %v710, 0.0
      %v911 = vsel %vm879, %v711, 0.0
      %v912 = vsel %vm880, %v712, 0.0
      %v913 = vsel %vm881, %v713, 0.0
      %v914 = vsel %vm882, %v714, 0.0
      %v915 = vsel %vm883, %v715, 0.0
      %v916 = vsel %vm884, %v716, 0.0
      %v917 = vsel %vm885, %v717, 0.0
      %v918 = vsel %vm886, %v718, 0.0
      %v919 = vsel %vm887, %v719, 0.0
      %v920 = vsel %vm888, %v720, 0.0
      %v921 = vsel %vm889, %v721, 0.0
      %v922 = vsel %vm890, %v722, 0.0
      %v923 = vsel %vm891, %v723, 0.0
      %v924 = vsel %vm892, %v724, 0.0
      %v925 = vsel %vm893, %v725, 0.0
      %v926 = vsel %vm894, %v726, 0.0
      %v927 = vsel %vm895, %v727, 0.0
      %v928 = vsel %vm896, %v728, 0.0
      %v929 = vsel %vm897, %v729, 0.0
      %v930 = vsel %vm898, %v730, 0.0
      %v931 = vsel %vm899, %v731, 0.0
      %v932 = vsel %vm900, %v732, 0.0
      %v933 = vsel %vm901, %v733, 0.0
      %v934 = vsel %vm902, %v734, 0.0
      %v935 = vsel %vm903, %v735, 0.0
      %v936 = vsel %vm904, %v736, 0.0
      %v937 = vsel %vm905, %v737, 0.0
      %vm938 = vcmask 31744
      %939 = vst.msk [vmem:[#allocation2 + $0x29] sm:$0xff] %vm938, %v906
      %940 = vst.msk [vmem:[#allocation2 + $0x31] sm:$0xff] %vm938, %v907
      %941 = vst.msk [vmem:[#allocation2 + $0x39] sm:$0xff] %vm938, %v908
      %942 = vst.msk [vmem:[#allocation2 + $0x41] sm:$0xff] %vm938, %v909
      %943 = vst.msk [vmem:[#allocation2 + $0x49] sm:$0xff] %vm938, %v910
      %944 = vst.msk [vmem:[#allocation2 + $0x51] sm:$0xff] %vm938, %v911
      %945 = vst.msk [vmem:[#allocation2 + $0x59] sm:$0xff] %vm938, %v912
      %946 = vst.msk [vmem:[#allocation2 + $0x61] sm:$0xff] %vm938, %v913
      %947 = vst.msk [vmem:[#allocation2 + $0x69] sm:$0xff] %vm938, %v914
      %948 = vst.msk [vmem:[#allocation2 + $0x71] sm:$0xff] %vm938, %v915
      %949 = vst.msk [vmem:[#allocation2 + $0x79] sm:$0xff] %vm938, %v916
      %950 = vst.msk [vmem:[#allocation2 + $0x81] sm:$0xff] %vm938, %v917
      %951 = vst.msk [vmem:[#allocation2 + $0x89] sm:$0xff] %vm938, %v918
      %952 = vst.msk [vmem:[#allocation2 + $0x91] sm:$0xff] %vm938, %v919
      %953 = vst.msk [vmem:[#allocation2 + $0x99] sm:$0xff] %vm938, %v920
      %954 = vst.msk [vmem:[#allocation2 + $0xa1] sm:$0xff] %vm938, %v921
      %955 = vst.msk [vmem:[#allocation2 + $0xa9] sm:$0xff] %vm938, %v922
      %956 = vst.msk [vmem:[#allocation2 + $0xb1] sm:$0xff] %vm938, %v923
      %957 = vst.msk [vmem:[#allocation2 + $0xb9] sm:$0xff] %vm938, %v924
      %958 = vst.msk [vmem:[#allocation2 + $0xc1] sm:$0xff] %vm938, %v925
      %959 = vst.msk [vmem:[#allocation2 + $0xc9] sm:$0xff] %vm938, %v926
      %960 = vst.msk [vmem:[#allocation2 + $0xd1] sm:$0xff] %vm938, %v927
      %961 = vst.msk [vmem:[#allocation2 + $0xd9] sm:$0xff] %vm938, %v928
      %962 = vst.msk [vmem:[#allocation2 + $0xe1] sm:$0xff] %vm938, %v929
      %963 = vst.msk [vmem:[#allocation2 + $0xe9] sm:$0xff] %vm938, %v930
      %964 = vst.msk [vmem:[#allocation2 + $0xf1] sm:$0xff] %vm938, %v931
      %965 = vst.msk [vmem:[#allocation2 + $0xf9] sm:$0xff] %vm938, %v932
      %966 = vst.msk [vmem:[#allocation2 + $0x101] sm:$0xff] %vm938, %v933
      %967 = vst.msk [vmem:[#allocation2 + $0x109] sm:$0xff] %vm938, %v934
      %968 = vst.msk [vmem:[#allocation2 + $0x111] sm:$0xff] %vm938, %v935
      %969 = vst.msk [vmem:[#allocation2 + $0x119] sm:$0xff] %vm938, %v936
      %970 = vst.msk [vmem:[#allocation2 + $0x121] sm:$0xff] %vm938, %v937
      %1003 = vrot.lane.b32.xlu0 %v706, 4
      %v1004 = vpop.permute.xlu0 %1003
      %1005 = vrot.lane.b32.xlu0 %v707, 4
      %v1006 = vpop.permute.xlu0 %1005
      %1007 = vrot.lane.b32.xlu0 %v708, 4
      %v1008 = vpop.permute.xlu0 %1007
      %1009 = vrot.lane.b32.xlu0 %v709, 4
      %v1010 = vpop.permute.xlu0 %1009
      %1011 = vrot.lane.b32.xlu0 %v710, 4
      %v1012 = vpop.permute.xlu0 %1011
      %1013 = vrot.lane.b32.xlu0 %v711, 4
      %v1014 = vpop.permute.xlu0 %1013
      %1015 = vrot.lane.b32.xlu0 %v712, 4
      %v1016 = vpop.permute.xlu0 %1015
      %1017 = vrot.lane.b32.xlu0 %v713, 4
      %v1018 = vpop.permute.xlu0 %1017
      %1019 = vrot.lane.b32.xlu0 %v714, 4
      %v1020 = vpop.permute.xlu0 %1019
      %1021 = vrot.lane.b32.xlu0 %v715, 4
      %v1022 = vpop.permute.xlu0 %1021
      %1023 = vrot.lane.b32.xlu0 %v716, 4
      %v1024 = vpop.permute.xlu0 %1023
      %1025 = vrot.lane.b32.xlu0 %v717, 4
      %v1026 = vpop.permute.xlu0 %1025
      %1027 = vrot.lane.b32.xlu0 %v718, 4
      %v1028 = vpop.permute.xlu0 %1027
      %1029 = vrot.lane.b32.xlu0 %v719, 4
      %v1030 = vpop.permute.xlu0 %1029
      %1031 = vrot.lane.b32.xlu0 %v720, 4
      %v1032 = vpop.permute.xlu0 %1031
      %1033 = vrot.lane.b32.xlu0 %v721, 4
      %v1034 = vpop.permute.xlu0 %1033
      %1035 = vrot.lane.b32.xlu0 %v722, 4
      %v1036 = vpop.permute.xlu0 %1035
      %1037 = vrot.lane.b32.xlu0 %v723, 4
      %v1038 = vpop.permute.xlu0 %1037
      %1039 = vrot.lane.b32.xlu0 %v724, 4
      %v1040 = vpop.permute.xlu0 %1039
      %1041 = vrot.lane.b32.xlu0 %v725, 4
      %v1042 = vpop.permute.xlu0 %1041
      %1043 = vrot.lane.b32.xlu0 %v726, 4
      %v1044 = vpop.permute.xlu0 %1043
      %1045 = vrot.lane.b32.xlu0 %v727, 4
      %v1046 = vpop.permute.xlu0 %1045
      %1047 = vrot.lane.b32.xlu0 %v728, 4
      %v1048 = vpop.permute.xlu0 %1047
      %1049 = vrot.lane.b32.xlu0 %v729, 4
      %v1050 = vpop.permute.xlu0 %1049
      %1051 = vrot.lane.b32.xlu0 %v730, 4
      %v1052 = vpop.permute.xlu0 %1051
      %1053 = vrot.lane.b32.xlu0 %v731, 4
      %v1054 = vpop.permute.xlu0 %1053
      %1055 = vrot.lane.b32.xlu0 %v732, 4
      %v1056 = vpop.permute.xlu0 %1055
      %1057 = vrot.lane.b32.xlu0 %v733, 4
      %v1058 = vpop.permute.xlu0 %1057
      %1059 = vrot.lane.b32.xlu0 %v734, 4
      %v1060 = vpop.permute.xlu0 %1059
      %1061 = vrot.lane.b32.xlu0 %v735, 4
      %v1062 = vpop.permute.xlu0 %1061
      %1063 = vrot.lane.b32.xlu0 %v736, 4
      %v1064 = vpop.permute.xlu0 %1063
      %1065 = vrot.lane.b32.xlu0 %v737, 4
      %v1066 = vpop.permute.xlu0 %1065
      %vm1099 = vcmask 64544
      %1100 = vst.msk [vmem:[#allocation2 + $0x28] sm:$0xff] %vm1099, %v1004
      %1101 = vst.msk [vmem:[#allocation2 + $0x30] sm:$0xff] %vm1099, %v1006
      %1102 = vst.msk [vmem:[#allocation2 + $0x38] sm:$0xff] %vm1099, %v1008
      %1103 = vst.msk [vmem:[#allocation2 + $0x40] sm:$0xff] %vm1099, %v1010
      %1104 = vst.msk [vmem:[#allocation2 + $0x48] sm:$0xff] %vm1099, %v1012
      %1105 = vst.msk [vmem:[#allocation2 + $0x50] sm:$0xff] %vm1099, %v1014
      %1106 = vst.msk [vmem:[#allocation2 + $0x58] sm:$0xff] %vm1099, %v1016
      %1107 = vst.msk [vmem:[#allocation2 + $0x60] sm:$0xff] %vm1099, %v1018
      %1108 = vst.msk [vmem:[#allocation2 + $0x68] sm:$0xff] %vm1099, %v1020
      %1109 = vst.msk [vmem:[#allocation2 + $0x70] sm:$0xff] %vm1099, %v1022
      %1110 = vst.msk [vmem:[#allocation2 + $0x78] sm:$0xff] %vm1099, %v1024
      %1111 = vst.msk [vmem:[#allocation2 + $0x80] sm:$0xff] %vm1099, %v1026
      %1112 = vst.msk [vmem:[#allocation2 + $0x88] sm:$0xff] %vm1099, %v1028
      %1113 = vst.msk [vmem:[#allocation2 + $0x90] sm:$0xff] %vm1099, %v1030
      %1114 = vst.msk [vmem:[#allocation2 + $0x98] sm:$0xff] %vm1099, %v1032
      %1115 = vst.msk [vmem:[#allocation2 + $0xa0] sm:$0xff] %vm1099, %v1034
      %1116 = vst.msk [vmem:[#allocation2 + $0xa8] sm:$0xff] %vm1099, %v1036
      %1117 = vst.msk [vmem:[#allocation2 + $0xb0] sm:$0xff] %vm1099, %v1038
      %1118 = vst.msk [vmem:[#allocation2 + $0xb8] sm:$0xff] %vm1099, %v1040
      %1119 = vst.msk [vmem:[#allocation2 + $0xc0] sm:$0xff] %vm1099, %v1042
      %1120 = vst.msk [vmem:[#allocation2 + $0xc8] sm:$0xff] %vm1099, %v1044
      %1121 = vst.msk [vmem:[#allocation2 + $0xd0] sm:$0xff] %vm1099, %v1046
      %1122 = vst.msk [vmem:[#allocation2 + $0xd8] sm:$0xff] %vm1099, %v1048
      %1123 = vst.msk [vmem:[#allocation2 + $0xe0] sm:$0xff] %vm1099, %v1050
      %1124 = vst.msk [vmem:[#allocation2 + $0xe8] sm:$0xff] %vm1099, %v1052
      %1125 = vst.msk [vmem:[#allocation2 + $0xf0] sm:$0xff] %vm1099, %v1054
      %1126 = vst.msk [vmem:[#allocation2 + $0xf8] sm:$0xff] %vm1099, %v1056
      %1127 = vst.msk [vmem:[#allocation2 + $0x100] sm:$0xff] %vm1099, %v1058
      %1128 = vst.msk [vmem:[#allocation2 + $0x108] sm:$0xff] %vm1099, %v1060
      %1129 = vst.msk [vmem:[#allocation2 + $0x110] sm:$0xff] %vm1099, %v1062
      %1130 = vst.msk [vmem:[#allocation2 + $0x118] sm:$0xff] %vm1099, %v1064
      %1131 = vst.msk [vmem:[#allocation2 + $0x120] sm:$0xff] %vm1099, %v1066
      %1164 = vrot.lane.b32.xlu0 %v810, 8
      %v1165 = vpop.permute.xlu0 %1164
      %1166 = vrot.lane.b32.xlu0 %v811, 8
      %v1167 = vpop.permute.xlu0 %1166
      %1168 = vrot.lane.b32.xlu0 %v812, 8
      %v1169 = vpop.permute.xlu0 %1168
      %1170 = vrot.lane.b32.xlu0 %v813, 8
      %v1171 = vpop.permute.xlu0 %1170
      %1172 = vrot.lane.b32.xlu0 %v814, 8
      %v1173 = vpop.permute.xlu0 %1172
      %1174 = vrot.lane.b32.xlu0 %v815, 8
      %v1175 = vpop.permute.xlu0 %1174
      %1176 = vrot.lane.b32.xlu0 %v816, 8
      %v1177 = vpop.permute.xlu0 %1176
      %1178 = vrot.lane.b32.xlu0 %v817, 8
      %v1179 = vpop.permute.xlu0 %1178
      %1180 = vrot.lane.b32.xlu0 %v818, 8
      %v1181 = vpop.permute.xlu0 %1180
      %1182 = vrot.lane.b32.xlu0 %v819, 8
      %v1183 = vpop.permute.xlu0 %1182
      %1184 = vrot.lane.b32.xlu0 %v820, 8
      %v1185 = vpop.permute.xlu0 %1184
      %1186 = vrot.lane.b32.xlu0 %v821, 8
      %v1187 = vpop.permute.xlu0 %1186
      %1188 = vrot.lane.b32.xlu0 %v822, 8
      %v1189 = vpop.permute.xlu0 %1188
      %1190 = vrot.lane.b32.xlu0 %v823, 8
      %v1191 = vpop.permute.xlu0 %1190
      %1192 = vrot.lane.b32.xlu0 %v824, 8
      %v1193 = vpop.permute.xlu0 %1192
      %1194 = vrot.lane.b32.xlu0 %v825, 8
      %v1195 = vpop.permute.xlu0 %1194
      %1196 = vrot.lane.b32.xlu0 %v826, 8
      %v1197 = vpop.permute.xlu0 %1196
      %1198 = vrot.lane.b32.xlu0 %v827, 8
      %v1199 = vpop.permute.xlu0 %1198
      %1200 = vrot.lane.b32.xlu0 %v828, 8
      %v1201 = vpop.permute.xlu0 %1200
      %1202 = vrot.lane.b32.xlu0 %v829, 8
      %v1203 = vpop.permute.xlu0 %1202
      %1204 = vrot.lane.b32.xlu0 %v830, 8
      %v1205 = vpop.permute.xlu0 %1204
      %1206 = vrot.lane.b32.xlu0 %v831, 8
      %v1207 = vpop.permute.xlu0 %1206
      %1208 = vrot.lane.b32.xlu0 %v832, 8
      %v1209 = vpop.permute.xlu0 %1208
      %1210 = vrot.lane.b32.xlu0 %v833, 8
      %v1211 = vpop.permute.xlu0 %1210
      %1212 = vrot.lane.b32.xlu0 %v834, 8
      %v1213 = vpop.permute.xlu0 %1212
      %1214 = vrot.lane.b32.xlu0 %v835, 8
      %v1215 = vpop.permute.xlu0 %1214
      %1216 = vrot.lane.b32.xlu0 %v836, 8
      %v1217 = vpop.permute.xlu0 %1216
      %1218 = vrot.lane.b32.xlu0 %v837, 8
      %v1219 = vpop.permute.xlu0 %1218
      %1220 = vrot.lane.b32.xlu0 %v838, 8
      %v1221 = vpop.permute.xlu0 %1220
      %1222 = vrot.lane.b32.xlu0 %v839, 8
      %v1223 = vpop.permute.xlu0 %1222
      %1224 = vrot.lane.b32.xlu0 %v840, 8
      %v1225 = vpop.permute.xlu0 %1224
      %1226 = vrot.lane.b32.xlu0 %v841, 8
      %v1227 = vpop.permute.xlu0 %1226
      %vm1260 = vcmask 97344
      %1261 = vst.msk [vmem:[#allocation2 + $0x27] sm:$0xff] %vm1260, %v1165
      %1262 = vst.msk [vmem:[#allocation2 + $0x2f] sm:$0xff] %vm1260, %v1167
      %1263 = vst.msk [vmem:[#allocation2 + $0x37] sm:$0xff] %vm1260, %v1169
      %1264 = vst.msk [vmem:[#allocation2 + $0x3f] sm:$0xff] %vm1260, %v1171
      %1265 = vst.msk [vmem:[#allocation2 + $0x47] sm:$0xff] %vm1260, %v1173
      %1266 = vst.msk [vmem:[#allocation2 + $0x4f] sm:$0xff] %vm1260, %v1175
      %1267 = vst.msk [vmem:[#allocation2 + $0x57] sm:$0xff] %vm1260, %v1177
      %1268 = vst.msk [vmem:[#allocation2 + $0x5f] sm:$0xff] %vm1260, %v1179
      %1269 = vst.msk [vmem:[#allocation2 + $0x67] sm:$0xff] %vm1260, %v1181
      %1270 = vst.msk [vmem:[#allocation2 + $0x6f] sm:$0xff] %vm1260, %v1183
      %1271 = vst.msk [vmem:[#allocation2 + $0x77] sm:$0xff] %vm1260, %v1185
      %1272 = vst.msk [vmem:[#allocation2 + $0x7f] sm:$0xff] %vm1260, %v1187
      %1273 = vst.msk [vmem:[#allocation2 + $0x87] sm:$0xff] %vm1260, %v1189
      %1274 = vst.msk [vmem:[#allocation2 + $0x8f] sm:$0xff] %vm1260, %v1191
      %1275 = vst.msk [vmem:[#allocation2 + $0x97] sm:$0xff] %vm1260, %v1193
      %1276 = vst.msk [vmem:[#allocation2 + $0x9f] sm:$0xff] %vm1260, %v1195
      %1277 = vst.msk [vmem:[#allocation2 + $0xa7] sm:$0xff] %vm1260, %v1197
      %1278 = vst.msk [vmem:[#allocation2 + $0xaf] sm:$0xff] %vm1260, %v1199
      %1279 = vst.msk [vmem:[#allocation2 + $0xb7] sm:$0xff] %vm1260, %v1201
      %1280 = vst.msk [vmem:[#allocation2 + $0xbf] sm:$0xff] %vm1260, %v1203
      %1281 = vst.msk [vmem:[#allocation2 + $0xc7] sm:$0xff] %vm1260, %v1205
      %1282 = vst.msk [vmem:[#allocation2 + $0xcf] sm:$0xff] %vm1260, %v1207
      %1283 = vst.msk [vmem:[#allocation2 + $0xd7] sm:$0xff] %vm1260, %v1209
      %1284 = vst.msk [vmem:[#allocation2 + $0xdf] sm:$0xff] %vm1260, %v1211
      %1285 = vst.msk [vmem:[#allocation2 + $0xe7] sm:$0xff] %vm1260, %v1213
      %1286 = vst.msk [vmem:[#allocation2 + $0xef] sm:$0xff] %vm1260, %v1215
      %1287 = vst.msk [vmem:[#allocation2 + $0xf7] sm:$0xff] %vm1260, %v1217
      %1288 = vst.msk [vmem:[#allocation2 + $0xff] sm:$0xff] %vm1260, %v1219
      %1289 = vst.msk [vmem:[#allocation2 + $0x107] sm:$0xff] %vm1260, %v1221
      %1290 = vst.msk [vmem:[#allocation2 + $0x10f] sm:$0xff] %vm1260, %v1223
      %1291 = vst.msk [vmem:[#allocation2 + $0x117] sm:$0xff] %vm1260, %v1225
      %1292 = vst.msk [vmem:[#allocation2 + $0x11f] sm:$0xff] %vm1260, %v1227
      %1325 = vrot.lane.b32.xlu0 %v906, 12
      %v1326 = vpop.permute.xlu0 %1325
      %1327 = vrot.lane.b32.xlu0 %v907, 12
      %v1328 = vpop.permute.xlu0 %1327
      %1329 = vrot.lane.b32.xlu0 %v908, 12
      %v1330 = vpop.permute.xlu0 %1329
      %1331 = vrot.lane.b32.xlu0 %v909, 12
      %v1332 = vpop.permute.xlu0 %1331
      %1333 = vrot.lane.b32.xlu0 %v910, 12
      %v1334 = vpop.permute.xlu0 %1333
      %1335 = vrot.lane.b32.xlu0 %v911, 12
      %v1336 = vpop.permute.xlu0 %1335
      %1337 = vrot.lane.b32.xlu0 %v912, 12
      %v1338 = vpop.permute.xlu0 %1337
      %1339 = vrot.lane.b32.xlu0 %v913, 12
      %v1340 = vpop.permute.xlu0 %1339
      %1341 = vrot.lane.b32.xlu0 %v914, 12
      %v1342 = vpop.permute.xlu0 %1341
      %1343 = vrot.lane.b32.xlu0 %v915, 12
      %v1344 = vpop.permute.xlu0 %1343
      %1345 = vrot.lane.b32.xlu0 %v916, 12
      %v1346 = vpop.permute.xlu0 %1345
      %1347 = vrot.lane.b32.xlu0 %v917, 12
      %v1348 = vpop.permute.xlu0 %1347
      %1349 = vrot.lane.b32.xlu0 %v918, 12
      %v1350 = vpop.permute.xlu0 %1349
      %1351 = vrot.lane.b32.xlu0 %v919, 12
      %v1352 = vpop.permute.xlu0 %1351
      %1353 = vrot.lane.b32.xlu0 %v920, 12
      %v1354 = vpop.permute.xlu0 %1353
      %1355 = vrot.lane.b32.xlu0 %v921, 12
      %v1356 = vpop.permute.xlu0 %1355
      %1357 = vrot.lane.b32.xlu0 %v922, 12
      %v1358 = vpop.permute.xlu0 %1357
      %1359 = vrot.lane.b32.xlu0 %v923, 12
      %v1360 = vpop.permute.xlu0 %1359
      %1361 = vrot.lane.b32.xlu0 %v924, 12
      %v1362 = vpop.permute.xlu0 %1361
      %1363 = vrot.lane.b32.xlu0 %v925, 12
      %v1364 = vpop.permute.xlu0 %1363
      %1365 = vrot.lane.b32.xlu0 %v926, 12
      %v1366 = vpop.permute.xlu0 %1365
      %1367 = vrot.lane.b32.xlu0 %v927, 12
      %v1368 = vpop.permute.xlu0 %1367
      %1369 = vrot.lane.b32.xlu0 %v928, 12
      %v1370 = vpop.permute.xlu0 %1369
      %1371 = vrot.lane.b32.xlu0 %v929, 12
      %v1372 = vpop.permute.xlu0 %1371
      %1373 = vrot.lane.b32.xlu0 %v930, 12
      %v1374 = vpop.permute.xlu0 %1373
      %1375 = vrot.lane.b32.xlu0 %v931, 12
      %v1376 = vpop.permute.xlu0 %1375
      %1377 = vrot.lane.b32.xlu0 %v932, 12
      %v1378 = vpop.permute.xlu0 %1377
      %1379 = vrot.lane.b32.xlu0 %v933, 12
      %v1380 = vpop.permute.xlu0 %1379
      %1381 = vrot.lane.b32.xlu0 %v934, 12
      %v1382 = vpop.permute.xlu0 %1381
      %1383 = vrot.lane.b32.xlu0 %v935, 12
      %v1384 = vpop.permute.xlu0 %1383
      %1385 = vrot.lane.b32.xlu0 %v936, 12
      %v1386 = vpop.permute.xlu0 %1385
      %1387 = vrot.lane.b32.xlu0 %v937, 12
      %v1388 = vpop.permute.xlu0 %1387
      %vm1421 = vcmask 130144
      %1422 = vst.msk [vmem:[#allocation2 + $0x19] sm:$0xff] %vm1421, %v1326
      %1423 = vst.msk [vmem:[#allocation2 + $0x21] sm:$0xff] %vm1421, %v1328
      %1424 = vst.msk [vmem:[#allocation2 + $0x29] sm:$0xff] %vm1421, %v1330
      %1425 = vst.msk [vmem:[#allocation2 + $0x31] sm:$0xff] %vm1421, %v1332
      %1426 = vst.msk [vmem:[#allocation2 + $0x39] sm:$0xff] %vm1421, %v1334
      %1427 = vst.msk [vmem:[#allocation2 + $0x41] sm:$0xff] %vm1421, %v1336
      %1428 = vst.msk [vmem:[#allocation2 + $0x49] sm:$0xff] %vm1421, %v1338
      %1429 = vst.msk [vmem:[#allocation2 + $0x51] sm:$0xff] %vm1421, %v1340
      %1430 = vst.msk [vmem:[#allocation2 + $0x59] sm:$0xff] %vm1421, %v1342
      %1431 = vst.msk [vmem:[#allocation2 + $0x61] sm:$0xff] %vm1421, %v1344
      %1432 = vst.msk [vmem:[#allocation2 + $0x69] sm:$0xff] %vm1421, %v1346
      %1433 = vst.msk [vmem:[#allocation2 + $0x71] sm:$0xff] %vm1421, %v1348
      %1434 = vst.msk [vmem:[#allocation2 + $0x79] sm:$0xff] %vm1421, %v1350
      %1435 = vst.msk [vmem:[#allocation2 + $0x81] sm:$0xff] %vm1421, %v1352
      %1436 = vst.msk [vmem:[#allocation2 + $0x89] sm:$0xff] %vm1421, %v1354
      %1437 = vst.msk [vmem:[#allocation2 + $0x91] sm:$0xff] %vm1421, %v1356
      %1438 = vst.msk [vmem:[#allocation2 + $0x99] sm:$0xff] %vm1421, %v1358
      %1439 = vst.msk [vmem:[#allocation2 + $0xa1] sm:$0xff] %vm1421, %v1360
      %1440 = vst.msk [vmem:[#allocation2 + $0xa9] sm:$0xff] %vm1421, %v1362
      %1441 = vst.msk [vmem:[#allocation2 + $0xb1] sm:$0xff] %vm1421, %v1364
      %1442 = vst.msk [vmem:[#allocation2 + $0xb9] sm:$0xff] %vm1421, %v1366
      %1443 = vst.msk [vmem:[#allocation2 + $0xc1] sm:$0xff] %vm1421, %v1368
      %1444 = vst.msk [vmem:[#allocation2 + $0xc9] sm:$0xff] %vm1421, %v1370
      %1445 = vst.msk [vmem:[#allocation2 + $0xd1] sm:$0xff] %vm1421, %v1372
      %1446 = vst.msk [vmem:[#allocation2 + $0xd9] sm:$0xff] %vm1421, %v1374
      %1447 = vst.msk [vmem:[#allocation2 + $0xe1] sm:$0xff] %vm1421, %v1376
      %1448 = vst.msk [vmem:[#allocation2 + $0xe9] sm:$0xff] %vm1421, %v1378
      %1449 = vst.msk [vmem:[#allocation2 + $0xf1] sm:$0xff] %vm1421, %v1380
      %1450 = vst.msk [vmem:[#allocation2 + $0xf9] sm:$0xff] %vm1421, %v1382
      %1451 = vst.msk [vmem:[#allocation2 + $0x101] sm:$0xff] %vm1421, %v1384
      %1452 = vst.msk [vmem:[#allocation2 + $0x109] sm:$0xff] %vm1421, %v1386
      %1453 = vst.msk [vmem:[#allocation2 + $0x111] sm:$0xff] %vm1421, %v1388
      %1454 = vrot.lane.b32.xlu0 %v706, 16
      %v1455 = vpop.permute.xlu0 %1454
      %1456 = vrot.lane.b32.xlu0 %v707, 16
      %v1457 = vpop.permute.xlu0 %1456
      %1458 = vrot.lane.b32.xlu0 %v708, 16
      %v1459 = vpop.permute.xlu0 %1458
      %1460 = vrot.lane.b32.xlu0 %v709, 16
      %v1461 = vpop.permute.xlu0 %1460
      %1462 = vrot.lane.b32.xlu0 %v710, 16
      %v1463 = vpop.permute.xlu0 %1462
      %1464 = vrot.lane.b32.xlu0 %v711, 16
      %v1465 = vpop.permute.xlu0 %1464
      %1466 = vrot.lane.b32.xlu0 %v712, 16
      %v1467 = vpop.permute.xlu0 %1466
      %1468 = vrot.lane.b32.xlu0 %v713, 16
      %v1469 = vpop.permute.xlu0 %1468
      %1470 = vrot.lane.b32.xlu0 %v714, 16
      %v1471 = vpop.permute.xlu0 %1470
      %1472 = vrot.lane.b32.xlu0 %v715, 16
      %v1473 = vpop.permute.xlu0 %1472
      %1474 = vrot.lane.b32.xlu0 %v716, 16
      %v1475 = vpop.permute.xlu0 %1474
      %1476 = vrot.lane.b32.xlu0 %v717, 16
      %v1477 = vpop.permute.xlu0 %1476
      %1478 = vrot.lane.b32.xlu0 %v718, 16
      %v1479 = vpop.permute.xlu0 %1478
      %1480 = vrot.lane.b32.xlu0 %v719, 16
      %v1481 = vpop.permute.xlu0 %1480
      %1482 = vrot.lane.b32.xlu0 %v720, 16
      %v1483 = vpop.permute.xlu0 %1482
      %1484 = vrot.lane.b32.xlu0 %v721, 16
      %v1485 = vpop.permute.xlu0 %1484
      %1486 = vrot.lane.b32.xlu0 %v722, 16
      %v1487 = vpop.permute.xlu0 %1486
      %1488 = vrot.lane.b32.xlu0 %v723, 16
      %v1489 = vpop.permute.xlu0 %1488
      %1490 = vrot.lane.b32.xlu0 %v724, 16
      %v1491 = vpop.permute.xlu0 %1490
      %1492 = vrot.lane.b32.xlu0 %v725, 16
      %v1493 = vpop.permute.xlu0 %1492
      %1494 = vrot.lane.b32.xlu0 %v726, 16
      %v1495 = vpop.permute.xlu0 %1494
      %1496 = vrot.lane.b32.xlu0 %v727, 16
      %v1497 = vpop.permute.xlu0 %1496
      %1498 = vrot.lane.b32.xlu0 %v728, 16
      %v1499 = vpop.permute.xlu0 %1498
      %1500 = vrot.lane.b32.xlu0 %v729, 16
      %v1501 = vpop.permute.xlu0 %1500
      %1502 = vrot.lane.b32.xlu0 %v730, 16
      %v1503 = vpop.permute.xlu0 %1502
      %1504 = vrot.lane.b32.xlu0 %v731, 16
      %v1505 = vpop.permute.xlu0 %1504
      %1506 = vrot.lane.b32.xlu0 %v732, 16
      %v1507 = vpop.permute.xlu0 %1506
      %1508 = vrot.lane.b32.xlu0 %v733, 16
      %v1509 = vpop.permute.xlu0 %1508
      %1510 = vrot.lane.b32.xlu0 %v734, 16
      %v1511 = vpop.permute.xlu0 %1510
      %1512 = vrot.lane.b32.xlu0 %v735, 16
      %v1513 = vpop.permute.xlu0 %1512
      %1514 = vrot.lane.b32.xlu0 %v736, 16
      %v1515 = vpop.permute.xlu0 %1514
      %1516 = vrot.lane.b32.xlu0 %v737, 16
      %v1517 = vpop.permute.xlu0 %1516
      %vm1550 = vcmask 162944
      %1551 = vst.msk [vmem:[#allocation2 + $0x18] sm:$0xff] %vm1550, %v1455
      %1552 = vst.msk [vmem:[#allocation2 + $0x20] sm:$0xff] %vm1550, %v1457
      %1553 = vst.msk [vmem:[#allocation2 + $0x28] sm:$0xff] %vm1550, %v1459
      %1554 = vst.msk [vmem:[#allocation2 + $0x30] sm:$0xff] %vm1550, %v1461
      %1555 = vst.msk [vmem:[#allocation2 + $0x38] sm:$0xff] %vm1550, %v1463
      %1556 = vst.msk [vmem:[#allocation2 + $0x40] sm:$0xff] %vm1550, %v1465
      %1557 = vst.msk [vmem:[#allocation2 + $0x48] sm:$0xff] %vm1550, %v1467
      %1558 = vst.msk [vmem:[#allocation2 + $0x50] sm:$0xff] %vm1550, %v1469
      %1559 = vst.msk [vmem:[#allocation2 + $0x58] sm:$0xff] %vm1550, %v1471
      %1560 = vst.msk [vmem:[#allocation2 + $0x60] sm:$0xff] %vm1550, %v1473
      %1561 = vst.msk [vmem:[#allocation2 + $0x68] sm:$0xff] %vm1550, %v1475
      %1562 = vst.msk [vmem:[#allocation2 + $0x70] sm:$0xff] %vm1550, %v1477
      %1563 = vst.msk [vmem:[#allocation2 + $0x78] sm:$0xff] %vm1550, %v1479
      %1564 = vst.msk [vmem:[#allocation2 + $0x80] sm:$0xff] %vm1550, %v1481
      %1565 = vst.msk [vmem:[#allocation2 + $0x88] sm:$0xff] %vm1550, %v1483
      %1566 = vst.msk [vmem:[#allocation2 + $0x90] sm:$0xff] %vm1550, %v1485
      %1567 = vst.msk [vmem:[#allocation2 + $0x98] sm:$0xff] %vm1550, %v1487
      %1568 = vst.msk [vmem:[#allocation2 + $0xa0] sm:$0xff] %vm1550, %v1489
      %1569 = vst.msk [vmem:[#allocation2 + $0xa8] sm:$0xff] %vm1550, %v1491
      %1570 = vst.msk [vmem:[#allocation2 + $0xb0] sm:$0xff] %vm1550, %v1493
      %1571 = vst.msk [vmem:[#allocation2 + $0xb8] sm:$0xff] %vm1550, %v1495
      %1572 = vst.msk [vmem:[#allocation2 + $0xc0] sm:$0xff] %vm1550, %v1497
      %1573 = vst.msk [vmem:[#allocation2 + $0xc8] sm:$0xff] %vm1550, %v1499
      %1574 = vst.msk [vmem:[#allocation2 + $0xd0] sm:$0xff] %vm1550, %v1501
      %1575 = vst.msk [vmem:[#allocation2 + $0xd8] sm:$0xff] %vm1550, %v1503
      %1576 = vst.msk [vmem:[#allocation2 + $0xe0] sm:$0xff] %vm1550, %v1505
      %1577 = vst.msk [vmem:[#allocation2 + $0xe8] sm:$0xff] %vm1550, %v1507
      %1578 = vst.msk [vmem:[#allocation2 + $0xf0] sm:$0xff] %vm1550, %v1509
      %1579 = vst.msk [vmem:[#allocation2 + $0xf8] sm:$0xff] %vm1550, %v1511
      %1580 = vst.msk [vmem:[#allocation2 + $0x100] sm:$0xff] %vm1550, %v1513
      %1581 = vst.msk [vmem:[#allocation2 + $0x108] sm:$0xff] %vm1550, %v1515
      %1582 = vst.msk [vmem:[#allocation2 + $0x110] sm:$0xff] %vm1550, %v1517
      %1583 = vrot.lane.b32.xlu0 %v810, 20
      %v1584 = vpop.permute.xlu0 %1583
      %1585 = vrot.lane.b32.xlu0 %v811, 20
      %v1586 = vpop.permute.xlu0 %1585
      %1587 = vrot.lane.b32.xlu0 %v812, 20
      %v1588 = vpop.permute.xlu0 %1587
      %1589 = vrot.lane.b32.xlu0 %v813, 20
      %v1590 = vpop.permute.xlu0 %1589
      %1591 = vrot.lane.b32.xlu0 %v814, 20
      %v1592 = vpop.permute.xlu0 %1591
      %1593 = vrot.lane.b32.xlu0 %v815, 20
      %v1594 = vpop.permute.xlu0 %1593
      %1595 = vrot.lane.b32.xlu0 %v816, 20
      %v1596 = vpop.permute.xlu0 %1595
      %1597 = vrot.lane.b32.xlu0 %v817, 20
      %v1598 = vpop.permute.xlu0 %1597
      %1599 = vrot.lane.b32.xlu0 %v818, 20
      %v1600 = vpop.permute.xlu0 %1599
      %1601 = vrot.lane.b32.xlu0 %v819, 20
      %v1602 = vpop.permute.xlu0 %1601
      %1603 = vrot.lane.b32.xlu0 %v820, 20
      %v1604 = vpop.permute.xlu0 %1603
      %1605 = vrot.lane.b32.xlu0 %v821, 20
      %v1606 = vpop.permute.xlu0 %1605
      %1607 = vrot.lane.b32.xlu0 %v822, 20
      %v1608 = vpop.permute.xlu0 %1607
      %1609 = vrot.lane.b32.xlu0 %v823, 20
      %v1610 = vpop.permute.xlu0 %1609
      %1611 = vrot.lane.b32.xlu0 %v824, 20
      %v1612 = vpop.permute.xlu0 %1611
      %1613 = vrot.lane.b32.xlu0 %v825, 20
      %v1614 = vpop.permute.xlu0 %1613
      %1615 = vrot.lane.b32.xlu0 %v826, 20
      %v1616 = vpop.permute.xlu0 %1615
      %1617 = vrot.lane.b32.xlu0 %v827, 20
      %v1618 = vpop.permute.xlu0 %1617
      %1619 = vrot.lane.b32.xlu0 %v828, 20
      %v1620 = vpop.permute.xlu0 %1619
      %1621 = vrot.lane.b32.xlu0 %v829, 20
      %v1622 = vpop.permute.xlu0 %1621
      %1623 = vrot.lane.b32.xlu0 %v830, 20
      %v1624 = vpop.permute.xlu0 %1623
      %1625 = vrot.lane.b32.xlu0 %v831, 20
      %v1626 = vpop.permute.xlu0 %1625
      %1627 = vrot.lane.b32.xlu0 %v832, 20
      %v1628 = vpop.permute.xlu0 %1627
      %1629 = vrot.lane.b32.xlu0 %v833, 20
      %v1630 = vpop.permute.xlu0 %1629
      %1631 = vrot.lane.b32.xlu0 %v834, 20
      %v1632 = vpop.permute.xlu0 %1631
      %1633 = vrot.lane.b32.xlu0 %v835, 20
      %v1634 = vpop.permute.xlu0 %1633
      %1635 = vrot.lane.b32.xlu0 %v836, 20
      %v1636 = vpop.permute.xlu0 %1635
      %1637 = vrot.lane.b32.xlu0 %v837, 20
      %v1638 = vpop.permute.xlu0 %1637
      %1639 = vrot.lane.b32.xlu0 %v838, 20
      %v1640 = vpop.permute.xlu0 %1639
      %1641 = vrot.lane.b32.xlu0 %v839, 20
      %v1642 = vpop.permute.xlu0 %1641
      %1643 = vrot.lane.b32.xlu0 %v840, 20
      %v1644 = vpop.permute.xlu0 %1643
      %1645 = vrot.lane.b32.xlu0 %v841, 20
      %v1646 = vpop.permute.xlu0 %1645
      %vm1679 = vcmask 195744
      %1680 = vst.msk [vmem:[#allocation2 + $0x17] sm:$0xff] %vm1679, %v1584
      %1681 = vst.msk [vmem:[#allocation2 + $0x1f] sm:$0xff] %vm1679, %v1586
      %1682 = vst.msk [vmem:[#allocation2 + $0x27] sm:$0xff] %vm1679, %v1588
      %1683 = vst.msk [vmem:[#allocation2 + $0x2f] sm:$0xff] %vm1679, %v1590
      %1684 = vst.msk [vmem:[#allocation2 + $0x37] sm:$0xff] %vm1679, %v1592
      %1685 = vst.msk [vmem:[#allocation2 + $0x3f] sm:$0xff] %vm1679, %v1594
      %1686 = vst.msk [vmem:[#allocation2 + $0x47] sm:$0xff] %vm1679, %v1596
      %1687 = vst.msk [vmem:[#allocation2 + $0x4f] sm:$0xff] %vm1679, %v1598
      %1688 = vst.msk [vmem:[#allocation2 + $0x57] sm:$0xff] %vm1679, %v1600
      %1689 = vst.msk [vmem:[#allocation2 + $0x5f] sm:$0xff] %vm1679, %v1602
      %1690 = vst.msk [vmem:[#allocation2 + $0x67] sm:$0xff] %vm1679, %v1604
      %1691 = vst.msk [vmem:[#allocation2 + $0x6f] sm:$0xff] %vm1679, %v1606
      %1692 = vst.msk [vmem:[#allocation2 + $0x77] sm:$0xff] %vm1679, %v1608
      %1693 = vst.msk [vmem:[#allocation2 + $0x7f] sm:$0xff] %vm1679, %v1610
      %1694 = vst.msk [vmem:[#allocation2 + $0x87] sm:$0xff] %vm1679, %v1612
      %1695 = vst.msk [vmem:[#allocation2 + $0x8f] sm:$0xff] %vm1679, %v1614
      %1696 = vst.msk [vmem:[#allocation2 + $0x97] sm:$0xff] %vm1679, %v1616
      %1697 = vst.msk [vmem:[#allocation2 + $0x9f] sm:$0xff] %vm1679, %v1618
      %1698 = vst.msk [vmem:[#allocation2 + $0xa7] sm:$0xff] %vm1679, %v1620
      %1699 = vst.msk [vmem:[#allocation2 + $0xaf] sm:$0xff] %vm1679, %v1622
      %1700 = vst.msk [vmem:[#allocation2 + $0xb7] sm:$0xff] %vm1679, %v1624
      %1701 = vst.msk [vmem:[#allocation2 + $0xbf] sm:$0xff] %vm1679, %v1626
      %1702 = vst.msk [vmem:[#allocation2 + $0xc7] sm:$0xff] %vm1679, %v1628
      %1703 = vst.msk [vmem:[#allocation2 + $0xcf] sm:$0xff] %vm1679, %v1630
      %1704 = vst.msk [vmem:[#allocation2 + $0xd7] sm:$0xff] %vm1679, %v1632
      %1705 = vst.msk [vmem:[#allocation2 + $0xdf] sm:$0xff] %vm1679, %v1634
      %1706 = vst.msk [vmem:[#allocation2 + $0xe7] sm:$0xff] %vm1679, %v1636
      %1707 = vst.msk [vmem:[#allocation2 + $0xef] sm:$0xff] %vm1679, %v1638
      %1708 = vst.msk [vmem:[#allocation2 + $0xf7] sm:$0xff] %vm1679, %v1640
      %1709 = vst.msk [vmem:[#allocation2 + $0xff] sm:$0xff] %vm1679, %v1642
      %1710 = vst.msk [vmem:[#allocation2 + $0x107] sm:$0xff] %vm1679, %v1644
      %1711 = vst.msk [vmem:[#allocation2 + $0x10f] sm:$0xff] %vm1679, %v1646
      %1712 = vrot.lane.b32.xlu0 %v906, 24
      %v1713 = vpop.permute.xlu0 %1712
      %1714 = vrot.lane.b32.xlu0 %v907, 24
      %v1715 = vpop.permute.xlu0 %1714
      %1716 = vrot.lane.b32.xlu0 %v908, 24
      %v1717 = vpop.permute.xlu0 %1716
      %1718 = vrot.lane.b32.xlu0 %v909, 24
      %v1719 = vpop.permute.xlu0 %1718
      %1720 = vrot.lane.b32.xlu0 %v910, 24
      %v1721 = vpop.permute.xlu0 %1720
      %1722 = vrot.lane.b32.xlu0 %v911, 24
      %v1723 = vpop.permute.xlu0 %1722
      %1724 = vrot.lane.b32.xlu0 %v912, 24
      %v1725 = vpop.permute.xlu0 %1724
      %1726 = vrot.lane.b32.xlu0 %v913, 24
      %v1727 = vpop.permute.xlu0 %1726
      %1728 = vrot.lane.b32.xlu0 %v914, 24
      %v1729 = vpop.permute.xlu0 %1728
      %1730 = vrot.lane.b32.xlu0 %v915, 24
      %v1731 = vpop.permute.xlu0 %1730
      %1732 = vrot.lane.b32.xlu0 %v916, 24
      %v1733 = vpop.permute.xlu0 %1732
      %1734 = vrot.lane.b32.xlu0 %v917, 24
      %v1735 = vpop.permute.xlu0 %1734
      %1736 = vrot.lane.b32.xlu0 %v918, 24
      %v1737 = vpop.permute.xlu0 %1736
      %1738 = vrot.lane.b32.xlu0 %v919, 24
      %v1739 = vpop.permute.xlu0 %1738
      %1740 = vrot.lane.b32.xlu0 %v920, 24
      %v1741 = vpop.permute.xlu0 %1740
      %1742 = vrot.lane.b32.xlu0 %v921, 24
      %v1743 = vpop.permute.xlu0 %1742
      %1744 = vrot.lane.b32.xlu0 %v922, 24
      %v1745 = vpop.permute.xlu0 %1744
      %1746 = vrot.lane.b32.xlu0 %v923, 24
      %v1747 = vpop.permute.xlu0 %1746
      %1748 = vrot.lane.b32.xlu0 %v924, 24
      %v1749 = vpop.permute.xlu0 %1748
      %1750 = vrot.lane.b32.xlu0 %v925, 24
      %v1751 = vpop.permute.xlu0 %1750
      %1752 = vrot.lane.b32.xlu0 %v926, 24
      %v1753 = vpop.permute.xlu0 %1752
      %1754 = vrot.lane.b32.xlu0 %v927, 24
      %v1755 = vpop.permute.xlu0 %1754
      %1756 = vrot.lane.b32.xlu0 %v928, 24
      %v1757 = vpop.permute.xlu0 %1756
      %1758 = vrot.lane.b32.xlu0 %v929, 24
      %v1759 = vpop.permute.xlu0 %1758
      %1760 = vrot.lane.b32.xlu0 %v930, 24
      %v1761 = vpop.permute.xlu0 %1760
      %1762 = vrot.lane.b32.xlu0 %v931, 24
      %v1763 = vpop.permute.xlu0 %1762
      %1764 = vrot.lane.b32.xlu0 %v932, 24
      %v1765 = vpop.permute.xlu0 %1764
      %1766 = vrot.lane.b32.xlu0 %v933, 24
      %v1767 = vpop.permute.xlu0 %1766
      %1768 = vrot.lane.b32.xlu0 %v934, 24
      %v1769 = vpop.permute.xlu0 %1768
      %1770 = vrot.lane.b32.xlu0 %v935, 24
      %v1771 = vpop.permute.xlu0 %1770
      %1772 = vrot.lane.b32.xlu0 %v936, 24
      %v1773 = vpop.permute.xlu0 %1772
      %1774 = vrot.lane.b32.xlu0 %v937, 24
      %v1775 = vpop.permute.xlu0 %1774
      %vm1808 = vcmask 228544
      %1809 = vst.msk [vmem:[#allocation2 + $0x9] sm:$0xff] %vm1808, %v1713
      %1810 = vst.msk [vmem:[#allocation2 + $0x11] sm:$0xff] %vm1808, %v1715
      %1811 = vst.msk [vmem:[#allocation2 + $0x19] sm:$0xff] %vm1808, %v1717
      %1812 = vst.msk [vmem:[#allocation2 + $0x21] sm:$0xff] %vm1808, %v1719
      %1813 = vst.msk [vmem:[#allocation2 + $0x29] sm:$0xff] %vm1808, %v1721
      %1814 = vst.msk [vmem:[#allocation2 + $0x31] sm:$0xff] %vm1808, %v1723
      %1815 = vst.msk [vmem:[#allocation2 + $0x39] sm:$0xff] %vm1808, %v1725
      %1816 = vst.msk [vmem:[#allocation2 + $0x41] sm:$0xff] %vm1808, %v1727
      %1817 = vst.msk [vmem:[#allocation2 + $0x49] sm:$0xff] %vm1808, %v1729
      %1818 = vst.msk [vmem:[#allocation2 + $0x51] sm:$0xff] %vm1808, %v1731
      %1819 = vst.msk [vmem:[#allocation2 + $0x59] sm:$0xff] %vm1808, %v1733
      %1820 = vst.msk [vmem:[#allocation2 + $0x61] sm:$0xff] %vm1808, %v1735
      %1821 = vst.msk [vmem:[#allocation2 + $0x69] sm:$0xff] %vm1808, %v1737
      %1822 = vst.msk [vmem:[#allocation2 + $0x71] sm:$0xff] %vm1808, %v1739
      %1823 = vst.msk [vmem:[#allocation2 + $0x79] sm:$0xff] %vm1808, %v1741
      %1824 = vst.msk [vmem:[#allocation2 + $0x81] sm:$0xff] %vm1808, %v1743
      %1825 = vst.msk [vmem:[#allocation2 + $0x89] sm:$0xff] %vm1808, %v1745
      %1826 = vst.msk [vmem:[#allocation2 + $0x91] sm:$0xff] %vm1808, %v1747
      %1827 = vst.msk [vmem:[#allocation2 + $0x99] sm:$0xff] %vm1808, %v1749
      %1828 = vst.msk [vmem:[#allocation2 + $0xa1] sm:$0xff] %vm1808, %v1751
      %1829 = vst.msk [vmem:[#allocation2 + $0xa9] sm:$0xff] %vm1808, %v1753
      %1830 = vst.msk [vmem:[#allocation2 + $0xb1] sm:$0xff] %vm1808, %v1755
      %1831 = vst.msk [vmem:[#allocation2 + $0xb9] sm:$0xff] %vm1808, %v1757
      %1832 = vst.msk [vmem:[#allocation2 + $0xc1] sm:$0xff] %vm1808, %v1759
      %1833 = vst.msk [vmem:[#allocation2 + $0xc9] sm:$0xff] %vm1808, %v1761
      %1834 = vst.msk [vmem:[#allocation2 + $0xd1] sm:$0xff] %vm1808, %v1763
      %1835 = vst.msk [vmem:[#allocation2 + $0xd9] sm:$0xff] %vm1808, %v1765
      %1836 = vst.msk [vmem:[#allocation2 + $0xe1] sm:$0xff] %vm1808, %v1767
      %1837 = vst.msk [vmem:[#allocation2 + $0xe9] sm:$0xff] %vm1808, %v1769
      %1838 = vst.msk [vmem:[#allocation2 + $0xf1] sm:$0xff] %vm1808, %v1771
      %1839 = vst.msk [vmem:[#allocation2 + $0xf9] sm:$0xff] %vm1808, %v1773
      %1840 = vst.msk [vmem:[#allocation2 + $0x101] sm:$0xff] %vm1808, %v1775
      %1841 = vrot.lane.b32.xlu0 %v706, 28
      %v1842 = vpop.permute.xlu0 %1841
      %1843 = vrot.lane.b32.xlu0 %v707, 28
      %v1844 = vpop.permute.xlu0 %1843
      %1845 = vrot.lane.b32.xlu0 %v708, 28
      %v1846 = vpop.permute.xlu0 %1845
      %1847 = vrot.lane.b32.xlu0 %v709, 28
      %v1848 = vpop.permute.xlu0 %1847
      %1849 = vrot.lane.b32.xlu0 %v710, 28
      %v1850 = vpop.permute.xlu0 %1849
      %1851 = vrot.lane.b32.xlu0 %v711, 28
      %v1852 = vpop.permute.xlu0 %1851
      %1853 = vrot.lane.b32.xlu0 %v712, 28
      %v1854 = vpop.permute.xlu0 %1853
      %1855 = vrot.lane.b32.xlu0 %v713, 28
      %v1856 = vpop.permute.xlu0 %1855
      %1857 = vrot.lane.b32.xlu0 %v714, 28
      %v1858 = vpop.permute.xlu0 %1857
      %1859 = vrot.lane.b32.xlu0 %v715, 28
      %v1860 = vpop.permute.xlu0 %1859
      %1861 = vrot.lane.b32.xlu0 %v716, 28
      %v1862 = vpop.permute.xlu0 %1861
      %1863 = vrot.lane.b32.xlu0 %v717, 28
      %v1864 = vpop.permute.xlu0 %1863
      %1865 = vrot.lane.b32.xlu0 %v718, 28
      %v1866 = vpop.permute.xlu0 %1865
      %1867 = vrot.lane.b32.xlu0 %v719, 28
      %v1868 = vpop.permute.xlu0 %1867
      %1869 = vrot.lane.b32.xlu0 %v720, 28
      %v1870 = vpop.permute.xlu0 %1869
      %1871 = vrot.lane.b32.xlu0 %v721, 28
      %v1872 = vpop.permute.xlu0 %1871
      %1873 = vrot.lane.b32.xlu0 %v722, 28
      %v1874 = vpop.permute.xlu0 %1873
      %1875 = vrot.lane.b32.xlu0 %v723, 28
      %v1876 = vpop.permute.xlu0 %1875
      %1877 = vrot.lane.b32.xlu0 %v724, 28
      %v1878 = vpop.permute.xlu0 %1877
      %1879 = vrot.lane.b32.xlu0 %v725, 28
      %v1880 = vpop.permute.xlu0 %1879
      %1881 = vrot.lane.b32.xlu0 %v726, 28
      %v1882 = vpop.permute.xlu0 %1881
      %1883 = vrot.lane.b32.xlu0 %v727, 28
      %v1884 = vpop.permute.xlu0 %1883
      %1885 = vrot.lane.b32.xlu0 %v728, 28
      %v1886 = vpop.permute.xlu0 %1885
      %1887 = vrot.lane.b32.xlu0 %v729, 28
      %v1888 = vpop.permute.xlu0 %1887
      %1889 = vrot.lane.b32.xlu0 %v730, 28
      %v1890 = vpop.permute.xlu0 %1889
      %1891 = vrot.lane.b32.xlu0 %v731, 28
      %v1892 = vpop.permute.xlu0 %1891
      %1893 = vrot.lane.b32.xlu0 %v732, 28
      %v1894 = vpop.permute.xlu0 %1893
      %1895 = vrot.lane.b32.xlu0 %v733, 28
      %v1896 = vpop.permute.xlu0 %1895
      %1897 = vrot.lane.b32.xlu0 %v734, 28
      %v1898 = vpop.permute.xlu0 %1897
      %1899 = vrot.lane.b32.xlu0 %v735, 28
      %v1900 = vpop.permute.xlu0 %1899
      %1901 = vrot.lane.b32.xlu0 %v736, 28
      %v1902 = vpop.permute.xlu0 %1901
      %1903 = vrot.lane.b32.xlu0 %v737, 28
      %v1904 = vpop.permute.xlu0 %1903
      %vm1937 = vcmask 261344
      %1938 = vst.msk [vmem:[#allocation2 + $0x8] sm:$0xff] %vm1937, %v1842
      %1939 = vst.msk [vmem:[#allocation2 + $0x10] sm:$0xff] %vm1937, %v1844
      %1940 = vst.msk [vmem:[#allocation2 + $0x18] sm:$0xff] %vm1937, %v1846
      %1941 = vst.msk [vmem:[#allocation2 + $0x20] sm:$0xff] %vm1937, %v1848
      %1942 = vst.msk [vmem:[#allocation2 + $0x28] sm:$0xff] %vm1937, %v1850
      %1943 = vst.msk [vmem:[#allocation2 + $0x30] sm:$0xff] %vm1937, %v1852
      %1944 = vst.msk [vmem:[#allocation2 + $0x38] sm:$0xff] %vm1937, %v1854
      %1945 = vst.msk [vmem:[#allocation2 + $0x40] sm:$0xff] %vm1937, %v1856
      %1946 = vst.msk [vmem:[#allocation2 + $0x48] sm:$0xff] %vm1937, %v1858
      %1947 = vst.msk [vmem:[#allocation2 + $0x50] sm:$0xff] %vm1937, %v1860
      %1948 = vst.msk [vmem:[#allocation2 + $0x58] sm:$0xff] %vm1937, %v1862
      %1949 = vst.msk [vmem:[#allocation2 + $0x60] sm:$0xff] %vm1937, %v1864
      %1950 = vst.msk [vmem:[#allocation2 + $0x68] sm:$0xff] %vm1937, %v1866
      %1951 = vst.msk [vmem:[#allocation2 + $0x70] sm:$0xff] %vm1937, %v1868
      %1952 = vst.msk [vmem:[#allocation2 + $0x78] sm:$0xff] %vm1937, %v1870
      %1953 = vst.msk [vmem:[#allocation2 + $0x80] sm:$0xff] %vm1937, %v1872
      %1954 = vst.msk [vmem:[#allocation2 + $0x88] sm:$0xff] %vm1937, %v1874
      %1955 = vst.msk [vmem:[#allocation2 + $0x90] sm:$0xff] %vm1937, %v1876
      %1956 = vst.msk [vmem:[#allocation2 + $0x98] sm:$0xff] %vm1937, %v1878
      %1957 = vst.msk [vmem:[#allocation2 + $0xa0] sm:$0xff] %vm1937, %v1880
      %1958 = vst.msk [vmem:[#allocation2 + $0xa8] sm:$0xff] %vm1937, %v1882
      %1959 = vst.msk [vmem:[#allocation2 + $0xb0] sm:$0xff] %vm1937, %v1884
      %1960 = vst.msk [vmem:[#allocation2 + $0xb8] sm:$0xff] %vm1937, %v1886
      %1961 = vst.msk [vmem:[#allocation2 + $0xc0] sm:$0xff] %vm1937, %v1888
      %1962 = vst.msk [vmem:[#allocation2 + $0xc8] sm:$0xff] %vm1937, %v1890
      %1963 = vst.msk [vmem:[#allocation2 + $0xd0] sm:$0xff] %vm1937, %v1892
      %1964 = vst.msk [vmem:[#allocation2 + $0xd8] sm:$0xff] %vm1937, %v1894
      %1965 = vst.msk [vmem:[#allocation2 + $0xe0] sm:$0xff] %vm1937, %v1896
      %1966 = vst.msk [vmem:[#allocation2 + $0xe8] sm:$0xff] %vm1937, %v1898
      %1967 = vst.msk [vmem:[#allocation2 + $0xf0] sm:$0xff] %vm1937, %v1900
      %1968 = vst.msk [vmem:[#allocation2 + $0xf8] sm:$0xff] %vm1937, %v1902
      %1969 = vst.msk [vmem:[#allocation2 + $0x100] sm:$0xff] %vm1937, %v1904
      %1970 = vrot.lane.b32.xlu0 %v810, 32
      %v1971 = vpop.permute.xlu0 %1970
      %1972 = vrot.lane.b32.xlu0 %v811, 32
      %v1973 = vpop.permute.xlu0 %1972
      %1974 = vrot.lane.b32.xlu0 %v812, 32
      %v1975 = vpop.permute.xlu0 %1974
      %1976 = vrot.lane.b32.xlu0 %v813, 32
      %v1977 = vpop.permute.xlu0 %1976
      %1978 = vrot.lane.b32.xlu0 %v814, 32
      %v1979 = vpop.permute.xlu0 %1978
      %1980 = vrot.lane.b32.xlu0 %v815, 32
      %v1981 = vpop.permute.xlu0 %1980
      %1982 = vrot.lane.b32.xlu0 %v816, 32
      %v1983 = vpop.permute.xlu0 %1982
      %1984 = vrot.lane.b32.xlu0 %v817, 32
      %v1985 = vpop.permute.xlu0 %1984
      %1986 = vrot.lane.b32.xlu0 %v818, 32
      %v1987 = vpop.permute.xlu0 %1986
      %1988 = vrot.lane.b32.xlu0 %v819, 32
      %v1989 = vpop.permute.xlu0 %1988
      %1990 = vrot.lane.b32.xlu0 %v820, 32
      %v1991 = vpop.permute.xlu0 %1990
      %1992 = vrot.lane.b32.xlu0 %v821, 32
      %v1993 = vpop.permute.xlu0 %1992
      %1994 = vrot.lane.b32.xlu0 %v822, 32
      %v1995 = vpop.permute.xlu0 %1994
      %1996 = vrot.lane.b32.xlu0 %v823, 32
      %v1997 = vpop.permute.xlu0 %1996
      %1998 = vrot.lane.b32.xlu0 %v824, 32
      %v1999 = vpop.permute.xlu0 %1998
      %2000 = vrot.lane.b32.xlu0 %v825, 32
      %v2001 = vpop.permute.xlu0 %2000
      %2002 = vrot.lane.b32.xlu0 %v826, 32
      %v2003 = vpop.permute.xlu0 %2002
      %2004 = vrot.lane.b32.xlu0 %v827, 32
      %v2005 = vpop.permute.xlu0 %2004
      %2006 = vrot.lane.b32.xlu0 %v828, 32
      %v2007 = vpop.permute.xlu0 %2006
      %2008 = vrot.lane.b32.xlu0 %v829, 32
      %v2009 = vpop.permute.xlu0 %2008
      %2010 = vrot.lane.b32.xlu0 %v830, 32
      %v2011 = vpop.permute.xlu0 %2010
      %2012 = vrot.lane.b32.xlu0 %v831, 32
      %v2013 = vpop.permute.xlu0 %2012
      %2014 = vrot.lane.b32.xlu0 %v832, 32
      %v2015 = vpop.permute.xlu0 %2014
      %2016 = vrot.lane.b32.xlu0 %v833, 32
      %v2017 = vpop.permute.xlu0 %2016
      %2018 = vrot.lane.b32.xlu0 %v834, 32
      %v2019 = vpop.permute.xlu0 %2018
      %2020 = vrot.lane.b32.xlu0 %v835, 32
      %v2021 = vpop.permute.xlu0 %2020
      %2022 = vrot.lane.b32.xlu0 %v836, 32
      %v2023 = vpop.permute.xlu0 %2022
      %2024 = vrot.lane.b32.xlu0 %v837, 32
      %v2025 = vpop.permute.xlu0 %2024
      %2026 = vrot.lane.b32.xlu0 %v838, 32
      %v2027 = vpop.permute.xlu0 %2026
      %2028 = vrot.lane.b32.xlu0 %v839, 32
      %v2029 = vpop.permute.xlu0 %2028
      %2030 = vrot.lane.b32.xlu0 %v840, 32
      %v2031 = vpop.permute.xlu0 %2030
      %2032 = vrot.lane.b32.xlu0 %v841, 32
      %v2033 = vpop.permute.xlu0 %2032
      %vm2066 = vcmask 294144
      %2067 = vst.msk [vmem:[#allocation2 + $0x7] sm:$0xff] %vm2066, %v1971
      %2068 = vst.msk [vmem:[#allocation2 + $0xf] sm:$0xff] %vm2066, %v1973
      %2069 = vst.msk [vmem:[#allocation2 + $0x17] sm:$0xff] %vm2066, %v1975
      %2070 = vst.msk [vmem:[#allocation2 + $0x1f] sm:$0xff] %vm2066, %v1977
      %2071 = vst.msk [vmem:[#allocation2 + $0x27] sm:$0xff] %vm2066, %v1979
      %2072 = vst.msk [vmem:[#allocation2 + $0x2f] sm:$0xff] %vm2066, %v1981
      %2073 = vst.msk [vmem:[#allocation2 + $0x37] sm:$0xff] %vm2066, %v1983
      %2074 = vst.msk [vmem:[#allocation2 + $0x3f] sm:$0xff] %vm2066, %v1985
      %2075 = vst.msk [vmem:[#allocation2 + $0x47] sm:$0xff] %vm2066, %v1987
      %2076 = vst.msk [vmem:[#allocation2 + $0x4f] sm:$0xff] %vm2066, %v1989
      %2077 = vst.msk [vmem:[#allocation2 + $0x57] sm:$0xff] %vm2066, %v1991
      %2078 = vst.msk [vmem:[#allocation2 + $0x5f] sm:$0xff] %vm2066, %v1993
      %2079 = vst.msk [vmem:[#allocation2 + $0x67] sm:$0xff] %vm2066, %v1995
      %2080 = vst.msk [vmem:[#allocation2 + $0x6f] sm:$0xff] %vm2066, %v1997
      %2081 = vst.msk [vmem:[#allocation2 + $0x77] sm:$0xff] %vm2066, %v1999
      %2082 = vst.msk [vmem:[#allocation2 + $0x7f] sm:$0xff] %vm2066, %v2001
      %2083 = vst.msk [vmem:[#allocation2 + $0x87] sm:$0xff] %vm2066, %v2003
      %2084 = vst.msk [vmem:[#allocation2 + $0x8f] sm:$0xff] %vm2066, %v2005
      %2085 = vst.msk [vmem:[#allocation2 + $0x97] sm:$0xff] %vm2066, %v2007
      %2086 = vst.msk [vmem:[#allocation2 + $0x9f] sm:$0xff] %vm2066, %v2009
      %2087 = vst.msk [vmem:[#allocation2 + $0xa7] sm:$0xff] %vm2066, %v2011
      %2088 = vst.msk [vmem:[#allocation2 + $0xaf] sm:$0xff] %vm2066, %v2013
      %2089 = vst.msk [vmem:[#allocation2 + $0xb7] sm:$0xff] %vm2066, %v2015
      %2090 = vst.msk [vmem:[#allocation2 + $0xbf] sm:$0xff] %vm2066, %v2017
      %2091 = vst.msk [vmem:[#allocation2 + $0xc7] sm:$0xff] %vm2066, %v2019
      %2092 = vst.msk [vmem:[#allocation2 + $0xcf] sm:$0xff] %vm2066, %v2021
      %2093 = vst.msk [vmem:[#allocation2 + $0xd7] sm:$0xff] %vm2066, %v2023
      %2094 = vst.msk [vmem:[#allocation2 + $0xdf] sm:$0xff] %vm2066, %v2025
      %2095 = vst.msk [vmem:[#allocation2 + $0xe7] sm:$0xff] %vm2066, %v2027
      %2096 = vst.msk [vmem:[#allocation2 + $0xef] sm:$0xff] %vm2066, %v2029
      %2097 = vst.msk [vmem:[#allocation2 + $0xf7] sm:$0xff] %vm2066, %v2031
      %2098 = vst.msk [vmem:[#allocation2 + $0xff] sm:$0xff] %vm2066, %v2033
      %v2099 = vld [vmem:[#allocation2 + $0x18] sm:$0xff]
      %v2100 = vld [vmem:[#allocation2 + $0x20] sm:$0xff]
      %v2101 = vld [vmem:[#allocation2 + $0x28] sm:$0xff]
      %v2102 = vld [vmem:[#allocation2 + $0x30] sm:$0xff]
      %v2103 = vld [vmem:[#allocation2 + $0x38] sm:$0xff]
      %v2104 = vld [vmem:[#allocation2 + $0x40] sm:$0xff]
      %v2105 = vld [vmem:[#allocation2 + $0x48] sm:$0xff]
      %v2106 = vld [vmem:[#allocation2 + $0x50] sm:$0xff]
      %v2107 = vld [vmem:[#allocation2 + $0x58] sm:$0xff]
      %v2108 = vld [vmem:[#allocation2 + $0x60] sm:$0xff]
      %v2109 = vld [vmem:[#allocation2 + $0x68] sm:$0xff]
      %v2110 = vld [vmem:[#allocation2 + $0x70] sm:$0xff]
      %v2111 = vld [vmem:[#allocation2 + $0x78] sm:$0xff]
      %v2112 = vld [vmem:[#allocation2 + $0x80] sm:$0xff]
      %v2113 = vld [vmem:[#allocation2 + $0x88] sm:$0xff]
      %v2114 = vld [vmem:[#allocation2 + $0x90] sm:$0xff]
      %v2115 = vld [vmem:[#allocation2 + $0x98] sm:$0xff]
      %v2116 = vld [vmem:[#allocation2 + $0xa0] sm:$0xff]
      %v2117 = vld [vmem:[#allocation2 + $0xa8] sm:$0xff]
      %v2118 = vld [vmem:[#allocation2 + $0xb0] sm:$0xff]
      %v2119 = vld [vmem:[#allocation2 + $0xb8] sm:$0xff]
      %v2120 = vld [vmem:[#allocation2 + $0xc0] sm:$0xff]
      %v2121 = vld [vmem:[#allocation2 + $0xc8] sm:$0xff]
      %v2122 = vld [vmem:[#allocation2 + $0xd0] sm:$0xff]
      %v2123 = vld [vmem:[#allocation2 + $0xd8] sm:$0xff]
      %v2124 = vld [vmem:[#allocation2 + $0xe0] sm:$0xff]
      %v2125 = vld [vmem:[#allocation2 + $0xe8] sm:$0xff]
      %v2126 = vld [vmem:[#allocation2 + $0xf0] sm:$0xff]
      %v2127 = vld [vmem:[#allocation2 + $0xf8] sm:$0xff]
      %v2128 = vld [vmem:[#allocation2 + $0x100] sm:$0xff]
      %v2129 = vld [vmem:[#allocation2 + $0x108] sm:$0xff]
      %v2130 = vld [vmem:[#allocation2 + $0x110] sm:$0xff]
      %v2131 = vld [vmem:[%s1] sm:$0xff]
      %v2132 = vld [vmem:[%s1 + $0x8] sm:$0xff]
      %v2133 = vld [vmem:[%s1 + $0x10] sm:$0xff]
      %v2134 = vld [vmem:[%s1 + $0x18] sm:$0xff]
      %v2135 = vld [vmem:[%s1 + $0x20] sm:$0xf]
      %v2136 = vld [vmem:[%s2] sm:$0x1]
      %v2138 = vlaneseq
      %v2139 = vshrl.u32 %v2138, 7
      %v2140 = vsub.s32 0, %v2139
      %v2141 = vrot.slane %v2136, %v2140
      %v2144 = vsel %vm738, %v2099, 0
      %v2147 = vsel %vm738, %v2100, 0
      %v2150 = vsel %vm738, %v2101, 0
      %v2153 = vsel %vm738, %v2102, 0
      %v2156 = vsel %vm738, %v2103, 0
      %v2159 = vsel %vm738, %v2104, 0
      %v2162 = vsel %vm738, %v2105, 0
      %v2165 = vsel %vm738, %v2106, 0
      %v2168 = vsel %vm738, %v2107, 0
      %v2171 = vsel %vm738, %v2108, 0
      %v2174 = vsel %vm738, %v2109, 0
      %v2177 = vsel %vm738, %v2110, 0
      %v2180 = vsel %vm738, %v2111, 0
      %v2183 = vsel %vm738, %v2112, 0
      %v2186 = vsel %vm738, %v2113, 0
      %v2189 = vsel %vm738, %v2114, 0
      %v2192 = vsel %vm738, %v2115, 0
      %v2195 = vsel %vm738, %v2116, 0
      %v2198 = vsel %vm738, %v2117, 0
      %v2201 = vsel %vm738, %v2118, 0
      %v2204 = vsel %vm738, %v2119, 0
      %v2207 = vsel %vm738, %v2120, 0
      %v2210 = vsel %vm738, %v2121, 0
      %v2213 = vsel %vm738, %v2122, 0
      %v2216 = vsel %vm738, %v2123, 0
      %v2219 = vsel %vm738, %v2124, 0
      %v2222 = vsel %vm738, %v2125, 0
      %v2225 = vsel %vm738, %v2126, 0
      %v2228 = vsel %vm738, %v2127, 0
      %v2231 = vsel %vm738, %v2128, 0
      %v2234 = vsel %vm738, %v2129, 0
      %v2237 = vsel %vm738, %v2130, 0
      %vm2239 = vcmask 1043456
      %v2241 = vsel %vm2239, %v2135, 0
      %2243 = vmatprep.subr.mxu0 0.0
      %2244 = vmatpush1.msra.mxu0 %v2131
      %2245 = vmatprep.subr.mxu0 0.0
      %2246 = vmatpush1.msra.mxu0 %v2132
      %2247 = vmatprep.subr.mxu0 0.0
      %2248 = vmatpush1.msra.mxu0 %v2133
      %2249 = vmatprep.subr.mxu0 0.0
      %2250 = vmatpush1.msra.mxu0 %v2134
      %2251 = vmatprep.subr.mxu0 0.0
      %2252 = vmatpush1.msra.mxu0 %v2241
      %2253 = vmatprep.subr.mxu0 0.0
      %2254 = vmatpush1.msra.mxu0 0.0
      %2255 = vmatprep.subr.mxu0 0.0
      %2256 = vmatpush1.msra.mxu0 0.0
      %2257 = vmatprep.subr.mxu0 0.0
      %2258 = vmatpush1.msra.mxu0 0.0
      %2259 = vmatprep.subr.mxu0 0.0
      %2260 = vmatpush1.msra.mxu0 0.0
      %2261 = vmatprep.subr.mxu0 0.0
      %2262 = vmatpush1.msra.mxu0 0.0
      %2263 = vmatprep.subr.mxu0 0.0
      %2264 = vmatpush1.msra.mxu0 0.0
      %2265 = vmatprep.subr.mxu0 0.0
      %2266 = vmatpush1.msra.mxu0 0.0
      %2267 = vmatprep.subr.mxu0 0.0
      %2268 = vmatpush1.msra.mxu0 0.0
      %2269 = vmatprep.subr.mxu0 0.0
      %2270 = vmatpush1.msra.mxu0 0.0
      %2271 = vmatprep.subr.mxu0 0.0
      %2272 = vmatpush1.msra.mxu0 0.0
      %2273 = vmatprep.subr.mxu0 0.0
      %2274 = vmatpush1.msra.mxu0 0.0
      %2275 = vmatprep.subr.mxu0 0.0
      %2276 = vmatpush1.msra.mxu0 0.0
      %2277 = vmatprep.subr.mxu0 0.0
      %2278 = vmatpush1.msra.mxu0 0.0
      %2279 = vmatprep.subr.mxu0 0.0
      %2280 = vmatpush1.msra.mxu0 0.0
      %2281 = vmatprep.subr.mxu0 0.0
      %2282 = vmatpush1.msra.mxu0 0.0
      %2283 = vmatprep.subr.mxu0 0.0
      %2284 = vmatpush1.msra.mxu0 0.0
      %2285 = vmatprep.subr.mxu0 0.0
      %2286 = vmatpush1.msra.mxu0 0.0
      %2287 = vmatprep.subr.mxu0 0.0
      %2288 = vmatpush1.msra.mxu0 0.0
      %2289 = vmatprep.subr.mxu0 0.0
      %2290 = vmatpush1.msra.mxu0 0.0
      %2291 = vmatprep.subr.mxu0 0.0
      %2292 = vmatpush1.msra.mxu0 0.0
      %2293 = vmatprep.subr.mxu0 0.0
      %2294 = vmatpush1.msra.mxu0 0.0
      %2295 = vmatprep.subr.mxu0 0.0
      %2296 = vmatpush1.msra.mxu0 0.0
      %2297 = vmatprep.subr.mxu0 0.0
      %2298 = vmatpush1.msra.mxu0 0.0
      %2299 = vmatprep.subr.mxu0 0.0
      %2300 = vmatpush1.msra.mxu0 0.0
      %2301 = vmatprep.subr.mxu0 0.0
      %2302 = vmatpush1.msra.mxu0 0.0
      %2303 = vmatprep.subr.mxu0 0.0
      %2304 = vmatpush1.msra.mxu0 0.0
      %2305 = vmatprep.subr.mxu0 0.0
      %2306 = vmatpush1.msra.mxu0 0.0
      %2307 = vmatprep.mubr.f32.mxu0 0.0
      %2308 = vmatmul.mubr.f32.gmra.mrb[0].mxu0 %v2144
      %v2309 = vpop.f32.mrb[0].mxu0
      %v2310 = vadd.f32 %v2141, %v2309
      %v2311 = vpop.f32.mrb[0].mxu0
      %2312 = vmatprep.mubr.f32.mxu0 0.0
      %2313 = vmatmul.mubr.f32.gmra.mrb[0].mxu0 %v2147
      %v2314 = vpop.f32.mrb[0].mxu0
      %v2315 = vadd.f32 %v2141, %v2314
      %v2316 = vpop.f32.mrb[0].mxu0
      %2317 = vmatprep.mubr.f32.mxu0 0.0
      %2318 = vmatmul.mubr.f32.gmra.mrb[0].mxu0 %v2150
      %v2319 = vpop.f32.mrb[0].mxu0
      %v2320 = vadd.f32 %v2141, %v2319
      %v2321 = vpop.f32.mrb[0].mxu0
      %2322 = vmatprep.mubr.f32.mxu0 0.0
      %2323 = vmatmul.mubr.f32.gmra.mrb[0].mxu0 %v2153
      %v2324 = vpop.f32.mrb[0].mxu0
      %v2325 = vadd.f32 %v2141, %v2324
      %v2326 = vpop.f32.mrb[0].mxu0
      %2327 = vmatprep.mubr.f32.mxu0 0.0
      %2328 = vmatmul.mubr.f32.gmra.mrb[0].mxu0 %v2156
      %v2329 = vpop.f32.mrb[0].mxu0
      %v2330 = vadd.f32 %v2141, %v2329
      %v2331 = vpop.f32.mrb[0].mxu0
      %2332 = vmatprep.mubr.f32.mxu0 0.0
      %2333 = vmatmul.mubr.f32.gmra.mrb[0].mxu0 %v2159
      %v2334 = vpop.f32.mrb[0].mxu0
      %v2335 = vadd.f32 %v2141, %v2334
      %v2336 = vpop.f32.mrb[0].mxu0
      %2337 = vmatprep.mubr.f32.mxu0 0.0
      %2338 = vmatmul.mubr.f32.gmra.mrb[0].mxu0 %v2162
      %v2339 = vpop.f32.mrb[0].mxu0
      %v2340 = vadd.f32 %v2141, %v2339
      %v2341 = vpop.f32.mrb[0].mxu0
      %2342 = vmatprep.mubr.f32.mxu0 0.0
      %2343 = vmatmul.mubr.f32.gmra.mrb[0].mxu0 %v2165
      %v2344 = vpop.f32.mrb[0].mxu0
      %v2345 = vadd.f32 %v2141, %v2344
      %v2346 = vpop.f32.mrb[0].mxu0
      %2347 = vmatprep.mubr.f32.mxu0 0.0
      %2348 = vmatmul.mubr.f32.gmra.mrb[0].mxu0 %v2168
      %v2349 = vpop.f32.mrb[0].mxu0
      %v2350 = vadd.f32 %v2141, %v2349
      %v2351 = vpop.f32.mrb[0].mxu0
      %2352 = vmatprep.mubr.f32.mxu0 0.0
      %2353 = vmatmul.mubr.f32.gmra.mrb[0].mxu0 %v2171
      %v2354 = vpop.f32.mrb[0].mxu0
      %v2355 = vadd.f32 %v2141, %v2354
      %v2356 = vpop.f32.mrb[0].mxu0
      %2357 = vmatprep.mubr.f32.mxu0 0.0
      %2358 = vmatmul.mubr.f32.gmra.mrb[0].mxu0 %v2174
      %v2359 = vpop.f32.mrb[0].mxu0
      %v2360 = vadd.f32 %v2141, %v2359
      %v2361 = vpop.f32.mrb[0].mxu0
      %2362 = vmatprep.mubr.f32.mxu0 0.0
      %2363 = vmatmul.mubr.f32.gmra.mrb[0].mxu0 %v2177
      %v2364 = vpop.f32.mrb[0].mxu0
      %v2365 = vadd.f32 %v2141, %v2364
      %v2366 = vpop.f32.mrb[0].mxu0
      %2367 = vmatprep.mubr.f32.mxu0 0.0
      %2368 = vmatmul.mubr.f32.gmra.mrb[0].mxu0 %v2180
      %v2369 = vpop.f32.mrb[0].mxu0
      %v2370 = vadd.f32 %v2141, %v2369
      %v2371 = vpop.f32.mrb[0].mxu0
      %2372 = vmatprep.mubr.f32.mxu0 0.0
      %2373 = vmatmul.mubr.f32.gmra.mrb[0].mxu0 %v2183
      %v2374 = vpop.f32.mrb[0].mxu0
      %v2375 = vadd.f32 %v2141, %v2374
      %v2376 = vpop.f32.mrb[0].mxu0
      %2377 = vmatprep.mubr.f32.mxu0 0.0
      %2378 = vmatmul.mubr.f32.gmra.mrb[0].mxu0 %v2186
      %v2379 = vpop.f32.mrb[0].mxu0
      %v2380 = vadd.f32 %v2141, %v2379
      %v2381 = vpop.f32.mrb[0].mxu0
      %2382 = vmatprep.mubr.f32.mxu0 0.0
      %2383 = vmatmul.mubr.f32.gmra.mrb[0].mxu0 %v2189
      %v2384 = vpop.f32.mrb[0].mxu0
      %v2385 = vadd.f32 %v2141, %v2384
      %v2386 = vpop.f32.mrb[0].mxu0
      %2387 = vmatprep.mubr.f32.mxu0 0.0
      %2388 = vmatmul.mubr.f32.gmra.mrb[0].mxu0 %v2192
      %v2389 = vpop.f32.mrb[0].mxu0
      %v2390 = vadd.f32 %v2141, %v2389
      %v2391 = vpop.f32.mrb[0].mxu0
      %2392 = vmatprep.mubr.f32.mxu0 0.0
      %2393 = vmatmul.mubr.f32.gmra.mrb[0].mxu0 %v2195
      %v2394 = vpop.f32.mrb[0].mxu0
      %v2395 = vadd.f32 %v2141, %v2394
      %v2396 = vpop.f32.mrb[0].mxu0
      %2397 = vmatprep.mubr.f32.mxu0 0.0
      %2398 = vmatmul.mubr.f32.gmra.mrb[0].mxu0 %v2198
      %v2399 = vpop.f32.mrb[0].mxu0
      %v2400 = vadd.f32 %v2141, %v2399
      %v2401 = vpop.f32.mrb[0].mxu0
      %2402 = vmatprep.mubr.f32.mxu0 0.0
      %2403 = vmatmul.mubr.f32.gmra.mrb[0].mxu0 %v2201
      %v2404 = vpop.f32.mrb[0].mxu0
      %v2405 = vadd.f32 %v2141, %v2404
      %v2406 = vpop.f32.mrb[0].mxu0
      %2407 = vmatprep.mubr.f32.mxu0 0.0
      %2408 = vmatmul.mubr.f32.gmra.mrb[0].mxu0 %v2204
      %v2409 = vpop.f32.mrb[0].mxu0
      %v2410 = vadd.f32 %v2141, %v2409
      %v2411 = vpop.f32.mrb[0].mxu0
      %2412 = vmatprep.mubr.f32.mxu0 0.0
      %2413 = vmatmul.mubr.f32.gmra.mrb[0].mxu0 %v2207
      %v2414 = vpop.f32.mrb[0].mxu0
      %v2415 = vadd.f32 %v2141, %v2414
      %v2416 = vpop.f32.mrb[0].mxu0
      %2417 = vmatprep.mubr.f32.mxu0 0.0
      %2418 = vmatmul.mubr.f32.gmra.mrb[0].mxu0 %v2210
      %v2419 = vpop.f32.mrb[0].mxu0
      %v2420 = vadd.f32 %v2141, %v2419
      %v2421 = vpop.f32.mrb[0].mxu0
      %2422 = vmatprep.mubr.f32.mxu0 0.0
      %2423 = vmatmul.mubr.f32.gmra.mrb[0].mxu0 %v2213
      %v2424 = vpop.f32.mrb[0].mxu0
      %v2425 = vadd.f32 %v2141, %v2424
      %v2426 = vpop.f32.mrb[0].mxu0
      %2427 = vmatprep.mubr.f32.mxu0 0.0
      %2428 = vmatmul.mubr.f32.gmra.mrb[0].mxu0 %v2216
      %v2429 = vpop.f32.mrb[0].mxu0
      %v2430 = vadd.f32 %v2141, %v2429
      %v2431 = vpop.f32.mrb[0].mxu0
      %2432 = vmatprep.mubr.f32.mxu0 0.0
      %2433 = vmatmul.mubr.f32.gmra.mrb[0].mxu0 %v2219
      %v2434 = vpop.f32.mrb[0].mxu0
      %v2435 = vadd.f32 %v2141, %v2434
      %v2436 = vpop.f32.mrb[0].mxu0
      %2437 = vmatprep.mubr.f32.mxu0 0.0
      %2438 = vmatmul.mubr.f32.gmra.mrb[0].mxu0 %v2222
      %v2439 = vpop.f32.mrb[0].mxu0
      %v2440 = vadd.f32 %v2141, %v2439
      %v2441 = vpop.f32.mrb[0].mxu0
      %2442 = vmatprep.mubr.f32.mxu0 0.0
      %2443 = vmatmul.mubr.f32.gmra.mrb[0].mxu0 %v2225
      %v2444 = vpop.f32.mrb[0].mxu0
      %v2445 = vadd.f32 %v2141, %v2444
      %v2446 = vpop.f32.mrb[0].mxu0
      %2447 = vmatprep.mubr.f32.mxu0 0.0
      %2448 = vmatmul.mubr.f32.gmra.mrb[0].mxu0 %v2228
      %v2449 = vpop.f32.mrb[0].mxu0
      %v2450 = vadd.f32 %v2141, %v2449
      %v2451 = vpop.f32.mrb[0].mxu0
      %2452 = vmatprep.mubr.f32.mxu0 0.0
      %2453 = vmatmul.mubr.f32.gmra.mrb[0].mxu0 %v2231
      %v2454 = vpop.f32.mrb[0].mxu0
      %v2455 = vadd.f32 %v2141, %v2454
      %v2456 = vpop.f32.mrb[0].mxu0
      %2457 = vmatprep.mubr.f32.mxu0 0.0
      %2458 = vmatmul.mubr.f32.gmra.mrb[0].mxu0 %v2234
      %v2459 = vpop.f32.mrb[0].mxu0
      %v2460 = vadd.f32 %v2141, %v2459
      %v2461 = vpop.f32.mrb[0].mxu0
      %2462 = vmatprep.mubr.f32.mxu0 0.0
      %2463 = vmatmul.mubr.f32.gmra.mrb[0].mxu0 %v2237
      %v2464 = vpop.f32.mrb[0].mxu0
      %v2465 = vadd.f32 %v2141, %v2464
      %v2466 = vpop.f32.mrb[0].mxu0
      %2467 = vdwg.mxu0
      %vm2468 = vcmask 588800
      %2469 = vst.msk [vmem:[#allocation2 + $0x18] sm:$0xff] %vm2468, 0.0
      %2470 = vst.msk [vmem:[#allocation2 + $0x20] sm:$0xff] %vm2468, 0.0
      %vm2471 = vcmask 581632
      %2472 = vst.msk [vmem:[#allocation2 + $0x28] sm:$0x1] %vm2471, 0.0
      %2473 = vst.msk [vmem:[#allocation2 + $0x107] sm:$0xff] %vm2468, 0.0
      %2474 = vst.msk [vmem:[#allocation2 + $0x10f] sm:$0xff] %vm2468, 0.0
      %2475 = vst.msk [vmem:[#allocation2 + $0x117] sm:$0x1] %vm2471, 0.0
      %v2476 = vsel %vm778, %v2310, 0.0
      %v2477 = vsel %vm779, %v2315, 0.0
      %v2478 = vsel %vm780, %v2320, 0.0
      %v2479 = vsel %vm781, %v2325, 0.0
      %v2480 = vsel %vm782, %v2330, 0.0
      %v2481 = vsel %vm783, %v2335, 0.0
      %v2482 = vsel %vm784, %v2340, 0.0
      %v2483 = vsel %vm785, %v2345, 0.0
      %v2484 = vsel %vm786, %v2350, 0.0
      %v2485 = vsel %vm787, %v2355, 0.0
      %v2486 = vsel %vm788, %v2360, 0.0
      %v2487 = vsel %vm789, %v2365, 0.0
      %v2488 = vsel %vm790, %v2370, 0.0
      %v2489 = vsel %vm791, %v2375, 0.0
      %v2490 = vsel %vm792, %v2380, 0.0
      %v2491 = vsel %vm793, %v2385, 0.0
      %v2492 = vsel %vm794, %v2390, 0.0
      %v2493 = vsel %vm795, %v2395, 0.0
      %v2494 = vsel %vm796, %v2400, 0.0
      %v2495 = vsel %vm797, %v2405, 0.0
      %v2496 = vsel %vm798, %v2410, 0.0
      %v2497 = vsel %vm799, %v2415, 0.0
      %v2498 = vsel %vm800, %v2420, 0.0
      %v2499 = vsel %vm801, %v2425, 0.0
      %v2500 = vsel %vm802, %v2430, 0.0
      %v2501 = vsel %vm803, %v2435, 0.0
      %v2502 = vsel %vm804, %v2440, 0.0
      %v2503 = vsel %vm805, %v2445, 0.0
      %v2504 = vsel %vm806, %v2450, 0.0
      %v2505 = vsel %vm807, %v2455, 0.0
      %v2506 = vsel %vm808, %v2460, 0.0
      %v2507 = vsel %vm809, %v2465, 0.0
      %v2508 = vsel %vm874, %v2310, 0.0
      %v2509 = vsel %vm875, %v2315, 0.0
      %v2510 = vsel %vm876, %v2320, 0.0
      %v2511 = vsel %vm877, %v2325, 0.0
      %v2512 = vsel %vm878, %v2330, 0.0
      %v2513 = vsel %vm879, %v2335, 0.0
      %v2514 = vsel %vm880, %v2340, 0.0
      %v2515 = vsel %vm881, %v2345, 0.0
      %v2516 = vsel %vm882, %v2350, 0.0
      %v2517 = vsel %vm883, %v2355, 0.0
      %v2518 = vsel %vm884, %v2360, 0.0
      %v2519 = vsel %vm885, %v2365, 0.0
      %v2520 = vsel %vm886, %v2370, 0.0
      %v2521 = vsel %vm887, %v2375, 0.0
      %v2522 = vsel %vm888, %v2380, 0.0
      %v2523 = vsel %vm889, %v2385, 0.0
      %v2524 = vsel %vm890, %v2390, 0.0
      %v2525 = vsel %vm891, %v2395, 0.0
      %v2526 = vsel %vm892, %v2400, 0.0
      %v2527 = vsel %vm893, %v2405, 0.0
      %v2528 = vsel %vm894, %v2410, 0.0
      %v2529 = vsel %vm895, %v2415, 0.0
      %v2530 = vsel %vm896, %v2420, 0.0
      %v2531 = vsel %vm897, %v2425, 0.0
      %v2532 = vsel %vm898, %v2430, 0.0
      %v2533 = vsel %vm899, %v2435, 0.0
      %v2534 = vsel %vm900, %v2440, 0.0
      %v2535 = vsel %vm901, %v2445, 0.0
      %v2536 = vsel %vm902, %v2450, 0.0
      %v2537 = vsel %vm903, %v2455, 0.0
      %v2538 = vsel %vm904, %v2460, 0.0
      %v2539 = vsel %vm905, %v2465, 0.0
      %vm2540 = vcmask 64512
      %2541 = vst.msk [vmem:[#allocation2 + $0x29] sm:$0xff] %vm2540, %v2508
      %2542 = vst.msk [vmem:[#allocation2 + $0x31] sm:$0xff] %vm2540, %v2509
      %2543 = vst.msk [vmem:[#allocation2 + $0x39] sm:$0xff] %vm2540, %v2510
      %2544 = vst.msk [vmem:[#allocation2 + $0x41] sm:$0xff] %vm2540, %v2511
      %2545 = vst.msk [vmem:[#allocation2 + $0x49] sm:$0xff] %vm2540, %v2512
      %2546 = vst.msk [vmem:[#allocation2 + $0x51] sm:$0xff] %vm2540, %v2513
      %2547 = vst.msk [vmem:[#allocation2 + $0x59] sm:$0xff] %vm2540, %v2514
      %2548 = vst.msk [vmem:[#allocation2 + $0x61] sm:$0xff] %vm2540, %v2515
      %2549 = vst.msk [vmem:[#allocation2 + $0x69] sm:$0xff] %vm2540, %v2516
      %2550 = vst.msk [vmem:[#allocation2 + $0x71] sm:$0xff] %vm2540, %v2517
      %2551 = vst.msk [vmem:[#allocation2 + $0x79] sm:$0xff] %vm2540, %v2518
      %2552 = vst.msk [vmem:[#allocation2 + $0x81] sm:$0xff] %vm2540, %v2519
      %2553 = vst.msk [vmem:[#allocation2 + $0x89] sm:$0xff] %vm2540, %v2520
      %2554 = vst.msk [vmem:[#allocation2 + $0x91] sm:$0xff] %vm2540, %v2521
      %2555 = vst.msk [vmem:[#allocation2 + $0x99] sm:$0xff] %vm2540, %v2522
      %2556 = vst.msk [vmem:[#allocation2 + $0xa1] sm:$0xff] %vm2540, %v2523
      %2557 = vst.msk [vmem:[#allocation2 + $0xa9] sm:$0xff] %vm2540, %v2524
      %2558 = vst.msk [vmem:[#allocation2 + $0xb1] sm:$0xff] %vm2540, %v2525
      %2559 = vst.msk [vmem:[#allocation2 + $0xb9] sm:$0xff] %vm2540, %v2526
      %2560 = vst.msk [vmem:[#allocation2 + $0xc1] sm:$0xff] %vm2540, %v2527
      %2561 = vst.msk [vmem:[#allocation2 + $0xc9] sm:$0xff] %vm2540, %v2528
      %2562 = vst.msk [vmem:[#allocation2 + $0xd1] sm:$0xff] %vm2540, %v2529
      %2563 = vst.msk [vmem:[#allocation2 + $0xd9] sm:$0xff] %vm2540, %v2530
      %2564 = vst.msk [vmem:[#allocation2 + $0xe1] sm:$0xff] %vm2540, %v2531
      %2565 = vst.msk [vmem:[#allocation2 + $0xe9] sm:$0xff] %vm2540, %v2532
      %2566 = vst.msk [vmem:[#allocation2 + $0xf1] sm:$0xff] %vm2540, %v2533
      %2567 = vst.msk [vmem:[#allocation2 + $0xf9] sm:$0xff] %vm2540, %v2534
      %2568 = vst.msk [vmem:[#allocation2 + $0x101] sm:$0xff] %vm2540, %v2535
      %2569 = vst.msk [vmem:[#allocation2 + $0x109] sm:$0xff] %vm2540, %v2536
      %2570 = vst.msk [vmem:[#allocation2 + $0x111] sm:$0xff] %vm2540, %v2537
      %2571 = vst.msk [vmem:[#allocation2 + $0x119] sm:$0xff] %vm2540, %v2538
      %2572 = vst.msk [vmem:[#allocation2 + $0x121] sm:$0xff] %vm2540, %v2539
      %2605 = vrot.lane.b32.xlu0 %v2310, 8
      %v2606 = vpop.permute.xlu0 %2605
      %2607 = vrot.lane.b32.xlu0 %v2315, 8
      %v2608 = vpop.permute.xlu0 %2607
      %2609 = vrot.lane.b32.xlu0 %v2320, 8
      %v2610 = vpop.permute.xlu0 %2609
      %2611 = vrot.lane.b32.xlu0 %v2325, 8
      %v2612 = vpop.permute.xlu0 %2611
      %2613 = vrot.lane.b32.xlu0 %v2330, 8
      %v2614 = vpop.permute.xlu0 %2613
      %2615 = vrot.lane.b32.xlu0 %v2335, 8
      %v2616 = vpop.permute.xlu0 %2615
      %2617 = vrot.lane.b32.xlu0 %v2340, 8
      %v2618 = vpop.permute.xlu0 %2617
      %2619 = vrot.lane.b32.xlu0 %v2345, 8
      %v2620 = vpop.permute.xlu0 %2619
      %2621 = vrot.lane.b32.xlu0 %v2350, 8
      %v2622 = vpop.permute.xlu0 %2621
      %2623 = vrot.lane.b32.xlu0 %v2355, 8
      %v2624 = vpop.permute.xlu0 %2623
      %2625 = vrot.lane.b32.xlu0 %v2360, 8
      %v2626 = vpop.permute.xlu0 %2625
      %2627 = vrot.lane.b32.xlu0 %v2365, 8
      %v2628 = vpop.permute.xlu0 %2627
      %2629 = vrot.lane.b32.xlu0 %v2370, 8
      %v2630 = vpop.permute.xlu0 %2629
      %2631 = vrot.lane.b32.xlu0 %v2375, 8
      %v2632 = vpop.permute.xlu0 %2631
      %2633 = vrot.lane.b32.xlu0 %v2380, 8
      %v2634 = vpop.permute.xlu0 %2633
      %2635 = vrot.lane.b32.xlu0 %v2385, 8
      %v2636 = vpop.permute.xlu0 %2635
      %2637 = vrot.lane.b32.xlu0 %v2390, 8
      %v2638 = vpop.permute.xlu0 %2637
      %2639 = vrot.lane.b32.xlu0 %v2395, 8
      %v2640 = vpop.permute.xlu0 %2639
      %2641 = vrot.lane.b32.xlu0 %v2400, 8
      %v2642 = vpop.permute.xlu0 %2641
      %2643 = vrot.lane.b32.xlu0 %v2405, 8
      %v2644 = vpop.permute.xlu0 %2643
      %2645 = vrot.lane.b32.xlu0 %v2410, 8
      %v2646 = vpop.permute.xlu0 %2645
      %2647 = vrot.lane.b32.xlu0 %v2415, 8
      %v2648 = vpop.permute.xlu0 %2647
      %2649 = vrot.lane.b32.xlu0 %v2420, 8
      %v2650 = vpop.permute.xlu0 %2649
      %2651 = vrot.lane.b32.xlu0 %v2425, 8
      %v2652 = vpop.permute.xlu0 %2651
      %2653 = vrot.lane.b32.xlu0 %v2430, 8
      %v2654 = vpop.permute.xlu0 %2653
      %2655 = vrot.lane.b32.xlu0 %v2435, 8
      %v2656 = vpop.permute.xlu0 %2655
      %2657 = vrot.lane.b32.xlu0 %v2440, 8
      %v2658 = vpop.permute.xlu0 %2657
      %2659 = vrot.lane.b32.xlu0 %v2445, 8
      %v2660 = vpop.permute.xlu0 %2659
      %2661 = vrot.lane.b32.xlu0 %v2450, 8
      %v2662 = vpop.permute.xlu0 %2661
      %2663 = vrot.lane.b32.xlu0 %v2455, 8
      %v2664 = vpop.permute.xlu0 %2663
      %2665 = vrot.lane.b32.xlu0 %v2460, 8
      %v2666 = vpop.permute.xlu0 %2665
      %2667 = vrot.lane.b32.xlu0 %v2465, 8
      %v2668 = vpop.permute.xlu0 %2667
      %vm2701 = vcmask 130112
      %2702 = vst.msk [vmem:[#allocation2 + $0x28] sm:$0xff] %vm2701, %v2606
      %2703 = vst.msk [vmem:[#allocation2 + $0x30] sm:$0xff] %vm2701, %v2608
      %2704 = vst.msk [vmem:[#allocation2 + $0x38] sm:$0xff] %vm2701, %v2610
      %2705 = vst.msk [vmem:[#allocation2 + $0x40] sm:$0xff] %vm2701, %v2612
      %2706 = vst.msk [vmem:[#allocation2 + $0x48] sm:$0xff] %vm2701, %v2614
      %2707 = vst.msk [vmem:[#allocation2 + $0x50] sm:$0xff] %vm2701, %v2616
      %2708 = vst.msk [vmem:[#allocation2 + $0x58] sm:$0xff] %vm2701, %v2618
      %2709 = vst.msk [vmem:[#allocation2 + $0x60] sm:$0xff] %vm2701, %v2620
      %2710 = vst.msk [vmem:[#allocation2 + $0x68] sm:$0xff] %vm2701, %v2622
      %2711 = vst.msk [vmem:[#allocation2 + $0x70] sm:$0xff] %vm2701, %v2624
      %2712 = vst.msk [vmem:[#allocation2 + $0x78] sm:$0xff] %vm2701, %v2626
      %2713 = vst.msk [vmem:[#allocation2 + $0x80] sm:$0xff] %vm2701, %v2628
      %2714 = vst.msk [vmem:[#allocation2 + $0x88] sm:$0xff] %vm2701, %v2630
      %2715 = vst.msk [vmem:[#allocation2 + $0x90] sm:$0xff] %vm2701, %v2632
      %2716 = vst.msk [vmem:[#allocation2 + $0x98] sm:$0xff] %vm2701, %v2634
      %2717 = vst.msk [vmem:[#allocation2 + $0xa0] sm:$0xff] %vm2701, %v2636
      %2718 = vst.msk [vmem:[#allocation2 + $0xa8] sm:$0xff] %vm2701, %v2638
      %2719 = vst.msk [vmem:[#allocation2 + $0xb0] sm:$0xff] %vm2701, %v2640
      %2720 = vst.msk [vmem:[#allocation2 + $0xb8] sm:$0xff] %vm2701, %v2642
      %2721 = vst.msk [vmem:[#allocation2 + $0xc0] sm:$0xff] %vm2701, %v2644
      %2722 = vst.msk [vmem:[#allocation2 + $0xc8] sm:$0xff] %vm2701, %v2646
      %2723 = vst.msk [vmem:[#allocation2 + $0xd0] sm:$0xff] %vm2701, %v2648
      %2724 = vst.msk [vmem:[#allocation2 + $0xd8] sm:$0xff] %vm2701, %v2650
      %2725 = vst.msk [vmem:[#allocation2 + $0xe0] sm:$0xff] %vm2701, %v2652
      %2726 = vst.msk [vmem:[#allocation2 + $0xe8] sm:$0xff] %vm2701, %v2654
      %2727 = vst.msk [vmem:[#allocation2 + $0xf0] sm:$0xff] %vm2701, %v2656
      %2728 = vst.msk [vmem:[#allocation2 + $0xf8] sm:$0xff] %vm2701, %v2658
      %2729 = vst.msk [vmem:[#allocation2 + $0x100] sm:$0xff] %vm2701, %v2660
      %2730 = vst.msk [vmem:[#allocation2 + $0x108] sm:$0xff] %vm2701, %v2662
      %2731 = vst.msk [vmem:[#allocation2 + $0x110] sm:$0xff] %vm2701, %v2664
      %2732 = vst.msk [vmem:[#allocation2 + $0x118] sm:$0xff] %vm2701, %v2666
      %2733 = vst.msk [vmem:[#allocation2 + $0x120] sm:$0xff] %vm2701, %v2668
      %2766 = vrot.lane.b32.xlu0 %v2476, 16
      %v2767 = vpop.permute.xlu0 %2766
      %2768 = vrot.lane.b32.xlu0 %v2477, 16
      %v2769 = vpop.permute.xlu0 %2768
      %2770 = vrot.lane.b32.xlu0 %v2478, 16
      %v2771 = vpop.permute.xlu0 %2770
      %2772 = vrot.lane.b32.xlu0 %v2479, 16
      %v2773 = vpop.permute.xlu0 %2772
      %2774 = vrot.lane.b32.xlu0 %v2480, 16
      %v2775 = vpop.permute.xlu0 %2774
      %2776 = vrot.lane.b32.xlu0 %v2481, 16
      %v2777 = vpop.permute.xlu0 %2776
      %2778 = vrot.lane.b32.xlu0 %v2482, 16
      %v2779 = vpop.permute.xlu0 %2778
      %2780 = vrot.lane.b32.xlu0 %v2483, 16
      %v2781 = vpop.permute.xlu0 %2780
      %2782 = vrot.lane.b32.xlu0 %v2484, 16
      %v2783 = vpop.permute.xlu0 %2782
      %2784 = vrot.lane.b32.xlu0 %v2485, 16
      %v2785 = vpop.permute.xlu0 %2784
      %2786 = vrot.lane.b32.xlu0 %v2486, 16
      %v2787 = vpop.permute.xlu0 %2786
      %2788 = vrot.lane.b32.xlu0 %v2487, 16
      %v2789 = vpop.permute.xlu0 %2788
      %2790 = vrot.lane.b32.xlu0 %v2488, 16
      %v2791 = vpop.permute.xlu0 %2790
      %2792 = vrot.lane.b32.xlu0 %v2489, 16
      %v2793 = vpop.permute.xlu0 %2792
      %2794 = vrot.lane.b32.xlu0 %v2490, 16
      %v2795 = vpop.permute.xlu0 %2794
      %2796 = vrot.lane.b32.xlu0 %v2491, 16
      %v2797 = vpop.permute.xlu0 %2796
      %2798 = vrot.lane.b32.xlu0 %v2492, 16
      %v2799 = vpop.permute.xlu0 %2798
      %2800 = vrot.lane.b32.xlu0 %v2493, 16
      %v2801 = vpop.permute.xlu0 %2800
      %2802 = vrot.lane.b32.xlu0 %v2494, 16
      %v2803 = vpop.permute.xlu0 %2802
      %2804 = vrot.lane.b32.xlu0 %v2495, 16
      %v2805 = vpop.permute.xlu0 %2804
      %2806 = vrot.lane.b32.xlu0 %v2496, 16
      %v2807 = vpop.permute.xlu0 %2806
      %2808 = vrot.lane.b32.xlu0 %v2497, 16
      %v2809 = vpop.permute.xlu0 %2808
      %2810 = vrot.lane.b32.xlu0 %v2498, 16
      %v2811 = vpop.permute.xlu0 %2810
      %2812 = vrot.lane.b32.xlu0 %v2499, 16
      %v2813 = vpop.permute.xlu0 %2812
      %2814 = vrot.lane.b32.xlu0 %v2500, 16
      %v2815 = vpop.permute.xlu0 %2814
      %2816 = vrot.lane.b32.xlu0 %v2501, 16
      %v2817 = vpop.permute.xlu0 %2816
      %2818 = vrot.lane.b32.xlu0 %v2502, 16
      %v2819 = vpop.permute.xlu0 %2818
      %2820 = vrot.lane.b32.xlu0 %v2503, 16
      %v2821 = vpop.permute.xlu0 %2820
      %2822 = vrot.lane.b32.xlu0 %v2504, 16
      %v2823 = vpop.permute.xlu0 %2822
      %2824 = vrot.lane.b32.xlu0 %v2505, 16
      %v2825 = vpop.permute.xlu0 %2824
      %2826 = vrot.lane.b32.xlu0 %v2506, 16
      %v2827 = vpop.permute.xlu0 %2826
      %2828 = vrot.lane.b32.xlu0 %v2507, 16
      %v2829 = vpop.permute.xlu0 %2828
      %vm2862 = vcmask 195712
      %2863 = vst.msk [vmem:[#allocation2 + $0x27] sm:$0xff] %vm2862, %v2767
      %2864 = vst.msk [vmem:[#allocation2 + $0x2f] sm:$0xff] %vm2862, %v2769
      %2865 = vst.msk [vmem:[#allocation2 + $0x37] sm:$0xff] %vm2862, %v2771
      %2866 = vst.msk [vmem:[#allocation2 + $0x3f] sm:$0xff] %vm2862, %v2773
      %2867 = vst.msk [vmem:[#allocation2 + $0x47] sm:$0xff] %vm2862, %v2775
      %2868 = vst.msk [vmem:[#allocation2 + $0x4f] sm:$0xff] %vm2862, %v2777
      %2869 = vst.msk [vmem:[#allocation2 + $0x57] sm:$0xff] %vm2862, %v2779
      %2870 = vst.msk [vmem:[#allocation2 + $0x5f] sm:$0xff] %vm2862, %v2781
      %2871 = vst.msk [vmem:[#allocation2 + $0x67] sm:$0xff] %vm2862, %v2783
      %2872 = vst.msk [vmem:[#allocation2 + $0x6f] sm:$0xff] %vm2862, %v2785
      %2873 = vst.msk [vmem:[#allocation2 + $0x77] sm:$0xff] %vm2862, %v2787
      %2874 = vst.msk [vmem:[#allocation2 + $0x7f] sm:$0xff] %vm2862, %v2789
      %2875 = vst.msk [vmem:[#allocation2 + $0x87] sm:$0xff] %vm2862, %v2791
      %2876 = vst.msk [vmem:[#allocation2 + $0x8f] sm:$0xff] %vm2862, %v2793
      %2877 = vst.msk [vmem:[#allocation2 + $0x97] sm:$0xff] %vm2862, %v2795
      %2878 = vst.msk [vmem:[#allocation2 + $0x9f] sm:$0xff] %vm2862, %v2797
      %2879 = vst.msk [vmem:[#allocation2 + $0xa7] sm:$0xff] %vm2862, %v2799
      %2880 = vst.msk [vmem:[#allocation2 + $0xaf] sm:$0xff] %vm2862, %v2801
      %2881 = vst.msk [vmem:[#allocation2 + $0xb7] sm:$0xff] %vm2862, %v2803
      %2882 = vst.msk [vmem:[#allocation2 + $0xbf] sm:$0xff] %vm2862, %v2805
      %2883 = vst.msk [vmem:[#allocation2 + $0xc7] sm:$0xff] %vm2862, %v2807
      %2884 = vst.msk [vmem:[#allocation2 + $0xcf] sm:$0xff] %vm2862, %v2809
      %2885 = vst.msk [vmem:[#allocation2 + $0xd7] sm:$0xff] %vm2862, %v2811
      %2886 = vst.msk [vmem:[#allocation2 + $0xdf] sm:$0xff] %vm2862, %v2813
      %2887 = vst.msk [vmem:[#allocation2 + $0xe7] sm:$0xff] %vm2862, %v2815
      %2888 = vst.msk [vmem:[#allocation2 + $0xef] sm:$0xff] %vm2862, %v2817
      %2889 = vst.msk [vmem:[#allocation2 + $0xf7] sm:$0xff] %vm2862, %v2819
      %2890 = vst.msk [vmem:[#allocation2 + $0xff] sm:$0xff] %vm2862, %v2821
      %2891 = vst.msk [vmem:[#allocation2 + $0x107] sm:$0xff] %vm2862, %v2823
      %2892 = vst.msk [vmem:[#allocation2 + $0x10f] sm:$0xff] %vm2862, %v2825
      %2893 = vst.msk [vmem:[#allocation2 + $0x117] sm:$0xff] %vm2862, %v2827
      %2894 = vst.msk [vmem:[#allocation2 + $0x11f] sm:$0xff] %vm2862, %v2829
      %2927 = vrot.lane.b32.xlu0 %v2508, 24
      %v2928 = vpop.permute.xlu0 %2927
      %2929 = vrot.lane.b32.xlu0 %v2509, 24
      %v2930 = vpop.permute.xlu0 %2929
      %2931 = vrot.lane.b32.xlu0 %v2510, 24
      %v2932 = vpop.permute.xlu0 %2931
      %2933 = vrot.lane.b32.xlu0 %v2511, 24
      %v2934 = vpop.permute.xlu0 %2933
      %2935 = vrot.lane.b32.xlu0 %v2512, 24
      %v2936 = vpop.permute.xlu0 %2935
      %2937 = vrot.lane.b32.xlu0 %v2513, 24
      %v2938 = vpop.permute.xlu0 %2937
      %2939 = vrot.lane.b32.xlu0 %v2514, 24
      %v2940 = vpop.permute.xlu0 %2939
      %2941 = vrot.lane.b32.xlu0 %v2515, 24
      %v2942 = vpop.permute.xlu0 %2941
      %2943 = vrot.lane.b32.xlu0 %v2516, 24
      %v2944 = vpop.permute.xlu0 %2943
      %2945 = vrot.lane.b32.xlu0 %v2517, 24
      %v2946 = vpop.permute.xlu0 %2945
      %2947 = vrot.lane.b32.xlu0 %v2518, 24
      %v2948 = vpop.permute.xlu0 %2947
      %2949 = vrot.lane.b32.xlu0 %v2519, 24
      %v2950 = vpop.permute.xlu0 %2949
      %2951 = vrot.lane.b32.xlu0 %v2520, 24
      %v2952 = vpop.permute.xlu0 %2951
      %2953 = vrot.lane.b32.xlu0 %v2521, 24
      %v2954 = vpop.permute.xlu0 %2953
      %2955 = vrot.lane.b32.xlu0 %v2522, 24
      %v2956 = vpop.permute.xlu0 %2955
      %2957 = vrot.lane.b32.xlu0 %v2523, 24
      %v2958 = vpop.permute.xlu0 %2957
      %2959 = vrot.lane.b32.xlu0 %v2524, 24
      %v2960 = vpop.permute.xlu0 %2959
      %2961 = vrot.lane.b32.xlu0 %v2525, 24
      %v2962 = vpop.permute.xlu0 %2961
      %2963 = vrot.lane.b32.xlu0 %v2526, 24
      %v2964 = vpop.permute.xlu0 %2963
      %2965 = vrot.lane.b32.xlu0 %v2527, 24
      %v2966 = vpop.permute.xlu0 %2965
      %2967 = vrot.lane.b32.xlu0 %v2528, 24
      %v2968 = vpop.permute.xlu0 %2967
      %2969 = vrot.lane.b32.xlu0 %v2529, 24
      %v2970 = vpop.permute.xlu0 %2969
      %2971 = vrot.lane.b32.xlu0 %v2530, 24
      %v2972 = vpop.permute.xlu0 %2971
      %2973 = vrot.lane.b32.xlu0 %v2531, 24
      %v2974 = vpop.permute.xlu0 %2973
      %2975 = vrot.lane.b32.xlu0 %v2532, 24
      %v2976 = vpop.permute.xlu0 %2975
      %2977 = vrot.lane.b32.xlu0 %v2533, 24
      %v2978 = vpop.permute.xlu0 %2977
      %2979 = vrot.lane.b32.xlu0 %v2534, 24
      %v2980 = vpop.permute.xlu0 %2979
      %2981 = vrot.lane.b32.xlu0 %v2535, 24
      %v2982 = vpop.permute.xlu0 %2981
      %2983 = vrot.lane.b32.xlu0 %v2536, 24
      %v2984 = vpop.permute.xlu0 %2983
      %2985 = vrot.lane.b32.xlu0 %v2537, 24
      %v2986 = vpop.permute.xlu0 %2985
      %2987 = vrot.lane.b32.xlu0 %v2538, 24
      %v2988 = vpop.permute.xlu0 %2987
      %2989 = vrot.lane.b32.xlu0 %v2539, 24
      %v2990 = vpop.permute.xlu0 %2989
      %vm3023 = vcmask 261312
      %3024 = vst.msk [vmem:[#allocation2 + $0x19] sm:$0xff] %vm3023, %v2928
      %3025 = vst.msk [vmem:[#allocation2 + $0x21] sm:$0xff] %vm3023, %v2930
      %3026 = vst.msk [vmem:[#allocation2 + $0x29] sm:$0xff] %vm3023, %v2932
      %3027 = vst.msk [vmem:[#allocation2 + $0x31] sm:$0xff] %vm3023, %v2934
      %3028 = vst.msk [vmem:[#allocation2 + $0x39] sm:$0xff] %vm3023, %v2936
      %3029 = vst.msk [vmem:[#allocation2 + $0x41] sm:$0xff] %vm3023, %v2938
      %3030 = vst.msk [vmem:[#allocation2 + $0x49] sm:$0xff] %vm3023, %v2940
      %3031 = vst.msk [vmem:[#allocation2 + $0x51] sm:$0xff] %vm3023, %v2942
      %3032 = vst.msk [vmem:[#allocation2 + $0x59] sm:$0xff] %vm3023, %v2944
      %3033 = vst.msk [vmem:[#allocation2 + $0x61] sm:$0xff] %vm3023, %v2946
      %3034 = vst.msk [vmem:[#allocation2 + $0x69] sm:$0xff] %vm3023, %v2948
      %3035 = vst.msk [vmem:[#allocation2 + $0x71] sm:$0xff] %vm3023, %v2950
      %3036 = vst.msk [vmem:[#allocation2 + $0x79] sm:$0xff] %vm3023, %v2952
      %3037 = vst.msk [vmem:[#allocation2 + $0x81] sm:$0xff] %vm3023, %v2954
      %3038 = vst.msk [vmem:[#allocation2 + $0x89] sm:$0xff] %vm3023, %v2956
      %3039 = vst.msk [vmem:[#allocation2 + $0x91] sm:$0xff] %vm3023, %v2958
      %3040 = vst.msk [vmem:[#allocation2 + $0x99] sm:$0xff] %vm3023, %v2960
      %3041 = vst.msk [vmem:[#allocation2 + $0xa1] sm:$0xff] %vm3023, %v2962
      %3042 = vst.msk [vmem:[#allocation2 + $0xa9] sm:$0xff] %vm3023, %v2964
      %3043 = vst.msk [vmem:[#allocation2 + $0xb1] sm:$0xff] %vm3023, %v2966
      %3044 = vst.msk [vmem:[#allocation2 + $0xb9] sm:$0xff] %vm3023, %v2968
      %3045 = vst.msk [vmem:[#allocation2 + $0xc1] sm:$0xff] %vm3023, %v2970
      %3046 = vst.msk [vmem:[#allocation2 + $0xc9] sm:$0xff] %vm3023, %v2972
      %3047 = vst.msk [vmem:[#allocation2 + $0xd1] sm:$0xff] %vm3023, %v2974
      %3048 = vst.msk [vmem:[#allocation2 + $0xd9] sm:$0xff] %vm3023, %v2976
      %3049 = vst.msk [vmem:[#allocation2 + $0xe1] sm:$0xff] %vm3023, %v2978
      %3050 = vst.msk [vmem:[#allocation2 + $0xe9] sm:$0xff] %vm3023, %v2980
      %3051 = vst.msk [vmem:[#allocation2 + $0xf1] sm:$0xff] %vm3023, %v2982
      %3052 = vst.msk [vmem:[#allocation2 + $0xf9] sm:$0xff] %vm3023, %v2984
      %3053 = vst.msk [vmem:[#allocation2 + $0x101] sm:$0xff] %vm3023, %v2986
      %3054 = vst.msk [vmem:[#allocation2 + $0x109] sm:$0xff] %vm3023, %v2988
      %3055 = vst.msk [vmem:[#allocation2 + $0x111] sm:$0xff] %vm3023, %v2990
      %3056 = vrot.lane.b32.xlu0 %v2310, 32
      %v3057 = vpop.permute.xlu0 %3056
      %3058 = vrot.lane.b32.xlu0 %v2315, 32
      %v3059 = vpop.permute.xlu0 %3058
      %3060 = vrot.lane.b32.xlu0 %v2320, 32
      %v3061 = vpop.permute.xlu0 %3060
      %3062 = vrot.lane.b32.xlu0 %v2325, 32
      %v3063 = vpop.permute.xlu0 %3062
      %3064 = vrot.lane.b32.xlu0 %v2330, 32
      %v3065 = vpop.permute.xlu0 %3064
      %3066 = vrot.lane.b32.xlu0 %v2335, 32
      %v3067 = vpop.permute.xlu0 %3066
      %3068 = vrot.lane.b32.xlu0 %v2340, 32
      %v3069 = vpop.permute.xlu0 %3068
      %3070 = vrot.lane.b32.xlu0 %v2345, 32
      %v3071 = vpop.permute.xlu0 %3070
      %3072 = vrot.lane.b32.xlu0 %v2350, 32
      %v3073 = vpop.permute.xlu0 %3072
      %3074 = vrot.lane.b32.xlu0 %v2355, 32
      %v3075 = vpop.permute.xlu0 %3074
      %3076 = vrot.lane.b32.xlu0 %v2360, 32
      %v3077 = vpop.permute.xlu0 %3076
      %3078 = vrot.lane.b32.xlu0 %v2365, 32
      %v3079 = vpop.permute.xlu0 %3078
      %3080 = vrot.lane.b32.xlu0 %v2370, 32
      %v3081 = vpop.permute.xlu0 %3080
      %3082 = vrot.lane.b32.xlu0 %v2375, 32
      %v3083 = vpop.permute.xlu0 %3082
      %3084 = vrot.lane.b32.xlu0 %v2380, 32
      %v3085 = vpop.permute.xlu0 %3084
      %3086 = vrot.lane.b32.xlu0 %v2385, 32
      %v3087 = vpop.permute.xlu0 %3086
      %3088 = vrot.lane.b32.xlu0 %v2390, 32
      %v3089 = vpop.permute.xlu0 %3088
      %3090 = vrot.lane.b32.xlu0 %v2395, 32
      %v3091 = vpop.permute.xlu0 %3090
      %3092 = vrot.lane.b32.xlu0 %v2400, 32
      %v3093 = vpop.permute.xlu0 %3092
      %3094 = vrot.lane.b32.xlu0 %v2405, 32
      %v3095 = vpop.permute.xlu0 %3094
      %3096 = vrot.lane.b32.xlu0 %v2410, 32
      %v3097 = vpop.permute.xlu0 %3096
      %3098 = vrot.lane.b32.xlu0 %v2415, 32
      %v3099 = vpop.permute.xlu0 %3098
      %3100 = vrot.lane.b32.xlu0 %v2420, 32
      %v3101 = vpop.permute.xlu0 %3100
      %3102 = vrot.lane.b32.xlu0 %v2425, 32
      %v3103 = vpop.permute.xlu0 %3102
      %3104 = vrot.lane.b32.xlu0 %v2430, 32
      %v3105 = vpop.permute.xlu0 %3104
      %3106 = vrot.lane.b32.xlu0 %v2435, 32
      %v3107 = vpop.permute.xlu0 %3106
      %3108 = vrot.lane.b32.xlu0 %v2440, 32
      %v3109 = vpop.permute.xlu0 %3108
      %3110 = vrot.lane.b32.xlu0 %v2445, 32
      %v3111 = vpop.permute.xlu0 %3110
      %3112 = vrot.lane.b32.xlu0 %v2450, 32
      %v3113 = vpop.permute.xlu0 %3112
      %3114 = vrot.lane.b32.xlu0 %v2455, 32
      %v3115 = vpop.permute.xlu0 %3114
      %3116 = vrot.lane.b32.xlu0 %v2460, 32
      %v3117 = vpop.permute.xlu0 %3116
      %3118 = vrot.lane.b32.xlu0 %v2465, 32
      %v3119 = vpop.permute.xlu0 %3118
      %vm3152 = vcmask 326912
      %3153 = vst.msk [vmem:[#allocation2 + $0x18] sm:$0xff] %vm3152, %v3057
      %3154 = vst.msk [vmem:[#allocation2 + $0x20] sm:$0xff] %vm3152, %v3059
      %3155 = vst.msk [vmem:[#allocation2 + $0x28] sm:$0xff] %vm3152, %v3061
      %3156 = vst.msk [vmem:[#allocation2 + $0x30] sm:$0xff] %vm3152, %v3063
      %3157 = vst.msk [vmem:[#allocation2 + $0x38] sm:$0xff] %vm3152, %v3065
      %3158 = vst.msk [vmem:[#allocation2 + $0x40] sm:$0xff] %vm3152, %v3067
      %3159 = vst.msk [vmem:[#allocation2 + $0x48] sm:$0xff] %vm3152, %v3069
      %3160 = vst.msk [vmem:[#allocation2 + $0x50] sm:$0xff] %vm3152, %v3071
      %3161 = vst.msk [vmem:[#allocation2 + $0x58] sm:$0xff] %vm3152, %v3073
      %3162 = vst.msk [vmem:[#allocation2 + $0x60] sm:$0xff] %vm3152, %v3075
      %3163 = vst.msk [vmem:[#allocation2 + $0x68] sm:$0xff] %vm3152, %v3077
      %3164 = vst.msk [vmem:[#allocation2 + $0x70] sm:$0xff] %vm3152, %v3079
      %3165 = vst.msk [vmem:[#allocation2 + $0x78] sm:$0xff] %vm3152, %v3081
      %3166 = vst.msk [vmem:[#allocation2 + $0x80] sm:$0xff] %vm3152, %v3083
      %3167 = vst.msk [vmem:[#allocation2 + $0x88] sm:$0xff] %vm3152, %v3085
      %3168 = vst.msk [vmem:[#allocation2 + $0x90] sm:$0xff] %vm3152, %v3087
      %3169 = vst.msk [vmem:[#allocation2 + $0x98] sm:$0xff] %vm3152, %v3089
      %3170 = vst.msk [vmem:[#allocation2 + $0xa0] sm:$0xff] %vm3152, %v3091
      %3171 = vst.msk [vmem:[#allocation2 + $0xa8] sm:$0xff] %vm3152, %v3093
      %3172 = vst.msk [vmem:[#allocation2 + $0xb0] sm:$0xff] %vm3152, %v3095
      %3173 = vst.msk [vmem:[#allocation2 + $0xb8] sm:$0xff] %vm3152, %v3097
      %3174 = vst.msk [vmem:[#allocation2 + $0xc0] sm:$0xff] %vm3152, %v3099
      %3175 = vst.msk [vmem:[#allocation2 + $0xc8] sm:$0xff] %vm3152, %v3101
      %3176 = vst.msk [vmem:[#allocation2 + $0xd0] sm:$0xff] %vm3152, %v3103
      %3177 = vst.msk [vmem:[#allocation2 + $0xd8] sm:$0xff] %vm3152, %v3105
      %3178 = vst.msk [vmem:[#allocation2 + $0xe0] sm:$0xff] %vm3152, %v3107
      %3179 = vst.msk [vmem:[#allocation2 + $0xe8] sm:$0xff] %vm3152, %v3109
      %3180 = vst.msk [vmem:[#allocation2 + $0xf0] sm:$0xff] %vm3152, %v3111
      %3181 = vst.msk [vmem:[#allocation2 + $0xf8] sm:$0xff] %vm3152, %v3113
      %3182 = vst.msk [vmem:[#allocation2 + $0x100] sm:$0xff] %vm3152, %v3115
      %3183 = vst.msk [vmem:[#allocation2 + $0x108] sm:$0xff] %vm3152, %v3117
      %3184 = vst.msk [vmem:[#allocation2 + $0x110] sm:$0xff] %vm3152, %v3119
      %3185 = vrot.lane.b32.xlu0 %v2476, 40
      %v3186 = vpop.permute.xlu0 %3185
      %3187 = vrot.lane.b32.xlu0 %v2477, 40
      %v3188 = vpop.permute.xlu0 %3187
      %3189 = vrot.lane.b32.xlu0 %v2478, 40
      %v3190 = vpop.permute.xlu0 %3189
      %3191 = vrot.lane.b32.xlu0 %v2479, 40
      %v3192 = vpop.permute.xlu0 %3191
      %3193 = vrot.lane.b32.xlu0 %v2480, 40
      %v3194 = vpop.permute.xlu0 %3193
      %3195 = vrot.lane.b32.xlu0 %v2481, 40
      %v3196 = vpop.permute.xlu0 %3195
      %3197 = vrot.lane.b32.xlu0 %v2482, 40
      %v3198 = vpop.permute.xlu0 %3197
      %3199 = vrot.lane.b32.xlu0 %v2483, 40
      %v3200 = vpop.permute.xlu0 %3199
      %3201 = vrot.lane.b32.xlu0 %v2484, 40
      %v3202 = vpop.permute.xlu0 %3201
      %3203 = vrot.lane.b32.xlu0 %v2485, 40
      %v3204 = vpop.permute.xlu0 %3203
      %3205 = vrot.lane.b32.xlu0 %v2486, 40
      %v3206 = vpop.permute.xlu0 %3205
      %3207 = vrot.lane.b32.xlu0 %v2487, 40
      %v3208 = vpop.permute.xlu0 %3207
      %3209 = vrot.lane.b32.xlu0 %v2488, 40
      %v3210 = vpop.permute.xlu0 %3209
      %3211 = vrot.lane.b32.xlu0 %v2489, 40
      %v3212 = vpop.permute.xlu0 %3211
      %3213 = vrot.lane.b32.xlu0 %v2490, 40
      %v3214 = vpop.permute.xlu0 %3213
      %3215 = vrot.lane.b32.xlu0 %v2491, 40
      %v3216 = vpop.permute.xlu0 %3215
      %3217 = vrot.lane.b32.xlu0 %v2492, 40
      %v3218 = vpop.permute.xlu0 %3217
      %3219 = vrot.lane.b32.xlu0 %v2493, 40
      %v3220 = vpop.permute.xlu0 %3219
      %3221 = vrot.lane.b32.xlu0 %v2494, 40
      %v3222 = vpop.permute.xlu0 %3221
      %3223 = vrot.lane.b32.xlu0 %v2495, 40
      %v3224 = vpop.permute.xlu0 %3223
      %3225 = vrot.lane.b32.xlu0 %v2496, 40
      %v3226 = vpop.permute.xlu0 %3225
      %3227 = vrot.lane.b32.xlu0 %v2497, 40
      %v3228 = vpop.permute.xlu0 %3227
      %3229 = vrot.lane.b32.xlu0 %v2498, 40
      %v3230 = vpop.permute.xlu0 %3229
      %3231 = vrot.lane.b32.xlu0 %v2499, 40
      %v3232 = vpop.permute.xlu0 %3231
      %3233 = vrot.lane.b32.xlu0 %v2500, 40
      %v3234 = vpop.permute.xlu0 %3233
      %3235 = vrot.lane.b32.xlu0 %v2501, 40
      %v3236 = vpop.permute.xlu0 %3235
      %3237 = vrot.lane.b32.xlu0 %v2502, 40
      %v3238 = vpop.permute.xlu0 %3237
      %3239 = vrot.lane.b32.xlu0 %v2503, 40
      %v3240 = vpop.permute.xlu0 %3239
      %3241 = vrot.lane.b32.xlu0 %v2504, 40
      %v3242 = vpop.permute.xlu0 %3241
      %3243 = vrot.lane.b32.xlu0 %v2505, 40
      %v3244 = vpop.permute.xlu0 %3243
      %3245 = vrot.lane.b32.xlu0 %v2506, 40
      %v3246 = vpop.permute.xlu0 %3245
      %3247 = vrot.lane.b32.xlu0 %v2507, 40
      %v3248 = vpop.permute.xlu0 %3247
      %vm3281 = vcmask 392512
      %3282 = vst.msk [vmem:[#allocation2 + $0x17] sm:$0xff] %vm3281, %v3186
      %3283 = vst.msk [vmem:[#allocation2 + $0x1f] sm:$0xff] %vm3281, %v3188
      %3284 = vst.msk [vmem:[#allocation2 + $0x27] sm:$0xff] %vm3281, %v3190
      %3285 = vst.msk [vmem:[#allocation2 + $0x2f] sm:$0xff] %vm3281, %v3192
      %3286 = vst.msk [vmem:[#allocation2 + $0x37] sm:$0xff] %vm3281, %v3194
      %3287 = vst.msk [vmem:[#allocation2 + $0x3f] sm:$0xff] %vm3281, %v3196
      %3288 = vst.msk [vmem:[#allocation2 + $0x47] sm:$0xff] %vm3281, %v3198
      %3289 = vst.msk [vmem:[#allocation2 + $0x4f] sm:$0xff] %vm3281, %v3200
      %3290 = vst.msk [vmem:[#allocation2 + $0x57] sm:$0xff] %vm3281, %v3202
      %3291 = vst.msk [vmem:[#allocation2 + $0x5f] sm:$0xff] %vm3281, %v3204
      %3292 = vst.msk [vmem:[#allocation2 + $0x67] sm:$0xff] %vm3281, %v3206
      %3293 = vst.msk [vmem:[#allocation2 + $0x6f] sm:$0xff] %vm3281, %v3208
      %3294 = vst.msk [vmem:[#allocation2 + $0x77] sm:$0xff] %vm3281, %v3210
      %3295 = vst.msk [vmem:[#allocation2 + $0x7f] sm:$0xff] %vm3281, %v3212
      %3296 = vst.msk [vmem:[#allocation2 + $0x87] sm:$0xff] %vm3281, %v3214
      %3297 = vst.msk [vmem:[#allocation2 + $0x8f] sm:$0xff] %vm3281, %v3216
      %3298 = vst.msk [vmem:[#allocation2 + $0x97] sm:$0xff] %vm3281, %v3218
      %3299 = vst.msk [vmem:[#allocation2 + $0x9f] sm:$0xff] %vm3281, %v3220
      %3300 = vst.msk [vmem:[#allocation2 + $0xa7] sm:$0xff] %vm3281, %v3222
      %3301 = vst.msk [vmem:[#allocation2 + $0xaf] sm:$0xff] %vm3281, %v3224
      %3302 = vst.msk [vmem:[#allocation2 + $0xb7] sm:$0xff] %vm3281, %v3226
      %3303 = vst.msk [vmem:[#allocation2 + $0xbf] sm:$0xff] %vm3281, %v3228
      %3304 = vst.msk [vmem:[#allocation2 + $0xc7] sm:$0xff] %vm3281, %v3230
      %3305 = vst.msk [vmem:[#allocation2 + $0xcf] sm:$0xff] %vm3281, %v3232
      %3306 = vst.msk [vmem:[#allocation2 + $0xd7] sm:$0xff] %vm3281, %v3234
      %3307 = vst.msk [vmem:[#allocation2 + $0xdf] sm:$0xff] %vm3281, %v3236
      %3308 = vst.msk [vmem:[#allocation2 + $0xe7] sm:$0xff] %vm3281, %v3238
      %3309 = vst.msk [vmem:[#allocation2 + $0xef] sm:$0xff] %vm3281, %v3240
      %3310 = vst.msk [vmem:[#allocation2 + $0xf7] sm:$0xff] %vm3281, %v3242
      %3311 = vst.msk [vmem:[#allocation2 + $0xff] sm:$0xff] %vm3281, %v3244
      %3312 = vst.msk [vmem:[#allocation2 + $0x107] sm:$0xff] %vm3281, %v3246
      %3313 = vst.msk [vmem:[#allocation2 + $0x10f] sm:$0xff] %vm3281, %v3248
      %3314 = vrot.lane.b32.xlu0 %v2508, 48
      %v3315 = vpop.permute.xlu0 %3314
      %3316 = vrot.lane.b32.xlu0 %v2509, 48
      %v3317 = vpop.permute.xlu0 %3316
      %3318 = vrot.lane.b32.xlu0 %v2510, 48
      %v3319 = vpop.permute.xlu0 %3318
      %3320 = vrot.lane.b32.xlu0 %v2511, 48
      %v3321 = vpop.permute.xlu0 %3320
      %3322 = vrot.lane.b32.xlu0 %v2512, 48
      %v3323 = vpop.permute.xlu0 %3322
      %3324 = vrot.lane.b32.xlu0 %v2513, 48
      %v3325 = vpop.permute.xlu0 %3324
      %3326 = vrot.lane.b32.xlu0 %v2514, 48
      %v3327 = vpop.permute.xlu0 %3326
      %3328 = vrot.lane.b32.xlu0 %v2515, 48
      %v3329 = vpop.permute.xlu0 %3328
      %3330 = vrot.lane.b32.xlu0 %v2516, 48
      %v3331 = vpop.permute.xlu0 %3330
      %3332 = vrot.lane.b32.xlu0 %v2517, 48
      %v3333 = vpop.permute.xlu0 %3332
      %3334 = vrot.lane.b32.xlu0 %v2518, 48
      %v3335 = vpop.permute.xlu0 %3334
      %3336 = vrot.lane.b32.xlu0 %v2519, 48
      %v3337 = vpop.permute.xlu0 %3336
      %3338 = vrot.lane.b32.xlu0 %v2520, 48
      %v3339 = vpop.permute.xlu0 %3338
      %3340 = vrot.lane.b32.xlu0 %v2521, 48
      %v3341 = vpop.permute.xlu0 %3340
      %3342 = vrot.lane.b32.xlu0 %v2522, 48
      %v3343 = vpop.permute.xlu0 %3342
      %3344 = vrot.lane.b32.xlu0 %v2523, 48
      %v3345 = vpop.permute.xlu0 %3344
      %3346 = vrot.lane.b32.xlu0 %v2524, 48
      %v3347 = vpop.permute.xlu0 %3346
      %3348 = vrot.lane.b32.xlu0 %v2525, 48
      %v3349 = vpop.permute.xlu0 %3348
      %3350 = vrot.lane.b32.xlu0 %v2526, 48
      %v3351 = vpop.permute.xlu0 %3350
      %3352 = vrot.lane.b32.xlu0 %v2527, 48
      %v3353 = vpop.permute.xlu0 %3352
      %3354 = vrot.lane.b32.xlu0 %v2528, 48
      %v3355 = vpop.permute.xlu0 %3354
      %3356 = vrot.lane.b32.xlu0 %v2529, 48
      %v3357 = vpop.permute.xlu0 %3356
      %3358 = vrot.lane.b32.xlu0 %v2530, 48
      %v3359 = vpop.permute.xlu0 %3358
      %3360 = vrot.lane.b32.xlu0 %v2531, 48
      %v3361 = vpop.permute.xlu0 %3360
      %3362 = vrot.lane.b32.xlu0 %v2532, 48
      %v3363 = vpop.permute.xlu0 %3362
      %3364 = vrot.lane.b32.xlu0 %v2533, 48
      %v3365 = vpop.permute.xlu0 %3364
      %3366 = vrot.lane.b32.xlu0 %v2534, 48
      %v3367 = vpop.permute.xlu0 %3366
      %3368 = vrot.lane.b32.xlu0 %v2535, 48
      %v3369 = vpop.permute.xlu0 %3368
      %3370 = vrot.lane.b32.xlu0 %v2536, 48
      %v3371 = vpop.permute.xlu0 %3370
      %3372 = vrot.lane.b32.xlu0 %v2537, 48
      %v3373 = vpop.permute.xlu0 %3372
      %3374 = vrot.lane.b32.xlu0 %v2538, 48
      %v3375 = vpop.permute.xlu0 %3374
      %3376 = vrot.lane.b32.xlu0 %v2539, 48
      %v3377 = vpop.permute.xlu0 %3376
      %vm3410 = vcmask 458112
      %3411 = vst.msk [vmem:[#allocation2 + $0x9] sm:$0xff] %vm3410, %v3315
      %3412 = vst.msk [vmem:[#allocation2 + $0x11] sm:$0xff] %vm3410, %v3317
      %3413 = vst.msk [vmem:[#allocation2 + $0x19] sm:$0xff] %vm3410, %v3319
      %3414 = vst.msk [vmem:[#allocation2 + $0x21] sm:$0xff] %vm3410, %v3321
      %3415 = vst.msk [vmem:[#allocation2 + $0x29] sm:$0xff] %vm3410, %v3323
      %3416 = vst.msk [vmem:[#allocation2 + $0x31] sm:$0xff] %vm3410, %v3325
      %3417 = vst.msk [vmem:[#allocation2 + $0x39] sm:$0xff] %vm3410, %v3327
      %3418 = vst.msk [vmem:[#allocation2 + $0x41] sm:$0xff] %vm3410, %v3329
      %3419 = vst.msk [vmem:[#allocation2 + $0x49] sm:$0xff] %vm3410, %v3331
      %3420 = vst.msk [vmem:[#allocation2 + $0x51] sm:$0xff] %vm3410, %v3333
      %3421 = vst.msk [vmem:[#allocation2 + $0x59] sm:$0xff] %vm3410, %v3335
      %3422 = vst.msk [vmem:[#allocation2 + $0x61] sm:$0xff] %vm3410, %v3337
      %3423 = vst.msk [vmem:[#allocation2 + $0x69] sm:$0xff] %vm3410, %v3339
      %3424 = vst.msk [vmem:[#allocation2 + $0x71] sm:$0xff] %vm3410, %v3341
      %3425 = vst.msk [vmem:[#allocation2 + $0x79] sm:$0xff] %vm3410, %v3343
      %3426 = vst.msk [vmem:[#allocation2 + $0x81] sm:$0xff] %vm3410, %v3345
      %3427 = vst.msk [vmem:[#allocation2 + $0x89] sm:$0xff] %vm3410, %v3347
      %3428 = vst.msk [vmem:[#allocation2 + $0x91] sm:$0xff] %vm3410, %v3349
      %3429 = vst.msk [vmem:[#allocation2 + $0x99] sm:$0xff] %vm3410, %v3351
      %3430 = vst.msk [vmem:[#allocation2 + $0xa1] sm:$0xff] %vm3410, %v3353
      %3431 = vst.msk [vmem:[#allocation2 + $0xa9] sm:$0xff] %vm3410, %v3355
      %3432 = vst.msk [vmem:[#allocation2 + $0xb1] sm:$0xff] %vm3410, %v3357
      %3433 = vst.msk [vmem:[#allocation2 + $0xb9] sm:$0xff] %vm3410, %v3359
      %3434 = vst.msk [vmem:[#allocation2 + $0xc1] sm:$0xff] %vm3410, %v3361
      %3435 = vst.msk [vmem:[#allocation2 + $0xc9] sm:$0xff] %vm3410, %v3363
      %3436 = vst.msk [vmem:[#allocation2 + $0xd1] sm:$0xff] %vm3410, %v3365
      %3437 = vst.msk [vmem:[#allocation2 + $0xd9] sm:$0xff] %vm3410, %v3367
      %3438 = vst.msk [vmem:[#allocation2 + $0xe1] sm:$0xff] %vm3410, %v3369
      %3439 = vst.msk [vmem:[#allocation2 + $0xe9] sm:$0xff] %vm3410, %v3371
      %3440 = vst.msk [vmem:[#allocation2 + $0xf1] sm:$0xff] %vm3410, %v3373
      %3441 = vst.msk [vmem:[#allocation2 + $0xf9] sm:$0xff] %vm3410, %v3375
      %3442 = vst.msk [vmem:[#allocation2 + $0x101] sm:$0xff] %vm3410, %v3377
      %3443 = vrot.lane.b32.xlu0 %v2310, 56
      %v3444 = vpop.permute.xlu0 %3443
      %3445 = vrot.lane.b32.xlu0 %v2315, 56
      %v3446 = vpop.permute.xlu0 %3445
      %3447 = vrot.lane.b32.xlu0 %v2320, 56
      %v3448 = vpop.permute.xlu0 %3447
      %3449 = vrot.lane.b32.xlu0 %v2325, 56
      %v3450 = vpop.permute.xlu0 %3449
      %3451 = vrot.lane.b32.xlu0 %v2330, 56
      %v3452 = vpop.permute.xlu0 %3451
      %3453 = vrot.lane.b32.xlu0 %v2335, 56
      %v3454 = vpop.permute.xlu0 %3453
      %3455 = vrot.lane.b32.xlu0 %v2340, 56
      %v3456 = vpop.permute.xlu0 %3455
      %3457 = vrot.lane.b32.xlu0 %v2345, 56
      %v3458 = vpop.permute.xlu0 %3457
      %3459 = vrot.lane.b32.xlu0 %v2350, 56
      %v3460 = vpop.permute.xlu0 %3459
      %3461 = vrot.lane.b32.xlu0 %v2355, 56
      %v3462 = vpop.permute.xlu0 %3461
      %3463 = vrot.lane.b32.xlu0 %v2360, 56
      %v3464 = vpop.permute.xlu0 %3463
      %3465 = vrot.lane.b32.xlu0 %v2365, 56
      %v3466 = vpop.permute.xlu0 %3465
      %3467 = vrot.lane.b32.xlu0 %v2370, 56
      %v3468 = vpop.permute.xlu0 %3467
      %3469 = vrot.lane.b32.xlu0 %v2375, 56
      %v3470 = vpop.permute.xlu0 %3469
      %3471 = vrot.lane.b32.xlu0 %v2380, 56
      %v3472 = vpop.permute.xlu0 %3471
      %3473 = vrot.lane.b32.xlu0 %v2385, 56
      %v3474 = vpop.permute.xlu0 %3473
      %3475 = vrot.lane.b32.xlu0 %v2390, 56
      %v3476 = vpop.permute.xlu0 %3475
      %3477 = vrot.lane.b32.xlu0 %v2395, 56
      %v3478 = vpop.permute.xlu0 %3477
      %3479 = vrot.lane.b32.xlu0 %v2400, 56
      %v3480 = vpop.permute.xlu0 %3479
      %3481 = vrot.lane.b32.xlu0 %v2405, 56
      %v3482 = vpop.permute.xlu0 %3481
      %3483 = vrot.lane.b32.xlu0 %v2410, 56
      %v3484 = vpop.permute.xlu0 %3483
      %3485 = vrot.lane.b32.xlu0 %v2415, 56
      %v3486 = vpop.permute.xlu0 %3485
      %3487 = vrot.lane.b32.xlu0 %v2420, 56
      %v3488 = vpop.permute.xlu0 %3487
      %3489 = vrot.lane.b32.xlu0 %v2425, 56
      %v3490 = vpop.permute.xlu0 %3489
      %3491 = vrot.lane.b32.xlu0 %v2430, 56
      %v3492 = vpop.permute.xlu0 %3491
      %3493 = vrot.lane.b32.xlu0 %v2435, 56
      %v3494 = vpop.permute.xlu0 %3493
      %3495 = vrot.lane.b32.xlu0 %v2440, 56
      %v3496 = vpop.permute.xlu0 %3495
      %3497 = vrot.lane.b32.xlu0 %v2445, 56
      %v3498 = vpop.permute.xlu0 %3497
      %3499 = vrot.lane.b32.xlu0 %v2450, 56
      %v3500 = vpop.permute.xlu0 %3499
      %3501 = vrot.lane.b32.xlu0 %v2455, 56
      %v3502 = vpop.permute.xlu0 %3501
      %3503 = vrot.lane.b32.xlu0 %v2460, 56
      %v3504 = vpop.permute.xlu0 %3503
      %3505 = vrot.lane.b32.xlu0 %v2465, 56
      %v3506 = vpop.permute.xlu0 %3505
      %vm3539 = vcmask 523712
      %3540 = vst.msk [vmem:[#allocation2 + $0x8] sm:$0xff] %vm3539, %v3444
      %3541 = vst.msk [vmem:[#allocation2 + $0x10] sm:$0xff] %vm3539, %v3446
      %3542 = vst.msk [vmem:[#allocation2 + $0x18] sm:$0xff] %vm3539, %v3448
      %3543 = vst.msk [vmem:[#allocation2 + $0x20] sm:$0xff] %vm3539, %v3450
      %3544 = vst.msk [vmem:[#allocation2 + $0x28] sm:$0xff] %vm3539, %v3452
      %3545 = vst.msk [vmem:[#allocation2 + $0x30] sm:$0xff] %vm3539, %v3454
      %3546 = vst.msk [vmem:[#allocation2 + $0x38] sm:$0xff] %vm3539, %v3456
      %3547 = vst.msk [vmem:[#allocation2 + $0x40] sm:$0xff] %vm3539, %v3458
      %3548 = vst.msk [vmem:[#allocation2 + $0x48] sm:$0xff] %vm3539, %v3460
      %3549 = vst.msk [vmem:[#allocation2 + $0x50] sm:$0xff] %vm3539, %v3462
      %3550 = vst.msk [vmem:[#allocation2 + $0x58] sm:$0xff] %vm3539, %v3464
      %3551 = vst.msk [vmem:[#allocation2 + $0x60] sm:$0xff] %vm3539, %v3466
      %3552 = vst.msk [vmem:[#allocation2 + $0x68] sm:$0xff] %vm3539, %v3468
      %3553 = vst.msk [vmem:[#allocation2 + $0x70] sm:$0xff] %vm3539, %v3470
      %3554 = vst.msk [vmem:[#allocation2 + $0x78] sm:$0xff] %vm3539, %v3472
      %3555 = vst.msk [vmem:[#allocation2 + $0x80] sm:$0xff] %vm3539, %v3474
      %3556 = vst.msk [vmem:[#allocation2 + $0x88] sm:$0xff] %vm3539, %v3476
      %3557 = vst.msk [vmem:[#allocation2 + $0x90] sm:$0xff] %vm3539, %v3478
      %3558 = vst.msk [vmem:[#allocation2 + $0x98] sm:$0xff] %vm3539, %v3480
      %3559 = vst.msk [vmem:[#allocation2 + $0xa0] sm:$0xff] %vm3539, %v3482
      %3560 = vst.msk [vmem:[#allocation2 + $0xa8] sm:$0xff] %vm3539, %v3484
      %3561 = vst.msk [vmem:[#allocation2 + $0xb0] sm:$0xff] %vm3539, %v3486
      %3562 = vst.msk [vmem:[#allocation2 + $0xb8] sm:$0xff] %vm3539, %v3488
      %3563 = vst.msk [vmem:[#allocation2 + $0xc0] sm:$0xff] %vm3539, %v3490
      %3564 = vst.msk [vmem:[#allocation2 + $0xc8] sm:$0xff] %vm3539, %v3492
      %3565 = vst.msk [vmem:[#allocation2 + $0xd0] sm:$0xff] %vm3539, %v3494
      %3566 = vst.msk [vmem:[#allocation2 + $0xd8] sm:$0xff] %vm3539, %v3496
      %3567 = vst.msk [vmem:[#allocation2 + $0xe0] sm:$0xff] %vm3539, %v3498
      %3568 = vst.msk [vmem:[#allocation2 + $0xe8] sm:$0xff] %vm3539, %v3500
      %3569 = vst.msk [vmem:[#allocation2 + $0xf0] sm:$0xff] %vm3539, %v3502
      %3570 = vst.msk [vmem:[#allocation2 + $0xf8] sm:$0xff] %vm3539, %v3504
      %3571 = vst.msk [vmem:[#allocation2 + $0x100] sm:$0xff] %vm3539, %v3506
      %3572 = vrot.lane.b32.xlu0 %v2476, 64
      %v3573 = vpop.permute.xlu0 %3572
      %3574 = vrot.lane.b32.xlu0 %v2477, 64
      %v3575 = vpop.permute.xlu0 %3574
      %3576 = vrot.lane.b32.xlu0 %v2478, 64
      %v3577 = vpop.permute.xlu0 %3576
      %3578 = vrot.lane.b32.xlu0 %v2479, 64
      %v3579 = vpop.permute.xlu0 %3578
      %3580 = vrot.lane.b32.xlu0 %v2480, 64
      %v3581 = vpop.permute.xlu0 %3580
      %3582 = vrot.lane.b32.xlu0 %v2481, 64
      %v3583 = vpop.permute.xlu0 %3582
      %3584 = vrot.lane.b32.xlu0 %v2482, 64
      %v3585 = vpop.permute.xlu0 %3584
      %3586 = vrot.lane.b32.xlu0 %v2483, 64
      %v3587 = vpop.permute.xlu0 %3586
      %3588 = vrot.lane.b32.xlu0 %v2484, 64
      %v3589 = vpop.permute.xlu0 %3588
      %3590 = vrot.lane.b32.xlu0 %v2485, 64
      %v3591 = vpop.permute.xlu0 %3590
      %3592 = vrot.lane.b32.xlu0 %v2486, 64
      %v3593 = vpop.permute.xlu0 %3592
      %3594 = vrot.lane.b32.xlu0 %v2487, 64
      %v3595 = vpop.permute.xlu0 %3594
      %3596 = vrot.lane.b32.xlu0 %v2488, 64
      %v3597 = vpop.permute.xlu0 %3596
      %3598 = vrot.lane.b32.xlu0 %v2489, 64
      %v3599 = vpop.permute.xlu0 %3598
      %3600 = vrot.lane.b32.xlu0 %v2490, 64
      %v3601 = vpop.permute.xlu0 %3600
      %3602 = vrot.lane.b32.xlu0 %v2491, 64
      %v3603 = vpop.permute.xlu0 %3602
      %3604 = vrot.lane.b32.xlu0 %v2492, 64
      %v3605 = vpop.permute.xlu0 %3604
      %3606 = vrot.lane.b32.xlu0 %v2493, 64
      %v3607 = vpop.permute.xlu0 %3606
      %3608 = vrot.lane.b32.xlu0 %v2494, 64
      %v3609 = vpop.permute.xlu0 %3608
      %3610 = vrot.lane.b32.xlu0 %v2495, 64
      %v3611 = vpop.permute.xlu0 %3610
      %3612 = vrot.lane.b32.xlu0 %v2496, 64
      %v3613 = vpop.permute.xlu0 %3612
      %3614 = vrot.lane.b32.xlu0 %v2497, 64
      %v3615 = vpop.permute.xlu0 %3614
      %3616 = vrot.lane.b32.xlu0 %v2498, 64
      %v3617 = vpop.permute.xlu0 %3616
      %3618 = vrot.lane.b32.xlu0 %v2499, 64
      %v3619 = vpop.permute.xlu0 %3618
      %3620 = vrot.lane.b32.xlu0 %v2500, 64
      %v3621 = vpop.permute.xlu0 %3620
      %3622 = vrot.lane.b32.xlu0 %v2501, 64
      %v3623 = vpop.permute.xlu0 %3622
      %3624 = vrot.lane.b32.xlu0 %v2502, 64
      %v3625 = vpop.permute.xlu0 %3624
      %3626 = vrot.lane.b32.xlu0 %v2503, 64
      %v3627 = vpop.permute.xlu0 %3626
      %3628 = vrot.lane.b32.xlu0 %v2504, 64
      %v3629 = vpop.permute.xlu0 %3628
      %3630 = vrot.lane.b32.xlu0 %v2505, 64
      %v3631 = vpop.permute.xlu0 %3630
      %3632 = vrot.lane.b32.xlu0 %v2506, 64
      %v3633 = vpop.permute.xlu0 %3632
      %3634 = vrot.lane.b32.xlu0 %v2507, 64
      %v3635 = vpop.permute.xlu0 %3634
      %vm3668 = vcmask 589312
      %3669 = vst.msk [vmem:[#allocation2 + $0x7] sm:$0xff] %vm3668, %v3573
      %3670 = vst.msk [vmem:[#allocation2 + $0xf] sm:$0xff] %vm3668, %v3575
      %3671 = vst.msk [vmem:[#allocation2 + $0x17] sm:$0xff] %vm3668, %v3577
      %3672 = vst.msk [vmem:[#allocation2 + $0x1f] sm:$0xff] %vm3668, %v3579
      %3673 = vst.msk [vmem:[#allocation2 + $0x27] sm:$0xff] %vm3668, %v3581
      %3674 = vst.msk [vmem:[#allocation2 + $0x2f] sm:$0xff] %vm3668, %v3583
      %3675 = vst.msk [vmem:[#allocation2 + $0x37] sm:$0xff] %vm3668, %v3585
      %3676 = vst.msk [vmem:[#allocation2 + $0x3f] sm:$0xff] %vm3668, %v3587
      %3677 = vst.msk [vmem:[#allocation2 + $0x47] sm:$0xff] %vm3668, %v3589
      %3678 = vst.msk [vmem:[#allocation2 + $0x4f] sm:$0xff] %vm3668, %v3591
      %3679 = vst.msk [vmem:[#allocation2 + $0x57] sm:$0xff] %vm3668, %v3593
      %3680 = vst.msk [vmem:[#allocation2 + $0x5f] sm:$0xff] %vm3668, %v3595
      %3681 = vst.msk [vmem:[#allocation2 + $0x67] sm:$0xff] %vm3668, %v3597
      %3682 = vst.msk [vmem:[#allocation2 + $0x6f] sm:$0xff] %vm3668, %v3599
      %3683 = vst.msk [vmem:[#allocation2 + $0x77] sm:$0xff] %vm3668, %v3601
      %3684 = vst.msk [vmem:[#allocation2 + $0x7f] sm:$0xff] %vm3668, %v3603
      %3685 = vst.msk [vmem:[#allocation2 + $0x87] sm:$0xff] %vm3668, %v3605
      %3686 = vst.msk [vmem:[#allocation2 + $0x8f] sm:$0xff] %vm3668, %v3607
      %3687 = vst.msk [vmem:[#allocation2 + $0x97] sm:$0xff] %vm3668, %v3609
      %3688 = vst.msk [vmem:[#allocation2 + $0x9f] sm:$0xff] %vm3668, %v3611
      %3689 = vst.msk [vmem:[#allocation2 + $0xa7] sm:$0xff] %vm3668, %v3613
      %3690 = vst.msk [vmem:[#allocation2 + $0xaf] sm:$0xff] %vm3668, %v3615
      %3691 = vst.msk [vmem:[#allocation2 + $0xb7] sm:$0xff] %vm3668, %v3617
      %3692 = vst.msk [vmem:[#allocation2 + $0xbf] sm:$0xff] %vm3668, %v3619
      %3693 = vst.msk [vmem:[#allocation2 + $0xc7] sm:$0xff] %vm3668, %v3621
      %3694 = vst.msk [vmem:[#allocation2 + $0xcf] sm:$0xff] %vm3668, %v3623
      %3695 = vst.msk [vmem:[#allocation2 + $0xd7] sm:$0xff] %vm3668, %v3625
      %3696 = vst.msk [vmem:[#allocation2 + $0xdf] sm:$0xff] %vm3668, %v3627
      %3697 = vst.msk [vmem:[#allocation2 + $0xe7] sm:$0xff] %vm3668, %v3629
      %3698 = vst.msk [vmem:[#allocation2 + $0xef] sm:$0xff] %vm3668, %v3631
      %3699 = vst.msk [vmem:[#allocation2 + $0xf7] sm:$0xff] %vm3668, %v3633
      %3700 = vst.msk [vmem:[#allocation2 + $0xff] sm:$0xff] %vm3668, %v3635
      %v3701 = vld [vmem:[#allocation2 + $0x18] sm:$0xff]
      %v3702 = vld [vmem:[#allocation2 + $0x20] sm:$0xff]
      %v3703 = vld [vmem:[#allocation2 + $0x28] sm:$0xff]
      %v3704 = vld [vmem:[#allocation2 + $0x30] sm:$0xff]
      %v3705 = vld [vmem:[#allocation2 + $0x38] sm:$0xff]
      %v3706 = vld [vmem:[#allocation2 + $0x40] sm:$0xff]
      %v3707 = vld [vmem:[#allocation2 + $0x48] sm:$0xff]
      %v3708 = vld [vmem:[#allocation2 + $0x50] sm:$0xff]
      %v3709 = vld [vmem:[#allocation2 + $0x58] sm:$0xff]
      %v3710 = vld [vmem:[#allocation2 + $0x60] sm:$0xff]
      %v3711 = vld [vmem:[#allocation2 + $0x68] sm:$0xff]
      %v3712 = vld [vmem:[#allocation2 + $0x70] sm:$0xff]
      %v3713 = vld [vmem:[#allocation2 + $0x78] sm:$0xff]
      %v3714 = vld [vmem:[#allocation2 + $0x80] sm:$0xff]
      %v3715 = vld [vmem:[#allocation2 + $0x88] sm:$0xff]
      %v3716 = vld [vmem:[#allocation2 + $0x90] sm:$0xff]
      %v3717 = vld [vmem:[#allocation2 + $0x98] sm:$0xff]
      %v3718 = vld [vmem:[#allocation2 + $0xa0] sm:$0xff]
      %v3719 = vld [vmem:[#allocation2 + $0xa8] sm:$0xff]
      %v3720 = vld [vmem:[#allocation2 + $0xb0] sm:$0xff]
      %v3721 = vld [vmem:[#allocation2 + $0xb8] sm:$0xff]
      %v3722 = vld [vmem:[#allocation2 + $0xc0] sm:$0xff]
      %v3723 = vld [vmem:[#allocation2 + $0xc8] sm:$0xff]
      %v3724 = vld [vmem:[#allocation2 + $0xd0] sm:$0xff]
      %v3725 = vld [vmem:[#allocation2 + $0xd8] sm:$0xff]
      %v3726 = vld [vmem:[#allocation2 + $0xe0] sm:$0xff]
      %v3727 = vld [vmem:[#allocation2 + $0xe8] sm:$0xff]
      %v3728 = vld [vmem:[#allocation2 + $0xf0] sm:$0xff]
      %v3729 = vld [vmem:[#allocation2 + $0xf8] sm:$0xff]
      %v3730 = vld [vmem:[#allocation2 + $0x100] sm:$0xff]
      %v3731 = vld [vmem:[#allocation2 + $0x108] sm:$0xff]
      %v3732 = vld [vmem:[#allocation2 + $0x110] sm:$0xff]
      %v3733 = vld [vmem:[%s3] sm:$0xff]
      %v3734 = vld [vmem:[%s3 + $0x8] sm:$0xff]
      %v3735 = vld [vmem:[%s3 + $0x10] sm:$0xff]
      %v3736 = vld [vmem:[%s3 + $0x18] sm:$0xff]
      %v3737 = vld [vmem:[%s3 + $0x20] sm:$0xff]
      %v3738 = vld [vmem:[%s3 + $0x28] sm:$0xff]
      %v3739 = vld [vmem:[%s3 + $0x30] sm:$0xff]
      %v3740 = vld [vmem:[%s3 + $0x38] sm:$0xff]
      %v3741 = vld [vmem:[%s3 + $0x40] sm:$0xff]
      %v3742 = vld [vmem:[%s4] sm:$0x1]
      %v3744 = vlaneseq
      %v3745 = vshrl.u32 %v3744, 7
      %v3746 = vsub.s32 0, %v3745
      %v3747 = vrot.slane %v3742, %v3746
      %v3750 = vsel %vm2468, %v3701, 0
      %v3753 = vsel %vm2468, %v3702, 0
      %v3756 = vsel %vm2468, %v3703, 0
      %v3759 = vsel %vm2468, %v3704, 0
      %v3762 = vsel %vm2468, %v3705, 0
      %v3765 = vsel %vm2468, %v3706, 0
      %v3768 = vsel %vm2468, %v3707, 0
      %v3771 = vsel %vm2468, %v3708, 0
      %v3774 = vsel %vm2468, %v3709, 0
      %v3777 = vsel %vm2468, %v3710, 0
      %v3780 = vsel %vm2468, %v3711, 0
      %v3783 = vsel %vm2468, %v3712, 0
      %v3786 = vsel %vm2468, %v3713, 0
      %v3789 = vsel %vm2468, %v3714, 0
      %v3792 = vsel %vm2468, %v3715, 0
      %v3795 = vsel %vm2468, %v3716, 0
      %v3798 = vsel %vm2468, %v3717, 0
      %v3801 = vsel %vm2468, %v3718, 0
      %v3804 = vsel %vm2468, %v3719, 0
      %v3807 = vsel %vm2468, %v3720, 0
      %v3810 = vsel %vm2468, %v3721, 0
      %v3813 = vsel %vm2468, %v3722, 0
      %v3816 = vsel %vm2468, %v3723, 0
      %v3819 = vsel %vm2468, %v3724, 0
      %v3822 = vsel %vm2468, %v3725, 0
      %v3825 = vsel %vm2468, %v3726, 0
      %v3828 = vsel %vm2468, %v3727, 0
      %v3831 = vsel %vm2468, %v3728, 0
      %v3834 = vsel %vm2468, %v3729, 0
      %v3837 = vsel %vm2468, %v3730, 0
      %v3840 = vsel %vm2468, %v3731, 0
      %v3843 = vsel %vm2468, %v3732, 0
      %3845 = vmatprep.subr.mxu0 0.0
      %3846 = vmatpush1.msra.mxu0 %v3733
      %3847 = vmatprep.subr.mxu0 0.0
      %3848 = vmatpush1.msra.mxu0 %v3734
      %3849 = vmatprep.subr.mxu0 0.0
      %3850 = vmatpush1.msra.mxu0 %v3735
      %3851 = vmatprep.subr.mxu0 0.0
      %3852 = vmatpush1.msra.mxu0 %v3736
      %3853 = vmatprep.subr.mxu0 0.0
      %3854 = vmatpush1.msra.mxu0 %v3737
      %3855 = vmatprep.subr.mxu0 0.0
      %3856 = vmatpush1.msra.mxu0 %v3738
      %3857 = vmatprep.subr.mxu0 0.0
      %3858 = vmatpush1.msra.mxu0 %v3739
      %3859 = vmatprep.subr.mxu0 0.0
      %3860 = vmatpush1.msra.mxu0 %v3740
      %3861 = vmatprep.subr.mxu0 0.0
      %3862 = vmatpush1.msra.mxu0 %v3741
      %3863 = vmatprep.subr.mxu0 0.0
      %3864 = vmatpush1.msra.mxu0 0.0
      %3865 = vmatprep.subr.mxu0 0.0
      %3866 = vmatpush1.msra.mxu0 0.0
      %3867 = vmatprep.subr.mxu0 0.0
      %3868 = vmatpush1.msra.mxu0 0.0
      %3869 = vmatprep.subr.mxu0 0.0
      %3870 = vmatpush1.msra.mxu0 0.0
      %3871 = vmatprep.subr.mxu0 0.0
      %3872 = vmatpush1.msra.mxu0 0.0
      %3873 = vmatprep.subr.mxu0 0.0
      %3874 = vmatpush1.msra.mxu0 0.0
      %3875 = vmatprep.subr.mxu0 0.0
      %3876 = vmatpush1.msra.mxu0 0.0
      %3877 = vmatprep.subr.mxu0 0.0
      %3878 = vmatpush1.msra.mxu0 0.0
      %3879 = vmatprep.subr.mxu0 0.0
      %3880 = vmatpush1.msra.mxu0 0.0
      %3881 = vmatprep.subr.mxu0 0.0
      %3882 = vmatpush1.msra.mxu0 0.0
      %3883 = vmatprep.subr.mxu0 0.0
      %3884 = vmatpush1.msra.mxu0 0.0
      %3885 = vmatprep.subr.mxu0 0.0
      %3886 = vmatpush1.msra.mxu0 0.0
      %3887 = vmatprep.subr.mxu0 0.0
      %3888 = vmatpush1.msra.mxu0 0.0
      %3889 = vmatprep.subr.mxu0 0.0
      %3890 = vmatpush1.msra.mxu0 0.0
      %3891 = vmatprep.subr.mxu0 0.0
      %3892 = vmatpush1.msra.mxu0 0.0
      %3893 = vmatprep.subr.mxu0 0.0
      %3894 = vmatpush1.msra.mxu0 0.0
      %3895 = vmatprep.subr.mxu0 0.0
      %3896 = vmatpush1.msra.mxu0 0.0
      %3897 = vmatprep.subr.mxu0 0.0
      %3898 = vmatpush1.msra.mxu0 0.0
      %3899 = vmatprep.subr.mxu0 0.0
      %3900 = vmatpush1.msra.mxu0 0.0
      %3901 = vmatprep.subr.mxu0 0.0
      %3902 = vmatpush1.msra.mxu0 0.0
      %3903 = vmatprep.subr.mxu0 0.0
      %3904 = vmatpush1.msra.mxu0 0.0
      %3905 = vmatprep.subr.mxu0 0.0
      %3906 = vmatpush1.msra.mxu0 0.0
      %3907 = vmatprep.subr.mxu0 0.0
      %3908 = vmatpush1.msra.mxu0 0.0
      %3909 = vmatprep.mubr.f32.mxu0 0.0
      %3910 = vmatmul.mubr.f32.gmra.mrb[0].mxu0 %v3750
      %v3911 = vpop.f32.mrb[0].mxu0
      %v3912 = vadd.f32 %v3747, %v3911
      %v3913 = vpop.f32.mrb[0].mxu0
      %3914 = vmatprep.mubr.f32.mxu0 0.0
      %3915 = vmatmul.mubr.f32.gmra.mrb[0].mxu0 %v3753
      %v3916 = vpop.f32.mrb[0].mxu0
      %v3917 = vadd.f32 %v3747, %v3916
      %v3918 = vpop.f32.mrb[0].mxu0
      %3919 = vmatprep.mubr.f32.mxu0 0.0
      %3920 = vmatmul.mubr.f32.gmra.mrb[0].mxu0 %v3756
      %v3921 = vpop.f32.mrb[0].mxu0
      %v3922 = vadd.f32 %v3747, %v3921
      %v3923 = vpop.f32.mrb[0].mxu0
      %3924 = vmatprep.mubr.f32.mxu0 0.0
      %3925 = vmatmul.mubr.f32.gmra.mrb[0].mxu0 %v3759
      %v3926 = vpop.f32.mrb[0].mxu0
      %v3927 = vadd.f32 %v3747, %v3926
      %v3928 = vpop.f32.mrb[0].mxu0
      %3929 = vmatprep.mubr.f32.mxu0 0.0
      %3930 = vmatmul.mubr.f32.gmra.mrb[0].mxu0 %v3762
      %v3931 = vpop.f32.mrb[0].mxu0
      %v3932 = vadd.f32 %v3747, %v3931
      %v3933 = vpop.f32.mrb[0].mxu0
      %3934 = vmatprep.mubr.f32.mxu0 0.0
      %3935 = vmatmul.mubr.f32.gmra.mrb[0].mxu0 %v3765
      %v3936 = vpop.f32.mrb[0].mxu0
      %v3937 = vadd.f32 %v3747, %v3936
      %v3938 = vpop.f32.mrb[0].mxu0
      %3939 = vmatprep.mubr.f32.mxu0 0.0
      %3940 = vmatmul.mubr.f32.gmra.mrb[0].mxu0 %v3768
      %v3941 = vpop.f32.mrb[0].mxu0
      %v3942 = vadd.f32 %v3747, %v3941
      %v3943 = vpop.f32.mrb[0].mxu0
      %3944 = vmatprep.mubr.f32.mxu0 0.0
      %3945 = vmatmul.mubr.f32.gmra.mrb[0].mxu0 %v3771
      %v3946 = vpop.f32.mrb[0].mxu0
      %v3947 = vadd.f32 %v3747, %v3946
      %v3948 = vpop.f32.mrb[0].mxu0
      %3949 = vmatprep.mubr.f32.mxu0 0.0
      %3950 = vmatmul.mubr.f32.gmra.mrb[0].mxu0 %v3774
      %v3951 = vpop.f32.mrb[0].mxu0
      %v3952 = vadd.f32 %v3747, %v3951
      %v3953 = vpop.f32.mrb[0].mxu0
      %3954 = vmatprep.mubr.f32.mxu0 0.0
      %3955 = vmatmul.mubr.f32.gmra.mrb[0].mxu0 %v3777
      %v3956 = vpop.f32.mrb[0].mxu0
      %v3957 = vadd.f32 %v3747, %v3956
      %v3958 = vpop.f32.mrb[0].mxu0
      %3959 = vmatprep.mubr.f32.mxu0 0.0
      %3960 = vmatmul.mubr.f32.gmra.mrb[0].mxu0 %v3780
      %v3961 = vpop.f32.mrb[0].mxu0
      %v3962 = vadd.f32 %v3747, %v3961
      %v3963 = vpop.f32.mrb[0].mxu0
      %3964 = vmatprep.mubr.f32.mxu0 0.0
      %3965 = vmatmul.mubr.f32.gmra.mrb[0].mxu0 %v3783
      %v3966 = vpop.f32.mrb[0].mxu0
      %v3967 = vadd.f32 %v3747, %v3966
      %v3968 = vpop.f32.mrb[0].mxu0
      %3969 = vmatprep.mubr.f32.mxu0 0.0
      %3970 = vmatmul.mubr.f32.gmra.mrb[0].mxu0 %v3786
      %v3971 = vpop.f32.mrb[0].mxu0
      %v3972 = vadd.f32 %v3747, %v3971
      %v3973 = vpop.f32.mrb[0].mxu0
      %3974 = vmatprep.mubr.f32.mxu0 0.0
      %3975 = vmatmul.mubr.f32.gmra.mrb[0].mxu0 %v3789
      %v3976 = vpop.f32.mrb[0].mxu0
      %v3977 = vadd.f32 %v3747, %v3976
      %v3978 = vpop.f32.mrb[0].mxu0
      %3979 = vmatprep.mubr.f32.mxu0 0.0
      %3980 = vmatmul.mubr.f32.gmra.mrb[0].mxu0 %v3792
      %v3981 = vpop.f32.mrb[0].mxu0
      %v3982 = vadd.f32 %v3747, %v3981
      %v3983 = vpop.f32.mrb[0].mxu0
      %3984 = vmatprep.mubr.f32.mxu0 0.0
      %3985 = vmatmul.mubr.f32.gmra.mrb[0].mxu0 %v3795
      %v3986 = vpop.f32.mrb[0].mxu0
      %v3987 = vadd.f32 %v3747, %v3986
      %v3988 = vpop.f32.mrb[0].mxu0
      %3989 = vmatprep.mubr.f32.mxu0 0.0
      %3990 = vmatmul.mubr.f32.gmra.mrb[0].mxu0 %v3798
      %v3991 = vpop.f32.mrb[0].mxu0
      %v3992 = vadd.f32 %v3747, %v3991
      %v3993 = vpop.f32.mrb[0].mxu0
      %3994 = vmatprep.mubr.f32.mxu0 0.0
      %3995 = vmatmul.mubr.f32.gmra.mrb[0].mxu0 %v3801
      %v3996 = vpop.f32.mrb[0].mxu0
      %v3997 = vadd.f32 %v3747, %v3996
      %v3998 = vpop.f32.mrb[0].mxu0
      %3999 = vmatprep.mubr.f32.mxu0 0.0
      %4000 = vmatmul.mubr.f32.gmra.mrb[0].mxu0 %v3804
      %v4001 = vpop.f32.mrb[0].mxu0
      %v4002 = vadd.f32 %v3747, %v4001
      %v4003 = vpop.f32.mrb[0].mxu0
      %4004 = vmatprep.mubr.f32.mxu0 0.0
      %4005 = vmatmul.mubr.f32.gmra.mrb[0].mxu0 %v3807
      %v4006 = vpop.f32.mrb[0].mxu0
      %v4007 = vadd.f32 %v3747, %v4006
      %v4008 = vpop.f32.mrb[0].mxu0
      %4009 = vmatprep.mubr.f32.mxu0 0.0
      %4010 = vmatmul.mubr.f32.gmra.mrb[0].mxu0 %v3810
      %v4011 = vpop.f32.mrb[0].mxu0
      %v4012 = vadd.f32 %v3747, %v4011
      %v4013 = vpop.f32.mrb[0].mxu0
      %4014 = vmatprep.mubr.f32.mxu0 0.0
      %4015 = vmatmul.mubr.f32.gmra.mrb[0].mxu0 %v3813
      %v4016 = vpop.f32.mrb[0].mxu0
      %v4017 = vadd.f32 %v3747, %v4016
      %v4018 = vpop.f32.mrb[0].mxu0
      %4019 = vmatprep.mubr.f32.mxu0 0.0
      %4020 = vmatmul.mubr.f32.gmra.mrb[0].mxu0 %v3816
      %v4021 = vpop.f32.mrb[0].mxu0
      %v4022 = vadd.f32 %v3747, %v4021
      %v4023 = vpop.f32.mrb[0].mxu0
      %4024 = vmatprep.mubr.f32.mxu0 0.0
      %4025 = vmatmul.mubr.f32.gmra.mrb[0].mxu0 %v3819
      %v4026 = vpop.f32.mrb[0].mxu0
      %v4027 = vadd.f32 %v3747, %v4026
      %v4028 = vpop.f32.mrb[0].mxu0
      %4029 = vmatprep.mubr.f32.mxu0 0.0
      %4030 = vmatmul.mubr.f32.gmra.mrb[0].mxu0 %v3822
      %v4031 = vpop.f32.mrb[0].mxu0
      %v4032 = vadd.f32 %v3747, %v4031
      %v4033 = vpop.f32.mrb[0].mxu0
      %4034 = vmatprep.mubr.f32.mxu0 0.0
      %4035 = vmatmul.mubr.f32.gmra.mrb[0].mxu0 %v3825
      %v4036 = vpop.f32.mrb[0].mxu0
      %v4037 = vadd.f32 %v3747, %v4036
      %v4038 = vpop.f32.mrb[0].mxu0
      %4039 = vmatprep.mubr.f32.mxu0 0.0
      %4040 = vmatmul.mubr.f32.gmra.mrb[0].mxu0 %v3828
      %v4041 = vpop.f32.mrb[0].mxu0
      %v4042 = vadd.f32 %v3747, %v4041
      %v4043 = vpop.f32.mrb[0].mxu0
      %4044 = vmatprep.mubr.f32.mxu0 0.0
      %4045 = vmatmul.mubr.f32.gmra.mrb[0].mxu0 %v3831
      %v4046 = vpop.f32.mrb[0].mxu0
      %v4047 = vadd.f32 %v3747, %v4046
      %v4048 = vpop.f32.mrb[0].mxu0
      %4049 = vmatprep.mubr.f32.mxu0 0.0
      %4050 = vmatmul.mubr.f32.gmra.mrb[0].mxu0 %v3834
      %v4051 = vpop.f32.mrb[0].mxu0
      %v4052 = vadd.f32 %v3747, %v4051
      %v4053 = vpop.f32.mrb[0].mxu0
      %4054 = vmatprep.mubr.f32.mxu0 0.0
      %4055 = vmatmul.mubr.f32.gmra.mrb[0].mxu0 %v3837
      %v4056 = vpop.f32.mrb[0].mxu0
      %v4057 = vadd.f32 %v3747, %v4056
      %v4058 = vpop.f32.mrb[0].mxu0
      %4059 = vmatprep.mubr.f32.mxu0 0.0
      %4060 = vmatmul.mubr.f32.gmra.mrb[0].mxu0 %v3840
      %v4061 = vpop.f32.mrb[0].mxu0
      %v4062 = vadd.f32 %v3747, %v4061
      %v4063 = vpop.f32.mrb[0].mxu0
      %4064 = vmatprep.mubr.f32.mxu0 0.0
      %4065 = vmatmul.mubr.f32.gmra.mrb[0].mxu0 %v3843
      %v4066 = vpop.f32.mrb[0].mxu0
      %v4067 = vadd.f32 %v3747, %v4066
      %v4068 = vpop.f32.mrb[0].mxu0
      %4069 = vdwg.mxu0
      %4070 = vst.msk [vmem:[#allocation2 + $0x18] sm:$0xff] %vm2540, %v3912
      %4071 = vst.msk [vmem:[#allocation2 + $0x20] sm:$0xff] %vm2540, %v3917
      %4072 = vst.msk [vmem:[#allocation2 + $0x28] sm:$0xff] %vm2540, %v3922
      %4073 = vst.msk [vmem:[#allocation2 + $0x30] sm:$0xff] %vm2540, %v3927
      %4074 = vst.msk [vmem:[#allocation2 + $0x38] sm:$0xff] %vm2540, %v3932
      %4075 = vst.msk [vmem:[#allocation2 + $0x40] sm:$0xff] %vm2540, %v3937
      %4076 = vst.msk [vmem:[#allocation2 + $0x48] sm:$0xff] %vm2540, %v3942
      %4077 = vst.msk [vmem:[#allocation2 + $0x50] sm:$0xff] %vm2540, %v3947
      %4078 = vst.msk [vmem:[#allocation2 + $0x58] sm:$0xff] %vm2540, %v3952
      %4079 = vst.msk [vmem:[#allocation2 + $0x60] sm:$0xff] %vm2540, %v3957
      %4080 = vst.msk [vmem:[#allocation2 + $0x68] sm:$0xff] %vm2540, %v3962
      %4081 = vst.msk [vmem:[#allocation2 + $0x70] sm:$0xff] %vm2540, %v3967
      %4082 = vst.msk [vmem:[#allocation2 + $0x78] sm:$0xff] %vm2540, %v3972
      %4083 = vst.msk [vmem:[#allocation2 + $0x80] sm:$0xff] %vm2540, %v3977
      %4084 = vst.msk [vmem:[#allocation2 + $0x88] sm:$0xff] %vm2540, %v3982
      %4085 = vst.msk [vmem:[#allocation2 + $0x90] sm:$0xff] %vm2540, %v3987
      %4086 = vst.msk [vmem:[#allocation2 + $0x98] sm:$0xff] %vm2540, %v3992
      %4087 = vst.msk [vmem:[#allocation2 + $0xa0] sm:$0xff] %vm2540, %v3997
      %4088 = vst.msk [vmem:[#allocation2 + $0xa8] sm:$0xff] %vm2540, %v4002
      %4089 = vst.msk [vmem:[#allocation2 + $0xb0] sm:$0xff] %vm2540, %v4007
      %4090 = vst.msk [vmem:[#allocation2 + $0xb8] sm:$0xff] %vm2540, %v4012
      %4091 = vst.msk [vmem:[#allocation2 + $0xc0] sm:$0xff] %vm2540, %v4017
      %4092 = vst.msk [vmem:[#allocation2 + $0xc8] sm:$0xff] %vm2540, %v4022
      %4093 = vst.msk [vmem:[#allocation2 + $0xd0] sm:$0xff] %vm2540, %v4027
      %4094 = vst.msk [vmem:[#allocation2 + $0xd8] sm:$0xff] %vm2540, %v4032
      %4095 = vst.msk [vmem:[#allocation2 + $0xe0] sm:$0xff] %vm2540, %v4037
      %4096 = vst.msk [vmem:[#allocation2 + $0xe8] sm:$0xff] %vm2540, %v4042
      %4097 = vst.msk [vmem:[#allocation2 + $0xf0] sm:$0xff] %vm2540, %v4047
      %4098 = vst.msk [vmem:[#allocation2 + $0xf8] sm:$0xff] %vm2540, %v4052
      %4099 = vst.msk [vmem:[#allocation2 + $0x100] sm:$0xff] %vm2540, %v4057
      %4100 = vst.msk [vmem:[#allocation2 + $0x108] sm:$0xff] %vm2540, %v4062
      %4101 = vst.msk [vmem:[#allocation2 + $0x110] sm:$0xff] %vm2540, %v4067
      %v4102 = vld [vmem:[#allocation2 + $0x19] sm:$0xff]
      %v4103 = vld [vmem:[#allocation2 + $0x21] sm:$0xff]
      %v4104 = vld [vmem:[#allocation2 + $0x29] sm:$0xff]
      %v4105 = vld [vmem:[#allocation2 + $0x31] sm:$0xff]
      %v4106 = vld [vmem:[#allocation2 + $0x39] sm:$0xff]
      %v4107 = vld [vmem:[#allocation2 + $0x41] sm:$0xff]
      %v4108 = vld [vmem:[#allocation2 + $0x49] sm:$0xff]
      %v4109 = vld [vmem:[#allocation2 + $0x51] sm:$0xff]
      %v4110 = vld [vmem:[#allocation2 + $0x59] sm:$0xff]
      %v4111 = vld [vmem:[#allocation2 + $0x61] sm:$0xff]
      %v4112 = vld [vmem:[#allocation2 + $0x69] sm:$0xff]
      %v4113 = vld [vmem:[#allocation2 + $0x71] sm:$0xff]
      %v4114 = vld [vmem:[#allocation2 + $0x79] sm:$0xff]
      %v4115 = vld [vmem:[#allocation2 + $0x81] sm:$0xff]
      %v4116 = vld [vmem:[#allocation2 + $0x89] sm:$0xff]
      %v4117 = vld [vmem:[#allocation2 + $0x91] sm:$0xff]
      %v4118 = vld [vmem:[#allocation2 + $0x99] sm:$0xff]
      %v4119 = vld [vmem:[#allocation2 + $0xa1] sm:$0xff]
      %v4120 = vld [vmem:[#allocation2 + $0xa9] sm:$0xff]
      %v4121 = vld [vmem:[#allocation2 + $0xb1] sm:$0xff]
      %v4122 = vld [vmem:[#allocation2 + $0xb9] sm:$0xff]
      %v4123 = vld [vmem:[#allocation2 + $0xc1] sm:$0xff]
      %v4124 = vld [vmem:[#allocation2 + $0xc9] sm:$0xff]
      %v4125 = vld [vmem:[#allocation2 + $0xd1] sm:$0xff]
      %v4126 = vld [vmem:[#allocation2 + $0xd9] sm:$0xff]
      %v4127 = vld [vmem:[#allocation2 + $0xe1] sm:$0xff]
      %v4128 = vld [vmem:[#allocation2 + $0xe9] sm:$0xff]
      %v4129 = vld [vmem:[#allocation2 + $0xf1] sm:$0xff]
      %v4130 = vld [vmem:[#allocation2 + $0xf9] sm:$0xff]
      %v4131 = vld [vmem:[#allocation2 + $0x101] sm:$0xff]
      %v4132 = vld [vmem:[#allocation2 + $0x109] sm:$0xff]
      %v4133 = vld [vmem:[#allocation2 + $0x111] sm:$0xff]
      %v4134 = vld [vmem:[#allocation2 + $0x28] sm:$0xff]
      %v4135 = vld [vmem:[#allocation2 + $0x30] sm:$0xff]
      %v4136 = vld [vmem:[#allocation2 + $0x38] sm:$0xff]
      %v4137 = vld [vmem:[#allocation2 + $0x40] sm:$0xff]
      %v4138 = vld [vmem:[#allocation2 + $0x48] sm:$0xff]
      %v4139 = vld [vmem:[#allocation2 + $0x50] sm:$0xff]
      %v4140 = vld [vmem:[#allocation2 + $0x58] sm:$0xff]
      %v4141 = vld [vmem:[#allocation2 + $0x60] sm:$0xff]
      %v4142 = vld [vmem:[#allocation2 + $0x68] sm:$0xff]
      %v4143 = vld [vmem:[#allocation2 + $0x70] sm:$0xff]
      %v4144 = vld [vmem:[#allocation2 + $0x78] sm:$0xff]
      %v4145 = vld [vmem:[#allocation2 + $0x80] sm:$0xff]
      %v4146 = vld [vmem:[#allocation2 + $0x88] sm:$0xff]
      %v4147 = vld [vmem:[#allocation2 + $0x90] sm:$0xff]
      %v4148 = vld [vmem:[#allocation2 + $0x98] sm:$0xff]
      %v4149 = vld [vmem:[#allocation2 + $0xa0] sm:$0xff]
      %v4150 = vld [vmem:[#allocation2 + $0xa8] sm:$0xff]
      %v4151 = vld [vmem:[#allocation2 + $0xb0] sm:$0xff]
      %v4152 = vld [vmem:[#allocation2 + $0xb8] sm:$0xff]
      %v4153 = vld [vmem:[#allocation2 + $0xc0] sm:$0xff]
      %v4154 = vld [vmem:[#allocation2 + $0xc8] sm:$0xff]
      %v4155 = vld [vmem:[#allocation2 + $0xd0] sm:$0xff]
      %v4156 = vld [vmem:[#allocation2 + $0xd8] sm:$0xff]
      %v4157 = vld [vmem:[#allocation2 + $0xe0] sm:$0xff]
      %v4158 = vld [vmem:[#allocation2 + $0xe8] sm:$0xff]
      %v4159 = vld [vmem:[#allocation2 + $0xf0] sm:$0xff]
      %v4160 = vld [vmem:[#allocation2 + $0xf8] sm:$0xff]
      %v4161 = vld [vmem:[#allocation2 + $0x100] sm:$0xff]
      %v4162 = vld [vmem:[#allocation2 + $0x108] sm:$0xff]
      %v4163 = vld [vmem:[#allocation2 + $0x110] sm:$0xff]
      %v4164 = vld [vmem:[#allocation2 + $0x118] sm:$0xff]
      %v4165 = vld [vmem:[#allocation2 + $0x120] sm:$0xff]
      %v4166 = vld [vmem:[#allocation2 + $0x119] sm:$0xff]
      %v4167 = vld [vmem:[#allocation2 + $0x121] sm:$0xff]
      %v4168 = vmax.f32 %v3912, %v4102
      %v4169 = vmax.f32 %v3917, %v4103
      %v4170 = vmax.f32 %v3922, %v4104
      %v4171 = vmax.f32 %v3927, %v4105
      %v4172 = vmax.f32 %v3932, %v4106
      %v4173 = vmax.f32 %v3937, %v4107
      %v4174 = vmax.f32 %v3942, %v4108
      %v4175 = vmax.f32 %v3947, %v4109
      %v4176 = vmax.f32 %v3952, %v4110
      %v4177 = vmax.f32 %v3957, %v4111
      %v4178 = vmax.f32 %v3962, %v4112
      %v4179 = vmax.f32 %v3967, %v4113
      %v4180 = vmax.f32 %v3972, %v4114
      %v4181 = vmax.f32 %v3977, %v4115
      %v4182 = vmax.f32 %v3982, %v4116
      %v4183 = vmax.f32 %v3987, %v4117
      %v4184 = vmax.f32 %v3992, %v4118
      %v4185 = vmax.f32 %v3997, %v4119
      %v4186 = vmax.f32 %v4002, %v4120
      %v4187 = vmax.f32 %v4007, %v4121
      %v4188 = vmax.f32 %v4012, %v4122
      %v4189 = vmax.f32 %v4017, %v4123
      %v4190 = vmax.f32 %v4022, %v4124
      %v4191 = vmax.f32 %v4027, %v4125
      %v4192 = vmax.f32 %v4032, %v4126
      %v4193 = vmax.f32 %v4037, %v4127
      %v4194 = vmax.f32 %v4042, %v4128
      %v4195 = vmax.f32 %v4047, %v4129
      %v4196 = vmax.f32 %v4052, %v4130
      %v4197 = vmax.f32 %v4057, %v4131
      %v4198 = vmax.f32 %v4062, %v4132
      %v4199 = vmax.f32 %v4067, %v4133
      %v4200 = vmax.f32 %v4134, %v4104
      %v4201 = vmax.f32 %v4135, %v4105
      %v4202 = vmax.f32 %v4136, %v4106
      %v4203 = vmax.f32 %v4137, %v4107
      %v4204 = vmax.f32 %v4138, %v4108
      %v4205 = vmax.f32 %v4139, %v4109
      %v4206 = vmax.f32 %v4140, %v4110
      %v4207 = vmax.f32 %v4141, %v4111
      %v4208 = vmax.f32 %v4142, %v4112
      %v4209 = vmax.f32 %v4143, %v4113
      %v4210 = vmax.f32 %v4144, %v4114
      %v4211 = vmax.f32 %v4145, %v4115
      %v4212 = vmax.f32 %v4146, %v4116
      %v4213 = vmax.f32 %v4147, %v4117
      %v4214 = vmax.f32 %v4148, %v4118
      %v4215 = vmax.f32 %v4149, %v4119
      %v4216 = vmax.f32 %v4150, %v4120
      %v4217 = vmax.f32 %v4151, %v4121
      %v4218 = vmax.f32 %v4152, %v4122
      %v4219 = vmax.f32 %v4153, %v4123
      %v4220 = vmax.f32 %v4154, %v4124
      %v4221 = vmax.f32 %v4155, %v4125
      %v4222 = vmax.f32 %v4156, %v4126
      %v4223 = vmax.f32 %v4157, %v4127
      %v4224 = vmax.f32 %v4158, %v4128
      %v4225 = vmax.f32 %v4159, %v4129
      %v4226 = vmax.f32 %v4160, %v4130
      %v4227 = vmax.f32 %v4161, %v4131
      %v4228 = vmax.f32 %v4162, %v4132
      %v4229 = vmax.f32 %v4163, %v4133
      %v4230 = vmax.f32 %v4164, %v4166
      %v4231 = vmax.f32 %v4165, %v4167
      %v4232 = vmax.f32 %v4168, %v4200
      %v4233 = vmax.f32 %v4169, %v4201
      %v4234 = vmax.f32 %v4170, %v4202
      %v4235 = vmax.f32 %v4171, %v4203
      %v4236 = vmax.f32 %v4172, %v4204
      %v4237 = vmax.f32 %v4173, %v4205
      %v4238 = vmax.f32 %v4174, %v4206
      %v4239 = vmax.f32 %v4175, %v4207
      %v4240 = vmax.f32 %v4176, %v4208
      %v4241 = vmax.f32 %v4177, %v4209
      %v4242 = vmax.f32 %v4178, %v4210
      %v4243 = vmax.f32 %v4179, %v4211
      %v4244 = vmax.f32 %v4180, %v4212
      %v4245 = vmax.f32 %v4181, %v4213
      %v4246 = vmax.f32 %v4182, %v4214
      %v4247 = vmax.f32 %v4183, %v4215
      %v4248 = vmax.f32 %v4184, %v4216
      %v4249 = vmax.f32 %v4185, %v4217
      %v4250 = vmax.f32 %v4186, %v4218
      %v4251 = vmax.f32 %v4187, %v4219
      %v4252 = vmax.f32 %v4188, %v4220
      %v4253 = vmax.f32 %v4189, %v4221
      %v4254 = vmax.f32 %v4190, %v4222
      %v4255 = vmax.f32 %v4191, %v4223
      %v4256 = vmax.f32 %v4192, %v4224
      %v4257 = vmax.f32 %v4193, %v4225
      %v4258 = vmax.f32 %v4194, %v4226
      %v4259 = vmax.f32 %v4195, %v4227
      %v4260 = vmax.f32 %v4196, %v4228
      %v4261 = vmax.f32 %v4197, %v4229
      %v4262 = vmax.f32 %v4198, %v4230
      %v4263 = vmax.f32 %v4199, %v4231
      %4264 = vst.msk [vmem:[#allocation2 + $0x18] sm:$0xff] %vm2540, %v4232
      %4265 = vst.msk [vmem:[#allocation2 + $0x20] sm:$0xff] %vm2540, %v4233
      %4266 = vst.msk [vmem:[#allocation2 + $0x28] sm:$0xff] %vm2540, %v4234
      %4267 = vst.msk [vmem:[#allocation2 + $0x30] sm:$0xff] %vm2540, %v4235
      %4268 = vst.msk [vmem:[#allocation2 + $0x38] sm:$0xff] %vm2540, %v4236
      %4269 = vst.msk [vmem:[#allocation2 + $0x40] sm:$0xff] %vm2540, %v4237
      %4270 = vst.msk [vmem:[#allocation2 + $0x48] sm:$0xff] %vm2540, %v4238
      %4271 = vst.msk [vmem:[#allocation2 + $0x50] sm:$0xff] %vm2540, %v4239
      %4272 = vst.msk [vmem:[#allocation2 + $0x58] sm:$0xff] %vm2540, %v4240
      %4273 = vst.msk [vmem:[#allocation2 + $0x60] sm:$0xff] %vm2540, %v4241
      %4274 = vst.msk [vmem:[#allocation2 + $0x68] sm:$0xff] %vm2540, %v4242
      %4275 = vst.msk [vmem:[#allocation2 + $0x70] sm:$0xff] %vm2540, %v4243
      %4276 = vst.msk [vmem:[#allocation2 + $0x78] sm:$0xff] %vm2540, %v4244
      %4277 = vst.msk [vmem:[#allocation2 + $0x80] sm:$0xff] %vm2540, %v4245
      %4278 = vst.msk [vmem:[#allocation2 + $0x88] sm:$0xff] %vm2540, %v4246
      %4279 = vst.msk [vmem:[#allocation2 + $0x90] sm:$0xff] %vm2540, %v4247
      %4280 = vst.msk [vmem:[#allocation2 + $0x98] sm:$0xff] %vm2540, %v4248
      %4281 = vst.msk [vmem:[#allocation2 + $0xa0] sm:$0xff] %vm2540, %v4249
      %4282 = vst.msk [vmem:[#allocation2 + $0xa8] sm:$0xff] %vm2540, %v4250
      %4283 = vst.msk [vmem:[#allocation2 + $0xb0] sm:$0xff] %vm2540, %v4251
      %4284 = vst.msk [vmem:[#allocation2 + $0xb8] sm:$0xff] %vm2540, %v4252
      %4285 = vst.msk [vmem:[#allocation2 + $0xc0] sm:$0xff] %vm2540, %v4253
      %4286 = vst.msk [vmem:[#allocation2 + $0xc8] sm:$0xff] %vm2540, %v4254
      %4287 = vst.msk [vmem:[#allocation2 + $0xd0] sm:$0xff] %vm2540, %v4255
      %4288 = vst.msk [vmem:[#allocation2 + $0xd8] sm:$0xff] %vm2540, %v4256
      %4289 = vst.msk [vmem:[#allocation2 + $0xe0] sm:$0xff] %vm2540, %v4257
      %4290 = vst.msk [vmem:[#allocation2 + $0xe8] sm:$0xff] %vm2540, %v4258
      %4291 = vst.msk [vmem:[#allocation2 + $0xf0] sm:$0xff] %vm2540, %v4259
      %4292 = vst.msk [vmem:[#allocation2 + $0xf8] sm:$0xff] %vm2540, %v4260
      %4293 = vst.msk [vmem:[#allocation2 + $0x100] sm:$0xff] %vm2540, %v4261
      %4294 = vst.msk [vmem:[#allocation2 + $0x108] sm:$0xff] %vm2540, %v4262
      %4295 = vst.msk [vmem:[#allocation2 + $0x110] sm:$0xff] %vm2540, %v4263
      %s4296 = scalar_lea.vmem [#allocation2], 24
      %v4297 = vld [vmem:[%s4296] ss:$2 sm:$0xff]
      %s4298 = scalar_lea.vmem [#allocation2], 56
      %v4299 = vld [vmem:[%s4298] ss:$2 sm:$0xff]
      %s4300 = scalar_lea.vmem [#allocation2], 88
      %v4301 = vld [vmem:[%s4300] ss:$2 sm:$0xff]
      %s4302 = scalar_lea.vmem [#allocation2], 120
      %v4303 = vld [vmem:[%s4302] ss:$2 sm:$0xff]
      %s4304 = scalar_lea.vmem [#allocation2], 152
      %v4305 = vld [vmem:[%s4304] ss:$2 sm:$0xff]
      %s4306 = scalar_lea.vmem [#allocation2], 184
      %v4307 = vld [vmem:[%s4306] ss:$2 sm:$0xff]
      %s4308 = scalar_lea.vmem [#allocation2], 216
      %v4309 = vld [vmem:[%s4308] ss:$2 sm:$0xff]
      %s4310 = scalar_lea.vmem [#allocation2], 248
      %v4311 = vld [vmem:[%s4310] ss:$2 sm:$0xff]
      %4312 = vst.msk [vmem:[%s224] sm:$0xff] %vm2540, %v4297
      %4313 = vst.msk [vmem:[%s224 + $0x8] sm:$0xff] %vm2540, %v4299
      %4314 = vst.msk [vmem:[%s224 + $0x10] sm:$0xff] %vm2540, %v4301
      %4315 = vst.msk [vmem:[%s224 + $0x18] sm:$0xff] %vm2540, %v4303
      %4316 = vst.msk [vmem:[%s224 + $0x20] sm:$0xff] %vm2540, %v4305
      %4317 = vst.msk [vmem:[%s224 + $0x28] sm:$0xff] %vm2540, %v4307
      %4318 = vst.msk [vmem:[%s224 + $0x30] sm:$0xff] %vm2540, %v4309
      %4319 = vst.msk [vmem:[%s224 + $0x38] sm:$0xff] %vm2540, %v4311
      %p4320 = scmp.lt.s32.totalorder %s16, 1
      %s4321 = scalar_select %p4320, %s16, 1
      %s4322 = smul.addr %s4321, 8
      %s4323 = smul.addr %s4322, 8
      %s4324 = scalar_lea.vmem %s5, %s4323
      // Predicated region
      $region41: #{conv_sub_block.1} parent=39 // pred_check
        %p4325 = pneg %p144
      $region42: #{conv_sub_block.1} parent=39 // pred_check_branch
        %4327 = sbr.rel (%p4325) target = $region44
      $region43: #{conv_sub_block.1} parent=39 // pred_region
        _
      $region44: #{conv_sub_block.1} parent=39 // pred_fallthru
        _
    $region40: #{conv_sub_block.1} parent=5 // pred_fallthru
      _
    %p4328 = scmp.le.s32.totalorder 2, %s11
    // Predicated region
    $region45: #{conv_sub_block.1} parent=5 // pred_check
      %p4329 = pneg %p4328
    $region46: #{conv_sub_block.1} parent=5 // pred_check_branch
      %4331 = sbr.rel (%p4329) target = $region48
    $region47: #{conv_sub_block.1} parent=5 // pred_region
      %s4332 = ssub.s32 %s11, 2
      // Predicated region
      $region49: #{conv_sub_block.1} parent=47 // pred_check
        %p4333 = pneg %p150
      $region50: #{conv_sub_block.1} parent=47 // pred_check_branch
        %4335 = sbr.rel (%p4333) target = $region52
      $region51: #{conv_sub_block.1} parent=47 // pred_region
        %p4336 = scmp.lt.s32.totalorder %s17, 1
        %s4337 = scalar_select %p4336, %s17, 1
        %s4338 = smul.addr %s4337, 8
        %s4339 = smul.addr %s4338, 8
        %s4340 = scalar_lea.vmem %s5, %s4339
      $region52: #{conv_sub_block.1} parent=47 // pred_fallthru
        _
    $region48: #{conv_sub_block.1} parent=5 // pred_fallthru
      _
  $region6: #{conv_sub_block.1} parent=0 // loop_footer
    %s15 = sadd.s32 1, %s11
  $region7: #{conv_sub_block.1} parent=0 // loop_footer_branch
    %10 = sbr.rel target = $region3
  $region8: #{conv_sub_block.1} parent=0 // loop_exit
    _

</llo_original>
